<compile_context>
chip_gen: v7x
topology: tpu7x:2x2x1
jax: 0.10.0
libtpu: 0.0.40
codegen_flags: <defaults>
</compile_context>

<pallas_src>
import jax
import jax.numpy as jnp
from jax.experimental import pallas as pl
from jax.experimental.pallas import tpu as pltpu


# --------------------------------------------------------------------------- #
# Kernel
# --------------------------------------------------------------------------- #
def _make_kernel(n_heads, compute_dtype, merge_rows, approx_softmax):
    """Pallas kernel closed over static head count / matmul dtype / flags."""
    cdt = compute_dtype

    def kernel(x_ref, wq_ref, bq_ref, wk_ref, bk_ref, wv_ref, bv_ref,
               et_ref, ft_ref, wo_ref, bo_ref, o_ref):
        Bt, L, D = x_ref.shape
        H = n_heads
        dh = D // H

        wq = wq_ref[...]          # (D, D), compute dtype, scale already folded in
        wk = wk_ref[...]
        wv = wv_ref[...]
        wo = wo_ref[...]
        bq = bq_ref[...]          # (1, D) f32 (scale folded in)
        bk = bk_ref[...]
        bv = bv_ref[...]
        bo = bo_ref[...]
        et = et_ref[...]          # (k_proj, L), compute dtype
        ft = ft_ref[...]

        # ---- QKV projections ------------------------------------------------
        if merge_rows:
            # Free leading-dim merge (wrapper guarantees L % 8 == 0): one
            # (Bt*L, D) @ (D, D) matmul each -> fills the MXU M dimension.
            x2 = x_ref[...].reshape(Bt * L, D).astype(cdt)
            q3 = (jnp.dot(x2, wq, preferred_element_type=jnp.float32) + bq
                  ).reshape(Bt, L, D)
            k3 = (jnp.dot(x2, wk, preferred_element_type=jnp.float32) + bk
                  ).reshape(Bt, L, D)
            v3 = (jnp.dot(x2, wv, preferred_element_type=jnp.float32) + bv
                  ).reshape(Bt, L, D)
        else:
            # L not sublane-aligned: keep per-row 2-D matmuls (avoids a Mosaic
            # relayout copy of the whole block).
            xb = x_ref[...].astype(cdt)
            q3 = jnp.stack([jnp.dot(xb[b], wq, preferred_element_type=jnp.float32) + bq
                            for b in range(Bt)], axis=0)
            k3 = jnp.stack([jnp.dot(xb[b], wk, preferred_element_type=jnp.float32) + bk
                            for b in range(Bt)], axis=0)
            v3 = jnp.stack([jnp.dot(xb[b], wv, preferred_element_type=jnp.float32) + bv
                            for b in range(Bt)], axis=0)

        # Bt and n_heads are small static ints (the wrapper caps Bt*L), so the
        # double loop is fully unrolled.  For very large B put batch rows on a
        # second grid axis instead of growing Bt.
        for b in range(Bt):
            qb = q3[b]                                       # (L, D) f32, pre-scaled

            # Hoisted sequence-length projections, canonical (M,K)x(K,N) form
            # thanks to the wrapper-side E/F transpose:  (k_proj, L) @ (L, D).
            k_all = jnp.dot(et, k3[b].astype(cdt),
                            preferred_element_type=jnp.float32)   # (k_proj, D)
            v_all = jnp.dot(ft, v3[b].astype(cdt),
                            preferred_element_type=jnp.float32)   # (k_proj, D)

            # Per-head attention.  NOTE: for dh < 128 these lane slices are not
            # vreg-aligned; for large-H configs a one-off head-major relayout of
            # q/k_all/v_all would avoid the per-head masked selects.
            ctx_heads = []
            for h in range(H):
                hs = slice(h * dh, (h + 1) * dh)
                qh = qb[:, hs].astype(cdt)                   # (L, dh)
                kh = k_all[:, hs].astype(cdt)                # (k_proj, dh)
                vh = v_all[:, hs].astype(cdt)                # (k_proj, dh)

                # scores = q_h @ k_h^T  (q already scaled)
                scores = jax.lax.dot_general(
                    qh, kh, (((1,), (1,)), ((), ())),
                    preferred_element_type=jnp.float32)      # (L, k_proj)

                # f32 softmax on all generations.
                m = jnp.max(scores, axis=-1, keepdims=True)
                p = jnp.exp(scores - m)
                l = jnp.sum(p, axis=-1, keepdims=True)
                if approx_softmax:
                    attn = p * pl.reciprocal(l, approx=True)  # EUP slot, opt-in
                else:
                    attn = p / l                              # exact (default)

                ctx_heads.append(
                    jnp.dot(attn.astype(cdt), vh,
                            preferred_element_type=jnp.float32))   # (L, dh)

            # Single K=D output projection per batch row (one lane-concat +
            # one (L, D) @ (D, D) matmul instead of H K=dh matmuls).
            ctx = jnp.concatenate(ctx_heads, axis=-1)        # (L, D) f32
            out_b = jnp.dot(ctx.astype(cdt), wo,
                            preferred_element_type=jnp.float32) + bo
            o_ref[b] = out_b.astype(o_ref.dtype)

    return kernel


# --------------------------------------------------------------------------- #
# Generation-aware sizing helpers
# --------------------------------------------------------------------------- #
def _tpu_generation():
    """Best-effort TPU generation (5/6/7) or None (CPU / interpret / unknown)."""
    try:
        dev = jax.devices()[0]
        if dev.platform != "tpu":
            return None
        kind = (getattr(dev, "device_kind", "") or "").lower()
        for g in (7, 6, 5, 4):
            if f"v{g}" in kind or f"tpu{g}" in kind:
                return g
    except Exception:
        pass
    return None


def _per_step_vmem_bytes(Bt, L, D, k_proj, w_itemsize, weight_nbuf):
    """Rough per-grid-step VMEM footprint (blocks x buffering + temporaries)."""
    f32 = 4
    x_and_out = 2 * (2 * Bt * L * D * f32)                 # x + out, double-buffered
    weights = weight_nbuf * (4 * D * D * w_itemsize)       # Wq/Wk/Wv/Wo
    biases = weight_nbuf * (4 * D * f32)
    ef = weight_nbuf * (2 * k_proj * L * w_itemsize)
    temps = (5 * Bt * L * D * f32                          # q/k/v + casts of x/ctx
             + 2 * k_proj * D * f32                        # k_all / v_all
             + 2 * L * k_proj * f32                        # scores / attn
             + 2 * L * D * f32)                            # ctx / out_b
    return x_and_out + weights + biases + ef + temps


def _pick_batch_tile(B, L, D, k_proj, w_itemsize, weight_nbuf,
                     vmem_budget, two_tensorcores):
    """Largest divisor Bt of B whose per-step footprint fits the budget.

    Single-TC (v5e/v6e): maximize Bt (fewer grid steps, less pipeline overhead).
    Dual-TC (v7x): cap rows harder and prefer an even grid count so both
    TensorCores get balanced work.
    """
    row_cap = 512 if two_tensorcores else 1024
    divisors = [d for d in range(1, B + 1) if B % d == 0]
    feasible = [d for d in divisors
                if d * L <= row_cap
                and _per_step_vmem_bytes(d, L, D, k_proj, w_itemsize,
                                         weight_nbuf) <= vmem_budget]
    if not feasible:
        feasible = [1]
    if two_tensorcores:
        even = [d for d in feasible if (B // d) % 2 == 0]
        if even:
            return max(even)
    return max(feasible)


def _build_specs(Bt, L, D, k_proj, single_buffer_weights):
    """BlockSpecs; grid-invariant operands optionally single-buffered."""
    def inv_spec(shape):
        idx = lambda b, _n=len(shape): (0,) * _n
        if single_buffer_weights:
            # Constant index_map across the grid -> no need to double-buffer.
            return pl.BlockSpec(shape, idx, pipeline_mode=pl.Buffered(1))
        return pl.BlockSpec(shape, idx)

    in_specs = [
        pl.BlockSpec((Bt, L, D), lambda b: (b, 0, 0)),   # x (Bt batch rows)
        inv_spec((D, D)),                                # Wq (scale folded in)
        inv_spec((1, D)),                                # bq (scale folded in)
        inv_spec((D, D)),                                # Wk
        inv_spec((1, D)),                                # bk
        inv_spec((D, D)),                                # Wv
        inv_spec((1, D)),                                # bv
        inv_spec((k_proj, L)),                           # E[:L]^T
        inv_spec((k_proj, L)),                           # F[:L]^T
        inv_spec((D, D)),                                # Wo
        inv_spec((1, D)),                                # bo
    ]
    out_spec = pl.BlockSpec((Bt, L, D), lambda b: (b, 0, 0))
    return in_specs, out_spec


# --------------------------------------------------------------------------- #
# Wrapper
# --------------------------------------------------------------------------- #
def linformer_attention(x, params, n_heads, *,
                        matmul_dtype=jnp.bfloat16,
                        batch_tile=None,
                        vmem_limit_bytes=None,
                        approx_softmax=False,
                        single_buffer_weights=True):
    """x: (B, L, D) float32.  Returns (B, L, D) in x.dtype.

    matmul_dtype=bfloat16 (default) feeds bf16 operands to the MXU on all TPU
    generations while keeping accumulation and the softmax in f32.  Pass
    matmul_dtype=jnp.float32 for bit-tight numerics vs an f32 reference.
    """
    B, L, D = x.shape
    assert D % n_heads == 0, "dim must be divisible by n_heads"
    dh = D // n_heads
    scale = float(dh) ** (-0.5)
    k_proj = params["E"].shape[1]

    cdt = jnp.dtype(matmul_dtype) if matmul_dtype is not None else x.dtype

    # ---- Weight-side prep (done once, outside the kernel) -------------------
    #  * fold 1/sqrt(dh) into Wq / bq,
    #  * pre-transpose E/F so the in-kernel sequence projection is (M,K)x(K,N),
    #  * cast MXU operands to the compute dtype; biases stay f32 (added to the
    #    f32 accumulators).
    wq = (params["Wq"] * scale).astype(cdt)
    wk = params["Wk"].astype(cdt)
    wv = params["Wv"].astype(cdt)
    wo = params["Wo"].astype(cdt)
    bq = (params["bq"] * scale).reshape(1, D).astype(jnp.float32)
    bk = params["bk"].reshape(1, D).astype(jnp.float32)
    bv = params["bv"].reshape(1, D).astype(jnp.float32)
    bo = params["bo"].reshape(1, D).astype(jnp.float32)
    et = params["E"][:L, :].T.astype(cdt)     # (k_proj, L)
    ft = params["F"][:L, :].T.astype(cdt)     # (k_proj, L)

    # ---- Generation-aware sizing --------------------------------------------
    gen = _tpu_generation()
    two_cores = gen is not None and gen >= 7            # v7x: 2 TCs, 64 MiB VMEM
    vmem_ceiling = (48 << 20) if two_cores else (100 << 20)
    w_itemsize = jnp.dtype(cdt).itemsize
    weight_nbuf = 1 if single_buffer_weights else 2

    if batch_tile is None:
        Bt = _pick_batch_tile(B, L, D, k_proj, w_itemsize, weight_nbuf,
                              int(vmem_ceiling * 3 // 4), two_cores)
    else:
        Bt = int(batch_tile)
    assert B % Bt == 0, "batch tile must divide the batch"

    need = _per_step_vmem_bytes(Bt, L, D, k_proj, w_itemsize, weight_nbuf)
    if vmem_limit_bytes is None:
        vlim = int(need * 1.5) + (4 << 20)
        vlim = max(vlim, 32 << 20)           # never below the default scoped budget
        vlim = min(vlim, vmem_ceiling)       # leave headroom under v7x's 64 MiB
        vlim = max(vlim, need + (2 << 20))   # but always enough for the tile
        vmem_limit_bytes = vlim

    merge_rows = (L % 8 == 0)                # f32 sublane tile; guards free merge

    kernel = _make_kernel(n_heads, cdt, merge_rows, approx_softmax)

    def call(use_single_buffer):
        in_specs, out_spec = _build_specs(Bt, L, D, k_proj, use_single_buffer)
        grid_spec = pltpu.PrefetchScalarGridSpec(
            num_scalar_prefetch=0,
            grid=(B // Bt,),
            in_specs=in_specs,
            out_specs=out_spec)
        return pl.pallas_call(
            kernel,
            out_shape=jax.ShapeDtypeStruct((B, L, D), x.dtype),
            grid_spec=grid_spec,
            compiler_params=pltpu.CompilerParams(
                dimension_semantics=("parallel",),
                vmem_limit_bytes=int(vmem_limit_bytes)),
        )(x, wq, bq, wk, bk, wv, bv, et, ft, wo, bo)

    if single_buffer_weights and hasattr(pl, "Buffered"):
        try:
            return call(True)
        except Exception:
            # Runtime / interpret path without pipeline_mode support: fall back
            # to default (double-buffered) specs.  Results are identical.
            pass
    return call(False)


# --------------------------------------------------------------------------- #
# Pure-JAX reference (mirrors the PyTorch forward exactly)
# --------------------------------------------------------------------------- #
def linformer_reference(x, params, n_heads):
    B, L, D = x.shape
    dh = D // n_heads
    scale = float(dh) ** (-0.5)

    q = x @ params["Wq"] + params["bq"]
    k = x @ params["Wk"] + params["bk"]
    v = x @ params["Wv"] + params["bv"]

    q = q.reshape(B, L, n_heads, dh).transpose(0, 2, 1, 3)      # (B,H,L,dh)
    k = k.reshape(B, L, n_heads, dh).transpose(0, 2, 3, 1)      # (B,H,dh,L)
    v = v.reshape(B, L, n_heads, dh).transpose(0, 2, 3, 1)      # (B,H,dh,L)

    k = k @ params["E"][:L, :]                                  # (B,H,dh,k)
    v = (v @ params["F"][:L, :]).transpose(0, 1, 3, 2)          # (B,H,k,dh)

    qk = (q @ k) * scale                                        # (B,H,L,k)
    attn = jax.nn.softmax(qk, axis=-1)
    v_attn = (attn @ v).transpose(0, 2, 1, 3).reshape(B, L, D)
    return v_attn @ params["Wo"] + params["bo"]


# --------------------------------------------------------------------------- #
# Demo / self-test
# --------------------------------------------------------------------------- #
if __name__ == "__main__":
    # Small shapes consistent with the module: B=2, seq_len=L=16, dim=32, heads=4, k=8.
    B, L, D, H, K = 2, 16, 32, 4, 8

    key = jax.random.PRNGKey(0)
    ks = jax.random.split(key, 12)
    scale_w = 0.1
    params = {
        "Wq": jax.random.normal(ks[0], (D, D), jnp.float32) * scale_w,
        "bq": jax.random.normal(ks[1], (D,), jnp.float32) * scale_w,
        "Wk": jax.random.normal(ks[2], (D, D), jnp.float32) * scale_w,
        "bk": jax.random.normal(ks[3], (D,), jnp.float32) * scale_w,
        "Wv": jax.random.normal(ks[4], (D, D), jnp.float32) * scale_w,
        "bv": jax.random.normal(ks[5], (D,), jnp.float32) * scale_w,
        "E": jax.random.normal(ks[6], (L, K), jnp.float32),
        "F": jax.random.normal(ks[7], (L, K), jnp.float32),
        "Wo": jax.random.normal(ks[8], (D, D), jnp.float32) * scale_w,
        "bo": jax.random.normal(ks[9], (D,), jnp.float32) * scale_w,
    }
    x = jax.random.normal(ks[10], (B, L, D), jnp.float32)

    ref = linformer_reference(x, params, n_heads=H)

    # 1) Strict numerics check: f32 MXU operands + exact softmax.
    out_f32 = linformer_attention(x, params, n_heads=H, matmul_dtype=jnp.float32)
    out_f32 = jax.block_until_ready(out_f32)
    assert out_f32.shape == (B, L, D)
    assert jnp.allclose(out_f32, ref, atol=2e-3, rtol=2e-3), \
        "f32 kernel mismatch vs reference"

    # 2) Default fast path: bf16 MXU operands (f32 accumulation / softmax).
    #    Tolerance accounts for the intentional bf16 operand rounding.
    out_fast = linformer_attention(x, params, n_heads=H)
    out_fast = jax.block_until_ready(out_fast)
    assert out_fast.shape == (B, L, D)
    assert jnp.allclose(out_fast, ref, atol=1.5e-1, rtol=1.5e-1), \
        "bf16 kernel drifted too far from reference"

    print("KERNEL_OK")
</pallas_src>

<mosaic_0001>
module attributes {stable_mosaic.version = 11 : i64} {
  func.func @kernel(%arg0: i32, %arg1: memref<2x16x32xf32, #tpu.memory_space<vmem>>, %arg2: memref<32x32xf32, #tpu.memory_space<vmem>>, %arg3: memref<1x32xf32, #tpu.memory_space<vmem>>, %arg4: memref<32x32xf32, #tpu.memory_space<vmem>>, %arg5: memref<1x32xf32, #tpu.memory_space<vmem>>, %arg6: memref<32x32xf32, #tpu.memory_space<vmem>>, %arg7: memref<1x32xf32, #tpu.memory_space<vmem>>, %arg8: memref<8x16xf32, #tpu.memory_space<vmem>>, %arg9: memref<8x16xf32, #tpu.memory_space<vmem>>, %arg10: memref<32x32xf32, #tpu.memory_space<vmem>>, %arg11: memref<1x32xf32, #tpu.memory_space<vmem>>, %arg12: memref<2x16x32xf32, #tpu.memory_space<vmem>>) attributes {dimension_semantics = [#tpu.dimension_semantics<parallel>], iteration_bounds = array<i64: 1>, scalar_prefetch = 0 : i64, scratch_operands = 0 : i64, tpu.core_type = #tpu.core_type<tc>, window_params = [{transform_indices = @transform_0, window_bounds = array<i64: 2, 16, 32>}, {pipeline_mode = #tpu.pipeline_mode<synchronous>, transform_indices = @transform_1, window_bounds = array<i64: 32, 32>}, {pipeline_mode = #tpu.pipeline_mode<synchronous>, transform_indices = @transform_2, window_bounds = array<i64: 1, 32>}, {pipeline_mode = #tpu.pipeline_mode<synchronous>, transform_indices = @transform_3, window_bounds = array<i64: 32, 32>}, {pipeline_mode = #tpu.pipeline_mode<synchronous>, transform_indices = @transform_4, window_bounds = array<i64: 1, 32>}, {pipeline_mode = #tpu.pipeline_mode<synchronous>, transform_indices = @transform_5, window_bounds = array<i64: 32, 32>}, {pipeline_mode = #tpu.pipeline_mode<synchronous>, transform_indices = @transform_6, window_bounds = array<i64: 1, 32>}, {pipeline_mode = #tpu.pipeline_mode<synchronous>, transform_indices = @transform_7, window_bounds = array<i64: 8, 16>}, {pipeline_mode = #tpu.pipeline_mode<synchronous>, transform_indices = @transform_8, window_bounds = array<i64: 8, 16>}, {pipeline_mode = #tpu.pipeline_mode<synchronous>, transform_indices = @transform_9, window_bounds = array<i64: 32, 32>}, {pipeline_mode = #tpu.pipeline_mode<synchronous>, transform_indices = @transform_10, window_bounds = array<i64: 1, 32>}, {transform_indices = @transform_11, window_bounds = array<i64: 2, 16, 32>}]} {
    %c0 = arith.constant 0 : index
    %c0_0 = arith.constant 0 : index
    %0 = vector.load %arg2[%c0, %c0_0] : memref<32x32xf32, #tpu.memory_space<vmem>>, vector<32x32xf32>
    %c0_1 = arith.constant 0 : index
    %c0_2 = arith.constant 0 : index
    %1 = vector.load %arg4[%c0_1, %c0_2] : memref<32x32xf32, #tpu.memory_space<vmem>>, vector<32x32xf32>
    %c0_3 = arith.constant 0 : index
    %c0_4 = arith.constant 0 : index
    %2 = vector.load %arg6[%c0_3, %c0_4] : memref<32x32xf32, #tpu.memory_space<vmem>>, vector<32x32xf32>
    %c0_5 = arith.constant 0 : index
    %c0_6 = arith.constant 0 : index
    %3 = vector.load %arg10[%c0_5, %c0_6] : memref<32x32xf32, #tpu.memory_space<vmem>>, vector<32x32xf32>
    %c0_7 = arith.constant 0 : index
    %c0_8 = arith.constant 0 : index
    %4 = vector.load %arg3[%c0_7, %c0_8] : memref<1x32xf32, #tpu.memory_space<vmem>>, vector<1x32xf32>
    %c0_9 = arith.constant 0 : index
    %c0_10 = arith.constant 0 : index
    %5 = vector.load %arg5[%c0_9, %c0_10] : memref<1x32xf32, #tpu.memory_space<vmem>>, vector<1x32xf32>
    %c0_11 = arith.constant 0 : index
    %c0_12 = arith.constant 0 : index
    %6 = vector.load %arg7[%c0_11, %c0_12] : memref<1x32xf32, #tpu.memory_space<vmem>>, vector<1x32xf32>
    %c0_13 = arith.constant 0 : index
    %c0_14 = arith.constant 0 : index
    %7 = vector.load %arg11[%c0_13, %c0_14] : memref<1x32xf32, #tpu.memory_space<vmem>>, vector<1x32xf32>
    %c0_15 = arith.constant 0 : index
    %c0_16 = arith.constant 0 : index
    %8 = vector.load %arg8[%c0_15, %c0_16] : memref<8x16xf32, #tpu.memory_space<vmem>>, vector<8x16xf32>
    %c0_17 = arith.constant 0 : index
    %c0_18 = arith.constant 0 : index
    %9 = vector.load %arg9[%c0_17, %c0_18] : memref<8x16xf32, #tpu.memory_space<vmem>>, vector<8x16xf32>
    %c0_19 = arith.constant 0 : index
    %c0_20 = arith.constant 0 : index
    %c0_21 = arith.constant 0 : index
    %10 = vector.load %arg1[%c0_19, %c0_20, %c0_21] : memref<2x16x32xf32, #tpu.memory_space<vmem>>, vector<2x16x32xf32>
    %11 = vector.shape_cast %10 : vector<2x16x32xf32> to vector<32x32xf32>
    %cst = arith.constant dense<0.000000e+00> : vector<32x32xf32>
    %12 = tpu.matmul %11, %0, %cst {dimension_numbers = #tpu.dot_dimension_numbers<[1], [0], [0], [1], [0, 0, 1, 1], [], []>} : vector<32x32xf32>, vector<32x32xf32>, vector<32x32xf32> -> vector<32x32xf32>
    %13 = vector.broadcast %4 : vector<1x32xf32> to vector<32x32xf32>
    %14 = arith.addf %12, %13 : vector<32x32xf32>
    %15 = vector.shape_cast %14 : vector<32x32xf32> to vector<2x16x32xf32>
    %cst_22 = arith.constant dense<0.000000e+00> : vector<32x32xf32>
    %16 = tpu.matmul %11, %1, %cst_22 {dimension_numbers = #tpu.dot_dimension_numbers<[1], [0], [0], [1], [0, 0, 1, 1], [], []>} : vector<32x32xf32>, vector<32x32xf32>, vector<32x32xf32> -> vector<32x32xf32>
    %17 = vector.broadcast %5 : vector<1x32xf32> to vector<32x32xf32>
    %18 = arith.addf %16, %17 : vector<32x32xf32>
    %19 = vector.shape_cast %18 : vector<32x32xf32> to vector<2x16x32xf32>
    %cst_23 = arith.constant dense<0.000000e+00> : vector<32x32xf32>
    %20 = tpu.matmul %11, %2, %cst_23 {dimension_numbers = #tpu.dot_dimension_numbers<[1], [0], [0], [1], [0, 0, 1, 1], [], []>} : vector<32x32xf32>, vector<32x32xf32>, vector<32x32xf32> -> vector<32x32xf32>
    %21 = vector.broadcast %6 : vector<1x32xf32> to vector<32x32xf32>
    %22 = arith.addf %20, %21 : vector<32x32xf32>
    %23 = vector.shape_cast %22 : vector<32x32xf32> to vector<2x16x32xf32>
    %24 = vector.extract_strided_slice %15 {offsets = [0, 0, 0], sizes = [1, 16, 32], strides = [1, 1, 1]} : vector<2x16x32xf32> to vector<1x16x32xf32>
    %25 = vector.shape_cast %24 : vector<1x16x32xf32> to vector<16x32xf32>
    %26 = vector.extract_strided_slice %19 {offsets = [0, 0, 0], sizes = [1, 16, 32], strides = [1, 1, 1]} : vector<2x16x32xf32> to vector<1x16x32xf32>
    %27 = vector.shape_cast %26 : vector<1x16x32xf32> to vector<16x32xf32>
    %cst_24 = arith.constant dense<0.000000e+00> : vector<8x32xf32>
    %28 = tpu.matmul %8, %27, %cst_24 {dimension_numbers = #tpu.dot_dimension_numbers<[1], [0], [0], [1], [0, 0, 1, 1], [], []>} : vector<8x16xf32>, vector<16x32xf32>, vector<8x32xf32> -> vector<8x32xf32>
    %29 = vector.extract_strided_slice %23 {offsets = [0, 0, 0], sizes = [1, 16, 32], strides = [1, 1, 1]} : vector<2x16x32xf32> to vector<1x16x32xf32>
    %30 = vector.shape_cast %29 : vector<1x16x32xf32> to vector<16x32xf32>
    %cst_25 = arith.constant dense<0.000000e+00> : vector<8x32xf32>
    %31 = tpu.matmul %9, %30, %cst_25 {dimension_numbers = #tpu.dot_dimension_numbers<[1], [0], [0], [1], [0, 0, 1, 1], [], []>} : vector<8x16xf32>, vector<16x32xf32>, vector<8x32xf32> -> vector<8x32xf32>
    %32 = vector.extract_strided_slice %25 {offsets = [0, 0], sizes = [16, 8], strides = [1, 1]} : vector<16x32xf32> to vector<16x8xf32>
    %33 = vector.extract_strided_slice %28 {offsets = [0, 0], sizes = [8, 8], strides = [1, 1]} : vector<8x32xf32> to vector<8x8xf32>
    %34 = vector.extract_strided_slice %31 {offsets = [0, 0], sizes = [8, 8], strides = [1, 1]} : vector<8x32xf32> to vector<8x8xf32>
    %cst_26 = arith.constant dense<0.000000e+00> : vector<16x8xf32>
    %35 = tpu.matmul %32, %33, %cst_26 {dimension_numbers = #tpu.dot_dimension_numbers<[1], [1], [0], [0], [0, 0, 1, 0], [], []>} : vector<16x8xf32>, vector<8x8xf32>, vector<16x8xf32> -> vector<16x8xf32>
    %cst_27 = arith.constant dense<0xFF800000> : vector<16xf32>
    %36 = vector.multi_reduction <maximumf>, %35, %cst_27 [1] : vector<16x8xf32> to vector<16xf32>
    %37 = vector.shape_cast %36 : vector<16xf32> to vector<16x1xf32>
    %38 = vector.broadcast %37 : vector<16x1xf32> to vector<16x8xf32>
    %39 = arith.subf %35, %38 : vector<16x8xf32>
    %40 = math.exp %39 : vector<16x8xf32>
    %cst_28 = arith.constant dense<0.000000e+00> : vector<16xf32>
    %41 = vector.multi_reduction <add>, %40, %cst_28 [1] : vector<16x8xf32> to vector<16xf32>
    %42 = vector.shape_cast %41 : vector<16xf32> to vector<16x1xf32>
    %43 = vector.broadcast %42 : vector<16x1xf32> to vector<16x8xf32>
    %44 = arith.divf %40, %43 : vector<16x8xf32>
    %cst_29 = arith.constant dense<0.000000e+00> : vector<16x8xf32>
    %45 = tpu.matmul %44, %34, %cst_29 {dimension_numbers = #tpu.dot_dimension_numbers<[1], [0], [0], [1], [0, 0, 1, 1], [], []>} : vector<16x8xf32>, vector<8x8xf32>, vector<16x8xf32> -> vector<16x8xf32>
    %46 = vector.extract_strided_slice %25 {offsets = [0, 8], sizes = [16, 8], strides = [1, 1]} : vector<16x32xf32> to vector<16x8xf32>
    %47 = vector.extract_strided_slice %28 {offsets = [0, 8], sizes = [8, 8], strides = [1, 1]} : vector<8x32xf32> to vector<8x8xf32>
    %48 = vector.extract_strided_slice %31 {offsets = [0, 8], sizes = [8, 8], strides = [1, 1]} : vector<8x32xf32> to vector<8x8xf32>
    %cst_30 = arith.constant dense<0.000000e+00> : vector<16x8xf32>
    %49 = tpu.matmul %46, %47, %cst_30 {dimension_numbers = #tpu.dot_dimension_numbers<[1], [1], [0], [0], [0, 0, 1, 0], [], []>} : vector<16x8xf32>, vector<8x8xf32>, vector<16x8xf32> -> vector<16x8xf32>
    %cst_31 = arith.constant dense<0xFF800000> : vector<16xf32>
    %50 = vector.multi_reduction <maximumf>, %49, %cst_31 [1] : vector<16x8xf32> to vector<16xf32>
    %51 = vector.shape_cast %50 : vector<16xf32> to vector<16x1xf32>
    %52 = vector.broadcast %51 : vector<16x1xf32> to vector<16x8xf32>
    %53 = arith.subf %49, %52 : vector<16x8xf32>
    %54 = math.exp %53 : vector<16x8xf32>
    %cst_32 = arith.constant dense<0.000000e+00> : vector<16xf32>
    %55 = vector.multi_reduction <add>, %54, %cst_32 [1] : vector<16x8xf32> to vector<16xf32>
    %56 = vector.shape_cast %55 : vector<16xf32> to vector<16x1xf32>
    %57 = vector.broadcast %56 : vector<16x1xf32> to vector<16x8xf32>
    %58 = arith.divf %54, %57 : vector<16x8xf32>
    %cst_33 = arith.constant dense<0.000000e+00> : vector<16x8xf32>
    %59 = tpu.matmul %58, %48, %cst_33 {dimension_numbers = #tpu.dot_dimension_numbers<[1], [0], [0], [1], [0, 0, 1, 1], [], []>} : vector<16x8xf32>, vector<8x8xf32>, vector<16x8xf32> -> vector<16x8xf32>
    %60 = vector.extract_strided_slice %25 {offsets = [0, 16], sizes = [16, 8], strides = [1, 1]} : vector<16x32xf32> to vector<16x8xf32>
    %61 = vector.extract_strided_slice %28 {offsets = [0, 16], sizes = [8, 8], strides = [1, 1]} : vector<8x32xf32> to vector<8x8xf32>
    %62 = vector.extract_strided_slice %31 {offsets = [0, 16], sizes = [8, 8], strides = [1, 1]} : vector<8x32xf32> to vector<8x8xf32>
    %cst_34 = arith.constant dense<0.000000e+00> : vector<16x8xf32>
    %63 = tpu.matmul %60, %61, %cst_34 {dimension_numbers = #tpu.dot_dimension_numbers<[1], [1], [0], [0], [0, 0, 1, 0], [], []>} : vector<16x8xf32>, vector<8x8xf32>, vector<16x8xf32> -> vector<16x8xf32>
    %cst_35 = arith.constant dense<0xFF800000> : vector<16xf32>
    %64 = vector.multi_reduction <maximumf>, %63, %cst_35 [1] : vector<16x8xf32> to vector<16xf32>
    %65 = vector.shape_cast %64 : vector<16xf32> to vector<16x1xf32>
    %66 = vector.broadcast %65 : vector<16x1xf32> to vector<16x8xf32>
    %67 = arith.subf %63, %66 : vector<16x8xf32>
    %68 = math.exp %67 : vector<16x8xf32>
    %cst_36 = arith.constant dense<0.000000e+00> : vector<16xf32>
    %69 = vector.multi_reduction <add>, %68, %cst_36 [1] : vector<16x8xf32> to vector<16xf32>
    %70 = vector.shape_cast %69 : vector<16xf32> to vector<16x1xf32>
    %71 = vector.broadcast %70 : vector<16x1xf32> to vector<16x8xf32>
    %72 = arith.divf %68, %71 : vector<16x8xf32>
    %cst_37 = arith.constant dense<0.000000e+00> : vector<16x8xf32>
    %73 = tpu.matmul %72, %62, %cst_37 {dimension_numbers = #tpu.dot_dimension_numbers<[1], [0], [0], [1], [0, 0, 1, 1], [], []>} : vector<16x8xf32>, vector<8x8xf32>, vector<16x8xf32> -> vector<16x8xf32>
    %74 = vector.extract_strided_slice %25 {offsets = [0, 24], sizes = [16, 8], strides = [1, 1]} : vector<16x32xf32> to vector<16x8xf32>
    %75 = vector.extract_strided_slice %28 {offsets = [0, 24], sizes = [8, 8], strides = [1, 1]} : vector<8x32xf32> to vector<8x8xf32>
    %76 = vector.extract_strided_slice %31 {offsets = [0, 24], sizes = [8, 8], strides = [1, 1]} : vector<8x32xf32> to vector<8x8xf32>
    %cst_38 = arith.constant dense<0.000000e+00> : vector<16x8xf32>
    %77 = tpu.matmul %74, %75, %cst_38 {dimension_numbers = #tpu.dot_dimension_numbers<[1], [1], [0], [0], [0, 0, 1, 0], [], []>} : vector<16x8xf32>, vector<8x8xf32>, vector<16x8xf32> -> vector<16x8xf32>
    %cst_39 = arith.constant dense<0xFF800000> : vector<16xf32>
    %78 = vector.multi_reduction <maximumf>, %77, %cst_39 [1] : vector<16x8xf32> to vector<16xf32>
    %79 = vector.shape_cast %78 : vector<16xf32> to vector<16x1xf32>
    %80 = vector.broadcast %79 : vector<16x1xf32> to vector<16x8xf32>
    %81 = arith.subf %77, %80 : vector<16x8xf32>
    %82 = math.exp %81 : vector<16x8xf32>
    %cst_40 = arith.constant dense<0.000000e+00> : vector<16xf32>
    %83 = vector.multi_reduction <add>, %82, %cst_40 [1] : vector<16x8xf32> to vector<16xf32>
    %84 = vector.shape_cast %83 : vector<16xf32> to vector<16x1xf32>
    %85 = vector.broadcast %84 : vector<16x1xf32> to vector<16x8xf32>
    %86 = arith.divf %82, %85 : vector<16x8xf32>
    %cst_41 = arith.constant dense<0.000000e+00> : vector<16x8xf32>
    %87 = tpu.matmul %86, %76, %cst_41 {dimension_numbers = #tpu.dot_dimension_numbers<[1], [0], [0], [1], [0, 0, 1, 1], [], []>} : vector<16x8xf32>, vector<8x8xf32>, vector<16x8xf32> -> vector<16x8xf32>
    %88 = tpu.concatenate %45, %59, %73, %87 in 1 : vector<16x8xf32>, vector<16x8xf32>, vector<16x8xf32>, vector<16x8xf32> -> vector<16x32xf32>
    %cst_42 = arith.constant dense<0.000000e+00> : vector<16x32xf32>
    %89 = tpu.matmul %88, %3, %cst_42 {dimension_numbers = #tpu.dot_dimension_numbers<[1], [0], [0], [1], [0, 0, 1, 1], [], []>} : vector<16x32xf32>, vector<32x32xf32>, vector<16x32xf32> -> vector<16x32xf32>
    %90 = vector.broadcast %7 : vector<1x32xf32> to vector<16x32xf32>
    %91 = arith.addf %89, %90 : vector<16x32xf32>
    %c0_43 = arith.constant 0 : index
    %c0_44 = arith.constant 0 : index
    %c0_45 = arith.constant 0 : index
    %92 = vector.load %arg12[%c0_43, %c0_44, %c0_45] : memref<2x16x32xf32, #tpu.memory_space<vmem>>, vector<1x16x32xf32>
    %93 = vector.shape_cast %92 : vector<1x16x32xf32> to vector<16x32xf32>
    %94 = vector.shape_cast %91 : vector<16x32xf32> to vector<1x16x32xf32>
    tpu.vector_store %arg12[%c0_43, %c0_44, %c0_45], %94 {strides = array<i32>} : memref<2x16x32xf32, #tpu.memory_space<vmem>>, vector<1x16x32xf32>,
    %95 = vector.extract_strided_slice %15 {offsets = [1, 0, 0], sizes = [1, 16, 32], strides = [1, 1, 1]} : vector<2x16x32xf32> to vector<1x16x32xf32>
    %96 = vector.shape_cast %95 : vector<1x16x32xf32> to vector<16x32xf32>
    %97 = vector.extract_strided_slice %19 {offsets = [1, 0, 0], sizes = [1, 16, 32], strides = [1, 1, 1]} : vector<2x16x32xf32> to vector<1x16x32xf32>
    %98 = vector.shape_cast %97 : vector<1x16x32xf32> to vector<16x32xf32>
    %cst_46 = arith.constant dense<0.000000e+00> : vector<8x32xf32>
    %99 = tpu.matmul %8, %98, %cst_46 {dimension_numbers = #tpu.dot_dimension_numbers<[1], [0], [0], [1], [0, 0, 1, 1], [], []>} : vector<8x16xf32>, vector<16x32xf32>, vector<8x32xf32> -> vector<8x32xf32>
    %100 = vector.extract_strided_slice %23 {offsets = [1, 0, 0], sizes = [1, 16, 32], strides = [1, 1, 1]} : vector<2x16x32xf32> to vector<1x16x32xf32>
    %101 = vector.shape_cast %100 : vector<1x16x32xf32> to vector<16x32xf32>
    %cst_47 = arith.constant dense<0.000000e+00> : vector<8x32xf32>
    %102 = tpu.matmul %9, %101, %cst_47 {dimension_numbers = #tpu.dot_dimension_numbers<[1], [0], [0], [1], [0, 0, 1, 1], [], []>} : vector<8x16xf32>, vector<16x32xf32>, vector<8x32xf32> -> vector<8x32xf32>
    %103 = vector.extract_strided_slice %96 {offsets = [0, 0], sizes = [16, 8], strides = [1, 1]} : vector<16x32xf32> to vector<16x8xf32>
    %104 = vector.extract_strided_slice %99 {offsets = [0, 0], sizes = [8, 8], strides = [1, 1]} : vector<8x32xf32> to vector<8x8xf32>
    %105 = vector.extract_strided_slice %102 {offsets = [0, 0], sizes = [8, 8], strides = [1, 1]} : vector<8x32xf32> to vector<8x8xf32>
    %cst_48 = arith.constant dense<0.000000e+00> : vector<16x8xf32>
    %106 = tpu.matmul %103, %104, %cst_48 {dimension_numbers = #tpu.dot_dimension_numbers<[1], [1], [0], [0], [0, 0, 1, 0], [], []>} : vector<16x8xf32>, vector<8x8xf32>, vector<16x8xf32> -> vector<16x8xf32>
    %cst_49 = arith.constant dense<0xFF800000> : vector<16xf32>
    %107 = vector.multi_reduction <maximumf>, %106, %cst_49 [1] : vector<16x8xf32> to vector<16xf32>
    %108 = vector.shape_cast %107 : vector<16xf32> to vector<16x1xf32>
    %109 = vector.broadcast %108 : vector<16x1xf32> to vector<16x8xf32>
    %110 = arith.subf %106, %109 : vector<16x8xf32>
    %111 = math.exp %110 : vector<16x8xf32>
    %cst_50 = arith.constant dense<0.000000e+00> : vector<16xf32>
    %112 = vector.multi_reduction <add>, %111, %cst_50 [1] : vector<16x8xf32> to vector<16xf32>
    %113 = vector.shape_cast %112 : vector<16xf32> to vector<16x1xf32>
    %114 = vector.broadcast %113 : vector<16x1xf32> to vector<16x8xf32>
    %115 = arith.divf %111, %114 : vector<16x8xf32>
    %cst_51 = arith.constant dense<0.000000e+00> : vector<16x8xf32>
    %116 = tpu.matmul %115, %105, %cst_51 {dimension_numbers = #tpu.dot_dimension_numbers<[1], [0], [0], [1], [0, 0, 1, 1], [], []>} : vector<16x8xf32>, vector<8x8xf32>, vector<16x8xf32> -> vector<16x8xf32>
    %117 = vector.extract_strided_slice %96 {offsets = [0, 8], sizes = [16, 8], strides = [1, 1]} : vector<16x32xf32> to vector<16x8xf32>
    %118 = vector.extract_strided_slice %99 {offsets = [0, 8], sizes = [8, 8], strides = [1, 1]} : vector<8x32xf32> to vector<8x8xf32>
    %119 = vector.extract_strided_slice %102 {offsets = [0, 8], sizes = [8, 8], strides = [1, 1]} : vector<8x32xf32> to vector<8x8xf32>
    %cst_52 = arith.constant dense<0.000000e+00> : vector<16x8xf32>
    %120 = tpu.matmul %117, %118, %cst_52 {dimension_numbers = #tpu.dot_dimension_numbers<[1], [1], [0], [0], [0, 0, 1, 0], [], []>} : vector<16x8xf32>, vector<8x8xf32>, vector<16x8xf32> -> vector<16x8xf32>
    %cst_53 = arith.constant dense<0xFF800000> : vector<16xf32>
    %121 = vector.multi_reduction <maximumf>, %120, %cst_53 [1] : vector<16x8xf32> to vector<16xf32>
    %122 = vector.shape_cast %121 : vector<16xf32> to vector<16x1xf32>
    %123 = vector.broadcast %122 : vector<16x1xf32> to vector<16x8xf32>
    %124 = arith.subf %120, %123 : vector<16x8xf32>
    %125 = math.exp %124 : vector<16x8xf32>
    %cst_54 = arith.constant dense<0.000000e+00> : vector<16xf32>
    %126 = vector.multi_reduction <add>, %125, %cst_54 [1] : vector<16x8xf32> to vector<16xf32>
    %127 = vector.shape_cast %126 : vector<16xf32> to vector<16x1xf32>
    %128 = vector.broadcast %127 : vector<16x1xf32> to vector<16x8xf32>
    %129 = arith.divf %125, %128 : vector<16x8xf32>
    %cst_55 = arith.constant dense<0.000000e+00> : vector<16x8xf32>
    %130 = tpu.matmul %129, %119, %cst_55 {dimension_numbers = #tpu.dot_dimension_numbers<[1], [0], [0], [1], [0, 0, 1, 1], [], []>} : vector<16x8xf32>, vector<8x8xf32>, vector<16x8xf32> -> vector<16x8xf32>
    %131 = vector.extract_strided_slice %96 {offsets = [0, 16], sizes = [16, 8], strides = [1, 1]} : vector<16x32xf32> to vector<16x8xf32>
    %132 = vector.extract_strided_slice %99 {offsets = [0, 16], sizes = [8, 8], strides = [1, 1]} : vector<8x32xf32> to vector<8x8xf32>
    %133 = vector.extract_strided_slice %102 {offsets = [0, 16], sizes = [8, 8], strides = [1, 1]} : vector<8x32xf32> to vector<8x8xf32>
    %cst_56 = arith.constant dense<0.000000e+00> : vector<16x8xf32>
    %134 = tpu.matmul %131, %132, %cst_56 {dimension_numbers = #tpu.dot_dimension_numbers<[1], [1], [0], [0], [0, 0, 1, 0], [], []>} : vector<16x8xf32>, vector<8x8xf32>, vector<16x8xf32> -> vector<16x8xf32>
    %cst_57 = arith.constant dense<0xFF800000> : vector<16xf32>
    %135 = vector.multi_reduction <maximumf>, %134, %cst_57 [1] : vector<16x8xf32> to vector<16xf32>
    %136 = vector.shape_cast %135 : vector<16xf32> to vector<16x1xf32>
    %137 = vector.broadcast %136 : vector<16x1xf32> to vector<16x8xf32>
    %138 = arith.subf %134, %137 : vector<16x8xf32>
    %139 = math.exp %138 : vector<16x8xf32>
    %cst_58 = arith.constant dense<0.000000e+00> : vector<16xf32>
    %140 = vector.multi_reduction <add>, %139, %cst_58 [1] : vector<16x8xf32> to vector<16xf32>
    %141 = vector.shape_cast %140 : vector<16xf32> to vector<16x1xf32>
    %142 = vector.broadcast %141 : vector<16x1xf32> to vector<16x8xf32>
    %143 = arith.divf %139, %142 : vector<16x8xf32>
    %cst_59 = arith.constant dense<0.000000e+00> : vector<16x8xf32>
    %144 = tpu.matmul %143, %133, %cst_59 {dimension_numbers = #tpu.dot_dimension_numbers<[1], [0], [0], [1], [0, 0, 1, 1], [], []>} : vector<16x8xf32>, vector<8x8xf32>, vector<16x8xf32> -> vector<16x8xf32>
    %145 = vector.extract_strided_slice %96 {offsets = [0, 24], sizes = [16, 8], strides = [1, 1]} : vector<16x32xf32> to vector<16x8xf32>
    %146 = vector.extract_strided_slice %99 {offsets = [0, 24], sizes = [8, 8], strides = [1, 1]} : vector<8x32xf32> to vector<8x8xf32>
    %147 = vector.extract_strided_slice %102 {offsets = [0, 24], sizes = [8, 8], strides = [1, 1]} : vector<8x32xf32> to vector<8x8xf32>
    %cst_60 = arith.constant dense<0.000000e+00> : vector<16x8xf32>
    %148 = tpu.matmul %145, %146, %cst_60 {dimension_numbers = #tpu.dot_dimension_numbers<[1], [1], [0], [0], [0, 0, 1, 0], [], []>} : vector<16x8xf32>, vector<8x8xf32>, vector<16x8xf32> -> vector<16x8xf32>
    %cst_61 = arith.constant dense<0xFF800000> : vector<16xf32>
    %149 = vector.multi_reduction <maximumf>, %148, %cst_61 [1] : vector<16x8xf32> to vector<16xf32>
    %150 = vector.shape_cast %149 : vector<16xf32> to vector<16x1xf32>
    %151 = vector.broadcast %150 : vector<16x1xf32> to vector<16x8xf32>
    %152 = arith.subf %148, %151 : vector<16x8xf32>
    %153 = math.exp %152 : vector<16x8xf32>
    %cst_62 = arith.constant dense<0.000000e+00> : vector<16xf32>
    %154 = vector.multi_reduction <add>, %153, %cst_62 [1] : vector<16x8xf32> to vector<16xf32>
    %155 = vector.shape_cast %154 : vector<16xf32> to vector<16x1xf32>
    %156 = vector.broadcast %155 : vector<16x1xf32> to vector<16x8xf32>
    %157 = arith.divf %153, %156 : vector<16x8xf32>
    %cst_63 = arith.constant dense<0.000000e+00> : vector<16x8xf32>
    %158 = tpu.matmul %157, %147, %cst_63 {dimension_numbers = #tpu.dot_dimension_numbers<[1], [0], [0], [1], [0, 0, 1, 1], [], []>} : vector<16x8xf32>, vector<8x8xf32>, vector<16x8xf32> -> vector<16x8xf32>
    %159 = tpu.concatenate %116, %130, %144, %158 in 1 : vector<16x8xf32>, vector<16x8xf32>, vector<16x8xf32>, vector<16x8xf32> -> vector<16x32xf32>
    %cst_64 = arith.constant dense<0.000000e+00> : vector<16x32xf32>
    %160 = tpu.matmul %159, %3, %cst_64 {dimension_numbers = #tpu.dot_dimension_numbers<[1], [0], [0], [1], [0, 0, 1, 1], [], []>} : vector<16x32xf32>, vector<32x32xf32>, vector<16x32xf32> -> vector<16x32xf32>
    %161 = vector.broadcast %7 : vector<1x32xf32> to vector<16x32xf32>
    %162 = arith.addf %160, %161 : vector<16x32xf32>
    %c1 = arith.constant 1 : index
    %c0_65 = arith.constant 0 : index
    %c0_66 = arith.constant 0 : index
    %163 = vector.load %arg12[%c1, %c0_65, %c0_66] : memref<2x16x32xf32, #tpu.memory_space<vmem>>, vector<1x16x32xf32>
    %164 = vector.shape_cast %163 : vector<1x16x32xf32> to vector<16x32xf32>
    %165 = vector.shape_cast %162 : vector<16x32xf32> to vector<1x16x32xf32>
    tpu.vector_store %arg12[%c1, %c0_65, %c0_66], %165 {strides = array<i32>} : memref<2x16x32xf32, #tpu.memory_space<vmem>>, vector<1x16x32xf32>,
    return
  }
  func.func @transform_0(%arg0: i32) -> (i32, i32, i32) {
    %c0_i32 = arith.constant 0 : i32
    %c0_i32_0 = arith.constant 0 : i32
    %c0_i32_1 = arith.constant 0 : i32
    return %arg0, %c0_i32, %c0_i32_0 : i32, i32, i32
  }
  func.func @transform_1(%arg0: i32) -> (i32, i32) {
    %c0_i32 = arith.constant 0 : i32
    %c0_i32_0 = arith.constant 0 : i32
    %c0_i32_1 = arith.constant 0 : i32
    return %c0_i32, %c0_i32_0 : i32, i32
  }
  func.func @transform_2(%arg0: i32) -> (i32, i32) {
    %c0_i32 = arith.constant 0 : i32
    %c0_i32_0 = arith.constant 0 : i32
    %c0_i32_1 = arith.constant 0 : i32
    return %c0_i32, %c0_i32_0 : i32, i32
  }
  func.func @transform_3(%arg0: i32) -> (i32, i32) {
    %c0_i32 = arith.constant 0 : i32
    %c0_i32_0 = arith.constant 0 : i32
    %c0_i32_1 = arith.constant 0 : i32
    return %c0_i32, %c0_i32_0 : i32, i32
  }
  func.func @transform_4(%arg0: i32) -> (i32, i32) {
    %c0_i32 = arith.constant 0 : i32
    %c0_i32_0 = arith.constant 0 : i32
    %c0_i32_1 = arith.constant 0 : i32
    return %c0_i32, %c0_i32_0 : i32, i32
  }
  func.func @transform_5(%arg0: i32) -> (i32, i32) {
    %c0_i32 = arith.constant 0 : i32
    %c0_i32_0 = arith.constant 0 : i32
    %c0_i32_1 = arith.constant 0 : i32
    return %c0_i32, %c0_i32_0 : i32, i32
  }
  func.func @transform_6(%arg0: i32) -> (i32, i32) {
    %c0_i32 = arith.constant 0 : i32
    %c0_i32_0 = arith.constant 0 : i32
    %c0_i32_1 = arith.constant 0 : i32
    return %c0_i32, %c0_i32_0 : i32, i32
  }
  func.func @transform_7(%arg0: i32) -> (i32, i32) {
    %c0_i32 = arith.constant 0 : i32
    %c0_i32_0 = arith.constant 0 : i32
    %c0_i32_1 = arith.constant 0 : i32
    return %c0_i32, %c0_i32_0 : i32, i32
  }
  func.func @transform_8(%arg0: i32) -> (i32, i32) {
    %c0_i32 = arith.constant 0 : i32
    %c0_i32_0 = arith.constant 0 : i32
    %c0_i32_1 = arith.constant 0 : i32
    return %c0_i32, %c0_i32_0 : i32, i32
  }
  func.func @transform_9(%arg0: i32) -> (i32, i32) {
    %c0_i32 = arith.constant 0 : i32
    %c0_i32_0 = arith.constant 0 : i32
    %c0_i32_1 = arith.constant 0 : i32
    return %c0_i32, %c0_i32_0 : i32, i32
  }
  func.func @transform_10(%arg0: i32) -> (i32, i32) {
    %c0_i32 = arith.constant 0 : i32
    %c0_i32_0 = arith.constant 0 : i32
    %c0_i32_1 = arith.constant 0 : i32
    return %c0_i32, %c0_i32_0 : i32, i32
  }
  func.func @transform_11(%arg0: i32) -> (i32, i32, i32) {
    %c0_i32 = arith.constant 0 : i32
    %c0_i32_0 = arith.constant 0 : i32
    %c0_i32_1 = arith.constant 0 : i32
    return %arg0, %c0_i32, %c0_i32_0 : i32, i32, i32
  }
}

module attributes {stable_mosaic.version = 11 : i64} {
  func.func @kernel(%arg0: i32, %arg1: memref<2x16x32xf32, #tpu.memory_space<vmem>>, %arg2: memref<32x32xf32, #tpu.memory_space<vmem>>, %arg3: memref<1x32xf32, #tpu.memory_space<vmem>>, %arg4: memref<32x32xf32, #tpu.memory_space<vmem>>, %arg5: memref<1x32xf32, #tpu.memory_space<vmem>>, %arg6: memref<32x32xf32, #tpu.memory_space<vmem>>, %arg7: memref<1x32xf32, #tpu.memory_space<vmem>>, %arg8: memref<8x16xf32, #tpu.memory_space<vmem>>, %arg9: memref<8x16xf32, #tpu.memory_space<vmem>>, %arg10: memref<32x32xf32, #tpu.memory_space<vmem>>, %arg11: memref<1x32xf32, #tpu.memory_space<vmem>>, %arg12: memref<2x16x32xf32, #tpu.memory_space<vmem>>) attributes {dimension_semantics = [#tpu.dimension_semantics<parallel>], iteration_bounds = array<i64: 1>, scalar_prefetch = 0 : i64, scratch_operands = 0 : i64, tpu.core_type = #tpu.core_type<tc>, window_params = [{transform_indices = @transform_0, window_bounds = array<i64: 2, 16, 32>}, {pipeline_mode = #tpu.pipeline_mode<synchronous>, transform_indices = @transform_1, window_bounds = array<i64: 32, 32>}, {pipeline_mode = #tpu.pipeline_mode<synchronous>, transform_indices = @transform_2, window_bounds = array<i64: 1, 32>}, {pipeline_mode = #tpu.pipeline_mode<synchronous>, transform_indices = @transform_3, window_bounds = array<i64: 32, 32>}, {pipeline_mode = #tpu.pipeline_mode<synchronous>, transform_indices = @transform_4, window_bounds = array<i64: 1, 32>}, {pipeline_mode = #tpu.pipeline_mode<synchronous>, transform_indices = @transform_5, window_bounds = array<i64: 32, 32>}, {pipeline_mode = #tpu.pipeline_mode<synchronous>, transform_indices = @transform_6, window_bounds = array<i64: 1, 32>}, {pipeline_mode = #tpu.pipeline_mode<synchronous>, transform_indices = @transform_7, window_bounds = array<i64: 8, 16>}, {pipeline_mode = #tpu.pipeline_mode<synchronous>, transform_indices = @transform_8, window_bounds = array<i64: 8, 16>}, {pipeline_mode = #tpu.pipeline_mode<synchronous>, transform_indices = @transform_9, window_bounds = array<i64: 32, 32>}, {pipeline_mode = #tpu.pipeline_mode<synchronous>, transform_indices = @transform_10, window_bounds = array<i64: 1, 32>}, {transform_indices = @transform_11, window_bounds = array<i64: 2, 16, 32>}]} {
    %c0 = arith.constant 0 : index
    %c0_0 = arith.constant 0 : index
    %0 = vector.load %arg2[%c0, %c0_0] : memref<32x32xf32, #tpu.memory_space<vmem>>, vector<32x32xf32>
    %c0_1 = arith.constant 0 : index
    %c0_2 = arith.constant 0 : index
    %1 = vector.load %arg4[%c0_1, %c0_2] : memref<32x32xf32, #tpu.memory_space<vmem>>, vector<32x32xf32>
    %c0_3 = arith.constant 0 : index
    %c0_4 = arith.constant 0 : index
    %2 = vector.load %arg6[%c0_3, %c0_4] : memref<32x32xf32, #tpu.memory_space<vmem>>, vector<32x32xf32>
    %c0_5 = arith.constant 0 : index
    %c0_6 = arith.constant 0 : index
    %3 = vector.load %arg10[%c0_5, %c0_6] : memref<32x32xf32, #tpu.memory_space<vmem>>, vector<32x32xf32>
    %c0_7 = arith.constant 0 : index
    %c0_8 = arith.constant 0 : index
    %4 = vector.load %arg3[%c0_7, %c0_8] : memref<1x32xf32, #tpu.memory_space<vmem>>, vector<1x32xf32>
    %c0_9 = arith.constant 0 : index
    %c0_10 = arith.constant 0 : index
    %5 = vector.load %arg5[%c0_9, %c0_10] : memref<1x32xf32, #tpu.memory_space<vmem>>, vector<1x32xf32>
    %c0_11 = arith.constant 0 : index
    %c0_12 = arith.constant 0 : index
    %6 = vector.load %arg7[%c0_11, %c0_12] : memref<1x32xf32, #tpu.memory_space<vmem>>, vector<1x32xf32>
    %c0_13 = arith.constant 0 : index
    %c0_14 = arith.constant 0 : index
    %7 = vector.load %arg11[%c0_13, %c0_14] : memref<1x32xf32, #tpu.memory_space<vmem>>, vector<1x32xf32>
    %c0_15 = arith.constant 0 : index
    %c0_16 = arith.constant 0 : index
    %8 = vector.load %arg8[%c0_15, %c0_16] : memref<8x16xf32, #tpu.memory_space<vmem>>, vector<8x16xf32>
    %c0_17 = arith.constant 0 : index
    %c0_18 = arith.constant 0 : index
    %9 = vector.load %arg9[%c0_17, %c0_18] : memref<8x16xf32, #tpu.memory_space<vmem>>, vector<8x16xf32>
    %c0_19 = arith.constant 0 : index
    %c0_20 = arith.constant 0 : index
    %c0_21 = arith.constant 0 : index
    %10 = vector.load %arg1[%c0_19, %c0_20, %c0_21] : memref<2x16x32xf32, #tpu.memory_space<vmem>>, vector<2x16x32xf32>
    %11 = vector.shape_cast %10 : vector<2x16x32xf32> to vector<32x32xf32>
    %cst = arith.constant dense<0.000000e+00> : vector<32x32xf32>
    %12 = tpu.matmul %11, %0, %cst {dimension_numbers = #tpu.dot_dimension_numbers<[1], [0], [0], [1], [0, 0, 1, 1], [], []>} : vector<32x32xf32>, vector<32x32xf32>, vector<32x32xf32> -> vector<32x32xf32>
    %13 = vector.broadcast %4 : vector<1x32xf32> to vector<32x32xf32>
    %14 = arith.addf %12, %13 : vector<32x32xf32>
    %15 = vector.shape_cast %14 : vector<32x32xf32> to vector<2x16x32xf32>
    %cst_22 = arith.constant dense<0.000000e+00> : vector<32x32xf32>
    %16 = tpu.matmul %11, %1, %cst_22 {dimension_numbers = #tpu.dot_dimension_numbers<[1], [0], [0], [1], [0, 0, 1, 1], [], []>} : vector<32x32xf32>, vector<32x32xf32>, vector<32x32xf32> -> vector<32x32xf32>
    %17 = vector.broadcast %5 : vector<1x32xf32> to vector<32x32xf32>
    %18 = arith.addf %16, %17 : vector<32x32xf32>
    %19 = vector.shape_cast %18 : vector<32x32xf32> to vector<2x16x32xf32>
    %cst_23 = arith.constant dense<0.000000e+00> : vector<32x32xf32>
    %20 = tpu.matmul %11, %2, %cst_23 {dimension_numbers = #tpu.dot_dimension_numbers<[1], [0], [0], [1], [0, 0, 1, 1], [], []>} : vector<32x32xf32>, vector<32x32xf32>, vector<32x32xf32> -> vector<32x32xf32>
    %21 = vector.broadcast %6 : vector<1x32xf32> to vector<32x32xf32>
    %22 = arith.addf %20, %21 : vector<32x32xf32>
    %23 = vector.shape_cast %22 : vector<32x32xf32> to vector<2x16x32xf32>
    %24 = vector.extract_strided_slice %15 {offsets = [0, 0, 0], sizes = [1, 16, 32], strides = [1, 1, 1]} : vector<2x16x32xf32> to vector<1x16x32xf32>
    %25 = vector.shape_cast %24 : vector<1x16x32xf32> to vector<16x32xf32>
    %26 = vector.extract_strided_slice %19 {offsets = [0, 0, 0], sizes = [1, 16, 32], strides = [1, 1, 1]} : vector<2x16x32xf32> to vector<1x16x32xf32>
    %27 = vector.shape_cast %26 : vector<1x16x32xf32> to vector<16x32xf32>
    %cst_24 = arith.constant dense<0.000000e+00> : vector<8x32xf32>
    %28 = tpu.matmul %8, %27, %cst_24 {dimension_numbers = #tpu.dot_dimension_numbers<[1], [0], [0], [1], [0, 0, 1, 1], [], []>} : vector<8x16xf32>, vector<16x32xf32>, vector<8x32xf32> -> vector<8x32xf32>
    %29 = vector.extract_strided_slice %23 {offsets = [0, 0, 0], sizes = [1, 16, 32], strides = [1, 1, 1]} : vector<2x16x32xf32> to vector<1x16x32xf32>
    %30 = vector.shape_cast %29 : vector<1x16x32xf32> to vector<16x32xf32>
    %cst_25 = arith.constant dense<0.000000e+00> : vector<8x32xf32>
    %31 = tpu.matmul %9, %30, %cst_25 {dimension_numbers = #tpu.dot_dimension_numbers<[1], [0], [0], [1], [0, 0, 1, 1], [], []>} : vector<8x16xf32>, vector<16x32xf32>, vector<8x32xf32> -> vector<8x32xf32>
    %32 = vector.extract_strided_slice %25 {offsets = [0, 0], sizes = [16, 8], strides = [1, 1]} : vector<16x32xf32> to vector<16x8xf32>
    %33 = vector.extract_strided_slice %28 {offsets = [0, 0], sizes = [8, 8], strides = [1, 1]} : vector<8x32xf32> to vector<8x8xf32>
    %34 = vector.extract_strided_slice %31 {offsets = [0, 0], sizes = [8, 8], strides = [1, 1]} : vector<8x32xf32> to vector<8x8xf32>
    %cst_26 = arith.constant dense<0.000000e+00> : vector<16x8xf32>
    %35 = tpu.matmul %32, %33, %cst_26 {dimension_numbers = #tpu.dot_dimension_numbers<[1], [1], [0], [0], [0, 0, 1, 0], [], []>} : vector<16x8xf32>, vector<8x8xf32>, vector<16x8xf32> -> vector<16x8xf32>
    %cst_27 = arith.constant dense<0xFF800000> : vector<16xf32>
    %36 = vector.multi_reduction <maximumf>, %35, %cst_27 [1] : vector<16x8xf32> to vector<16xf32>
    %37 = vector.shape_cast %36 : vector<16xf32> to vector<16x1xf32>
    %38 = vector.broadcast %37 : vector<16x1xf32> to vector<16x8xf32>
    %39 = arith.subf %35, %38 : vector<16x8xf32>
    %40 = math.exp %39 : vector<16x8xf32>
    %cst_28 = arith.constant dense<0.000000e+00> : vector<16xf32>
    %41 = vector.multi_reduction <add>, %40, %cst_28 [1] : vector<16x8xf32> to vector<16xf32>
    %42 = vector.shape_cast %41 : vector<16xf32> to vector<16x1xf32>
    %43 = vector.broadcast %42 : vector<16x1xf32> to vector<16x8xf32>
    %44 = arith.divf %40, %43 : vector<16x8xf32>
    %cst_29 = arith.constant dense<0.000000e+00> : vector<16x8xf32>
    %45 = tpu.matmul %44, %34, %cst_29 {dimension_numbers = #tpu.dot_dimension_numbers<[1], [0], [0], [1], [0, 0, 1, 1], [], []>} : vector<16x8xf32>, vector<8x8xf32>, vector<16x8xf32> -> vector<16x8xf32>
    %46 = vector.extract_strided_slice %25 {offsets = [0, 8], sizes = [16, 8], strides = [1, 1]} : vector<16x32xf32> to vector<16x8xf32>
    %47 = vector.extract_strided_slice %28 {offsets = [0, 8], sizes = [8, 8], strides = [1, 1]} : vector<8x32xf32> to vector<8x8xf32>
    %48 = vector.extract_strided_slice %31 {offsets = [0, 8], sizes = [8, 8], strides = [1, 1]} : vector<8x32xf32> to vector<8x8xf32>
    %cst_30 = arith.constant dense<0.000000e+00> : vector<16x8xf32>
    %49 = tpu.matmul %46, %47, %cst_30 {dimension_numbers = #tpu.dot_dimension_numbers<[1], [1], [0], [0], [0, 0, 1, 0], [], []>} : vector<16x8xf32>, vector<8x8xf32>, vector<16x8xf32> -> vector<16x8xf32>
    %cst_31 = arith.constant dense<0xFF800000> : vector<16xf32>
    %50 = vector.multi_reduction <maximumf>, %49, %cst_31 [1] : vector<16x8xf32> to vector<16xf32>
    %51 = vector.shape_cast %50 : vector<16xf32> to vector<16x1xf32>
    %52 = vector.broadcast %51 : vector<16x1xf32> to vector<16x8xf32>
    %53 = arith.subf %49, %52 : vector<16x8xf32>
    %54 = math.exp %53 : vector<16x8xf32>
    %cst_32 = arith.constant dense<0.000000e+00> : vector<16xf32>
    %55 = vector.multi_reduction <add>, %54, %cst_32 [1] : vector<16x8xf32> to vector<16xf32>
    %56 = vector.shape_cast %55 : vector<16xf32> to vector<16x1xf32>
    %57 = vector.broadcast %56 : vector<16x1xf32> to vector<16x8xf32>
    %58 = arith.divf %54, %57 : vector<16x8xf32>
    %cst_33 = arith.constant dense<0.000000e+00> : vector<16x8xf32>
    %59 = tpu.matmul %58, %48, %cst_33 {dimension_numbers = #tpu.dot_dimension_numbers<[1], [0], [0], [1], [0, 0, 1, 1], [], []>} : vector<16x8xf32>, vector<8x8xf32>, vector<16x8xf32> -> vector<16x8xf32>
    %60 = vector.extract_strided_slice %25 {offsets = [0, 16], sizes = [16, 8], strides = [1, 1]} : vector<16x32xf32> to vector<16x8xf32>
    %61 = vector.extract_strided_slice %28 {offsets = [0, 16], sizes = [8, 8], strides = [1, 1]} : vector<8x32xf32> to vector<8x8xf32>
    %62 = vector.extract_strided_slice %31 {offsets = [0, 16], sizes = [8, 8], strides = [1, 1]} : vector<8x32xf32> to vector<8x8xf32>
    %cst_34 = arith.constant dense<0.000000e+00> : vector<16x8xf32>
    %63 = tpu.matmul %60, %61, %cst_34 {dimension_numbers = #tpu.dot_dimension_numbers<[1], [1], [0], [0], [0, 0, 1, 0], [], []>} : vector<16x8xf32>, vector<8x8xf32>, vector<16x8xf32> -> vector<16x8xf32>
    %cst_35 = arith.constant dense<0xFF800000> : vector<16xf32>
    %64 = vector.multi_reduction <maximumf>, %63, %cst_35 [1] : vector<16x8xf32> to vector<16xf32>
    %65 = vector.shape_cast %64 : vector<16xf32> to vector<16x1xf32>
    %66 = vector.broadcast %65 : vector<16x1xf32> to vector<16x8xf32>
    %67 = arith.subf %63, %66 : vector<16x8xf32>
    %68 = math.exp %67 : vector<16x8xf32>
    %cst_36 = arith.constant dense<0.000000e+00> : vector<16xf32>
    %69 = vector.multi_reduction <add>, %68, %cst_36 [1] : vector<16x8xf32> to vector<16xf32>
    %70 = vector.shape_cast %69 : vector<16xf32> to vector<16x1xf32>
    %71 = vector.broadcast %70 : vector<16x1xf32> to vector<16x8xf32>
    %72 = arith.divf %68, %71 : vector<16x8xf32>
    %cst_37 = arith.constant dense<0.000000e+00> : vector<16x8xf32>
    %73 = tpu.matmul %72, %62, %cst_37 {dimension_numbers = #tpu.dot_dimension_numbers<[1], [0], [0], [1], [0, 0, 1, 1], [], []>} : vector<16x8xf32>, vector<8x8xf32>, vector<16x8xf32> -> vector<16x8xf32>
    %74 = vector.extract_strided_slice %25 {offsets = [0, 24], sizes = [16, 8], strides = [1, 1]} : vector<16x32xf32> to vector<16x8xf32>
    %75 = vector.extract_strided_slice %28 {offsets = [0, 24], sizes = [8, 8], strides = [1, 1]} : vector<8x32xf32> to vector<8x8xf32>
    %76 = vector.extract_strided_slice %31 {offsets = [0, 24], sizes = [8, 8], strides = [1, 1]} : vector<8x32xf32> to vector<8x8xf32>
    %cst_38 = arith.constant dense<0.000000e+00> : vector<16x8xf32>
    %77 = tpu.matmul %74, %75, %cst_38 {dimension_numbers = #tpu.dot_dimension_numbers<[1], [1], [0], [0], [0, 0, 1, 0], [], []>} : vector<16x8xf32>, vector<8x8xf32>, vector<16x8xf32> -> vector<16x8xf32>
    %cst_39 = arith.constant dense<0xFF800000> : vector<16xf32>
    %78 = vector.multi_reduction <maximumf>, %77, %cst_39 [1] : vector<16x8xf32> to vector<16xf32>
    %79 = vector.shape_cast %78 : vector<16xf32> to vector<16x1xf32>
    %80 = vector.broadcast %79 : vector<16x1xf32> to vector<16x8xf32>
    %81 = arith.subf %77, %80 : vector<16x8xf32>
    %82 = math.exp %81 : vector<16x8xf32>
    %cst_40 = arith.constant dense<0.000000e+00> : vector<16xf32>
    %83 = vector.multi_reduction <add>, %82, %cst_40 [1] : vector<16x8xf32> to vector<16xf32>
    %84 = vector.shape_cast %83 : vector<16xf32> to vector<16x1xf32>
    %85 = vector.broadcast %84 : vector<16x1xf32> to vector<16x8xf32>
    %86 = arith.divf %82, %85 : vector<16x8xf32>
    %cst_41 = arith.constant dense<0.000000e+00> : vector<16x8xf32>
    %87 = tpu.matmul %86, %76, %cst_41 {dimension_numbers = #tpu.dot_dimension_numbers<[1], [0], [0], [1], [0, 0, 1, 1], [], []>} : vector<16x8xf32>, vector<8x8xf32>, vector<16x8xf32> -> vector<16x8xf32>
    %88 = tpu.concatenate %45, %59, %73, %87 in 1 : vector<16x8xf32>, vector<16x8xf32>, vector<16x8xf32>, vector<16x8xf32> -> vector<16x32xf32>
    %cst_42 = arith.constant dense<0.000000e+00> : vector<16x32xf32>
    %89 = tpu.matmul %88, %3, %cst_42 {dimension_numbers = #tpu.dot_dimension_numbers<[1], [0], [0], [1], [0, 0, 1, 1], [], []>} : vector<16x32xf32>, vector<32x32xf32>, vector<16x32xf32> -> vector<16x32xf32>
    %90 = vector.broadcast %7 : vector<1x32xf32> to vector<16x32xf32>
    %91 = arith.addf %89, %90 : vector<16x32xf32>
    %c0_43 = arith.constant 0 : index
    %c0_44 = arith.constant 0 : index
    %c0_45 = arith.constant 0 : index
    %92 = vector.load %arg12[%c0_43, %c0_44, %c0_45] : memref<2x16x32xf32, #tpu.memory_space<vmem>>, vector<1x16x32xf32>
    %93 = vector.shape_cast %92 : vector<1x16x32xf32> to vector<16x32xf32>
    %94 = vector.shape_cast %91 : vector<16x32xf32> to vector<1x16x32xf32>
    tpu.vector_store %arg12[%c0_43, %c0_44, %c0_45], %94 {strides = array<i32>} : memref<2x16x32xf32, #tpu.memory_space<vmem>>, vector<1x16x32xf32>,
    %95 = vector.extract_strided_slice %15 {offsets = [1, 0, 0], sizes = [1, 16, 32], strides = [1, 1, 1]} : vector<2x16x32xf32> to vector<1x16x32xf32>
    %96 = vector.shape_cast %95 : vector<1x16x32xf32> to vector<16x32xf32>
    %97 = vector.extract_strided_slice %19 {offsets = [1, 0, 0], sizes = [1, 16, 32], strides = [1, 1, 1]} : vector<2x16x32xf32> to vector<1x16x32xf32>
    %98 = vector.shape_cast %97 : vector<1x16x32xf32> to vector<16x32xf32>
    %cst_46 = arith.constant dense<0.000000e+00> : vector<8x32xf32>
    %99 = tpu.matmul %8, %98, %cst_46 {dimension_numbers = #tpu.dot_dimension_numbers<[1], [0], [0], [1], [0, 0, 1, 1], [], []>} : vector<8x16xf32>, vector<16x32xf32>, vector<8x32xf32> -> vector<8x32xf32>
    %100 = vector.extract_strided_slice %23 {offsets = [1, 0, 0], sizes = [1, 16, 32], strides = [1, 1, 1]} : vector<2x16x32xf32> to vector<1x16x32xf32>
    %101 = vector.shape_cast %100 : vector<1x16x32xf32> to vector<16x32xf32>
    %cst_47 = arith.constant dense<0.000000e+00> : vector<8x32xf32>
    %102 = tpu.matmul %9, %101, %cst_47 {dimension_numbers = #tpu.dot_dimension_numbers<[1], [0], [0], [1], [0, 0, 1, 1], [], []>} : vector<8x16xf32>, vector<16x32xf32>, vector<8x32xf32> -> vector<8x32xf32>
    %103 = vector.extract_strided_slice %96 {offsets = [0, 0], sizes = [16, 8], strides = [1, 1]} : vector<16x32xf32> to vector<16x8xf32>
    %104 = vector.extract_strided_slice %99 {offsets = [0, 0], sizes = [8, 8], strides = [1, 1]} : vector<8x32xf32> to vector<8x8xf32>
    %105 = vector.extract_strided_slice %102 {offsets = [0, 0], sizes = [8, 8], strides = [1, 1]} : vector<8x32xf32> to vector<8x8xf32>
    %cst_48 = arith.constant dense<0.000000e+00> : vector<16x8xf32>
    %106 = tpu.matmul %103, %104, %cst_48 {dimension_numbers = #tpu.dot_dimension_numbers<[1], [1], [0], [0], [0, 0, 1, 0], [], []>} : vector<16x8xf32>, vector<8x8xf32>, vector<16x8xf32> -> vector<16x8xf32>
    %cst_49 = arith.constant dense<0xFF800000> : vector<16xf32>
    %107 = vector.multi_reduction <maximumf>, %106, %cst_49 [1] : vector<16x8xf32> to vector<16xf32>
    %108 = vector.shape_cast %107 : vector<16xf32> to vector<16x1xf32>
    %109 = vector.broadcast %108 : vector<16x1xf32> to vector<16x8xf32>
    %110 = arith.subf %106, %109 : vector<16x8xf32>
    %111 = math.exp %110 : vector<16x8xf32>
    %cst_50 = arith.constant dense<0.000000e+00> : vector<16xf32>
    %112 = vector.multi_reduction <add>, %111, %cst_50 [1] : vector<16x8xf32> to vector<16xf32>
    %113 = vector.shape_cast %112 : vector<16xf32> to vector<16x1xf32>
    %114 = vector.broadcast %113 : vector<16x1xf32> to vector<16x8xf32>
    %115 = arith.divf %111, %114 : vector<16x8xf32>
    %cst_51 = arith.constant dense<0.000000e+00> : vector<16x8xf32>
    %116 = tpu.matmul %115, %105, %cst_51 {dimension_numbers = #tpu.dot_dimension_numbers<[1], [0], [0], [1], [0, 0, 1, 1], [], []>} : vector<16x8xf32>, vector<8x8xf32>, vector<16x8xf32> -> vector<16x8xf32>
    %117 = vector.extract_strided_slice %96 {offsets = [0, 8], sizes = [16, 8], strides = [1, 1]} : vector<16x32xf32> to vector<16x8xf32>
    %118 = vector.extract_strided_slice %99 {offsets = [0, 8], sizes = [8, 8], strides = [1, 1]} : vector<8x32xf32> to vector<8x8xf32>
    %119 = vector.extract_strided_slice %102 {offsets = [0, 8], sizes = [8, 8], strides = [1, 1]} : vector<8x32xf32> to vector<8x8xf32>
    %cst_52 = arith.constant dense<0.000000e+00> : vector<16x8xf32>
    %120 = tpu.matmul %117, %118, %cst_52 {dimension_numbers = #tpu.dot_dimension_numbers<[1], [1], [0], [0], [0, 0, 1, 0], [], []>} : vector<16x8xf32>, vector<8x8xf32>, vector<16x8xf32> -> vector<16x8xf32>
    %cst_53 = arith.constant dense<0xFF800000> : vector<16xf32>
    %121 = vector.multi_reduction <maximumf>, %120, %cst_53 [1] : vector<16x8xf32> to vector<16xf32>
    %122 = vector.shape_cast %121 : vector<16xf32> to vector<16x1xf32>
    %123 = vector.broadcast %122 : vector<16x1xf32> to vector<16x8xf32>
    %124 = arith.subf %120, %123 : vector<16x8xf32>
    %125 = math.exp %124 : vector<16x8xf32>
    %cst_54 = arith.constant dense<0.000000e+00> : vector<16xf32>
    %126 = vector.multi_reduction <add>, %125, %cst_54 [1] : vector<16x8xf32> to vector<16xf32>
    %127 = vector.shape_cast %126 : vector<16xf32> to vector<16x1xf32>
    %128 = vector.broadcast %127 : vector<16x1xf32> to vector<16x8xf32>
    %129 = arith.divf %125, %128 : vector<16x8xf32>
    %cst_55 = arith.constant dense<0.000000e+00> : vector<16x8xf32>
    %130 = tpu.matmul %129, %119, %cst_55 {dimension_numbers = #tpu.dot_dimension_numbers<[1], [0], [0], [1], [0, 0, 1, 1], [], []>} : vector<16x8xf32>, vector<8x8xf32>, vector<16x8xf32> -> vector<16x8xf32>
    %131 = vector.extract_strided_slice %96 {offsets = [0, 16], sizes = [16, 8], strides = [1, 1]} : vector<16x32xf32> to vector<16x8xf32>
    %132 = vector.extract_strided_slice %99 {offsets = [0, 16], sizes = [8, 8], strides = [1, 1]} : vector<8x32xf32> to vector<8x8xf32>
    %133 = vector.extract_strided_slice %102 {offsets = [0, 16], sizes = [8, 8], strides = [1, 1]} : vector<8x32xf32> to vector<8x8xf32>
    %cst_56 = arith.constant dense<0.000000e+00> : vector<16x8xf32>
    %134 = tpu.matmul %131, %132, %cst_56 {dimension_numbers = #tpu.dot_dimension_numbers<[1], [1], [0], [0], [0, 0, 1, 0], [], []>} : vector<16x8xf32>, vector<8x8xf32>, vector<16x8xf32> -> vector<16x8xf32>
    %cst_57 = arith.constant dense<0xFF800000> : vector<16xf32>
    %135 = vector.multi_reduction <maximumf>, %134, %cst_57 [1] : vector<16x8xf32> to vector<16xf32>
    %136 = vector.shape_cast %135 : vector<16xf32> to vector<16x1xf32>
    %137 = vector.broadcast %136 : vector<16x1xf32> to vector<16x8xf32>
    %138 = arith.subf %134, %137 : vector<16x8xf32>
    %139 = math.exp %138 : vector<16x8xf32>
    %cst_58 = arith.constant dense<0.000000e+00> : vector<16xf32>
    %140 = vector.multi_reduction <add>, %139, %cst_58 [1] : vector<16x8xf32> to vector<16xf32>
    %141 = vector.shape_cast %140 : vector<16xf32> to vector<16x1xf32>
    %142 = vector.broadcast %141 : vector<16x1xf32> to vector<16x8xf32>
    %143 = arith.divf %139, %142 : vector<16x8xf32>
    %cst_59 = arith.constant dense<0.000000e+00> : vector<16x8xf32>
    %144 = tpu.matmul %143, %133, %cst_59 {dimension_numbers = #tpu.dot_dimension_numbers<[1], [0], [0], [1], [0, 0, 1, 1], [], []>} : vector<16x8xf32>, vector<8x8xf32>, vector<16x8xf32> -> vector<16x8xf32>
    %145 = vector.extract_strided_slice %96 {offsets = [0, 24], sizes = [16, 8], strides = [1, 1]} : vector<16x32xf32> to vector<16x8xf32>
    %146 = vector.extract_strided_slice %99 {offsets = [0, 24], sizes = [8, 8], strides = [1, 1]} : vector<8x32xf32> to vector<8x8xf32>
    %147 = vector.extract_strided_slice %102 {offsets = [0, 24], sizes = [8, 8], strides = [1, 1]} : vector<8x32xf32> to vector<8x8xf32>
    %cst_60 = arith.constant dense<0.000000e+00> : vector<16x8xf32>
    %148 = tpu.matmul %145, %146, %cst_60 {dimension_numbers = #tpu.dot_dimension_numbers<[1], [1], [0], [0], [0, 0, 1, 0], [], []>} : vector<16x8xf32>, vector<8x8xf32>, vector<16x8xf32> -> vector<16x8xf32>
    %cst_61 = arith.constant dense<0xFF800000> : vector<16xf32>
    %149 = vector.multi_reduction <maximumf>, %148, %cst_61 [1] : vector<16x8xf32> to vector<16xf32>
    %150 = vector.shape_cast %149 : vector<16xf32> to vector<16x1xf32>
    %151 = vector.broadcast %150 : vector<16x1xf32> to vector<16x8xf32>
    %152 = arith.subf %148, %151 : vector<16x8xf32>
    %153 = math.exp %152 : vector<16x8xf32>
    %cst_62 = arith.constant dense<0.000000e+00> : vector<16xf32>
    %154 = vector.multi_reduction <add>, %153, %cst_62 [1] : vector<16x8xf32> to vector<16xf32>
    %155 = vector.shape_cast %154 : vector<16xf32> to vector<16x1xf32>
    %156 = vector.broadcast %155 : vector<16x1xf32> to vector<16x8xf32>
    %157 = arith.divf %153, %156 : vector<16x8xf32>
    %cst_63 = arith.constant dense<0.000000e+00> : vector<16x8xf32>
    %158 = tpu.matmul %157, %147, %cst_63 {dimension_numbers = #tpu.dot_dimension_numbers<[1], [0], [0], [1], [0, 0, 1, 1], [], []>} : vector<16x8xf32>, vector<8x8xf32>, vector<16x8xf32> -> vector<16x8xf32>
    %159 = tpu.concatenate %116, %130, %144, %158 in 1 : vector<16x8xf32>, vector<16x8xf32>, vector<16x8xf32>, vector<16x8xf32> -> vector<16x32xf32>
    %cst_64 = arith.constant dense<0.000000e+00> : vector<16x32xf32>
    %160 = tpu.matmul %159, %3, %cst_64 {dimension_numbers = #tpu.dot_dimension_numbers<[1], [0], [0], [1], [0, 0, 1, 1], [], []>} : vector<16x32xf32>, vector<32x32xf32>, vector<16x32xf32> -> vector<16x32xf32>
    %161 = vector.broadcast %7 : vector<1x32xf32> to vector<16x32xf32>
    %162 = arith.addf %160, %161 : vector<16x32xf32>
    %c1 = arith.constant 1 : index
    %c0_65 = arith.constant 0 : index
    %c0_66 = arith.constant 0 : index
    %163 = vector.load %arg12[%c1, %c0_65, %c0_66] : memref<2x16x32xf32, #tpu.memory_space<vmem>>, vector<1x16x32xf32>
    %164 = vector.shape_cast %163 : vector<1x16x32xf32> to vector<16x32xf32>
    %165 = vector.shape_cast %162 : vector<16x32xf32> to vector<1x16x32xf32>
    tpu.vector_store %arg12[%c1, %c0_65, %c0_66], %165 {strides = array<i32>} : memref<2x16x32xf32, #tpu.memory_space<vmem>>, vector<1x16x32xf32>,
    return
  }
  func.func @transform_0(%arg0: i32) -> (i32, i32, i32) {
    %c0_i32 = arith.constant 0 : i32
    %c0_i32_0 = arith.constant 0 : i32
    %c0_i32_1 = arith.constant 0 : i32
    return %arg0, %c0_i32, %c0_i32_0 : i32, i32, i32
  }
  func.func @transform_1(%arg0: i32) -> (i32, i32) {
    %c0_i32 = arith.constant 0 : i32
    %c0_i32_0 = arith.constant 0 : i32
    %c0_i32_1 = arith.constant 0 : i32
    return %c0_i32, %c0_i32_0 : i32, i32
  }
  func.func @transform_2(%arg0: i32) -> (i32, i32) {
    %c0_i32 = arith.constant 0 : i32
    %c0_i32_0 = arith.constant 0 : i32
    %c0_i32_1 = arith.constant 0 : i32
    return %c0_i32, %c0_i32_0 : i32, i32
  }
  func.func @transform_3(%arg0: i32) -> (i32, i32) {
    %c0_i32 = arith.constant 0 : i32
    %c0_i32_0 = arith.constant 0 : i32
    %c0_i32_1 = arith.constant 0 : i32
    return %c0_i32, %c0_i32_0 : i32, i32
  }
  func.func @transform_4(%arg0: i32) -> (i32, i32) {
    %c0_i32 = arith.constant 0 : i32
    %c0_i32_0 = arith.constant 0 : i32
    %c0_i32_1 = arith.constant 0 : i32
    return %c0_i32, %c0_i32_0 : i32, i32
  }
  func.func @transform_5(%arg0: i32) -> (i32, i32) {
    %c0_i32 = arith.constant 0 : i32
    %c0_i32_0 = arith.constant 0 : i32
    %c0_i32_1 = arith.constant 0 : i32
    return %c0_i32, %c0_i32_0 : i32, i32
  }
  func.func @transform_6(%arg0: i32) -> (i32, i32) {
    %c0_i32 = arith.constant 0 : i32
    %c0_i32_0 = arith.constant 0 : i32
    %c0_i32_1 = arith.constant 0 : i32
    return %c0_i32, %c0_i32_0 : i32, i32
  }
  func.func @transform_7(%arg0: i32) -> (i32, i32) {
    %c0_i32 = arith.constant 0 : i32
    %c0_i32_0 = arith.constant 0 : i32
    %c0_i32_1 = arith.constant 0 : i32
    return %c0_i32, %c0_i32_0 : i32, i32
  }
  func.func @transform_8(%arg0: i32) -> (i32, i32) {
    %c0_i32 = arith.constant 0 : i32
    %c0_i32_0 = arith.constant 0 : i32
    %c0_i32_1 = arith.constant 0 : i32
    return %c0_i32, %c0_i32_0 : i32, i32
  }
  func.func @transform_9(%arg0: i32) -> (i32, i32) {
    %c0_i32 = arith.constant 0 : i32
    %c0_i32_0 = arith.constant 0 : i32
    %c0_i32_1 = arith.constant 0 : i32
    return %c0_i32, %c0_i32_0 : i32, i32
  }
  func.func @transform_10(%arg0: i32) -> (i32, i32) {
    %c0_i32 = arith.constant 0 : i32
    %c0_i32_0 = arith.constant 0 : i32
    %c0_i32_1 = arith.constant 0 : i32
    return %c0_i32, %c0_i32_0 : i32, i32
  }
  func.func @transform_11(%arg0: i32) -> (i32, i32, i32) {
    %c0_i32 = arith.constant 0 : i32
    %c0_i32_0 = arith.constant 0 : i32
    %c0_i32_1 = arith.constant 0 : i32
    return %arg0, %c0_i32, %c0_i32_0 : i32, i32, i32
  }
}

</mosaic_0001>

<llo_original>
// kernel: tpu_custom_call.1
$region0: #{tpu_custom_call.1}
  #allocation0 [shape = 'u32[]', space=smem, size = 0x4, offset = 0x4, fixed_abs, tag = 'smem constant byte address 0x4 - core index']
  #allocation1 [shape = 'u32[144,128]{1,0:T(1,128)}', space=vmem, size = 0x12000, scoped, tag = 'internal scratch']
  %s0 = inlined_call_operand.hbm [shape: f32[2,16,32], index: 0, kind: input, shape index: {}]
  %s1 = inlined_call_operand.hbm [shape: f32[32,32], index: 1, kind: input, shape index: {}]
  %s2 = inlined_call_operand.vmem [shape: f32[1,32], index: 2, kind: input, shape index: {}]
  %s3 = inlined_call_operand.hbm [shape: f32[32,32], index: 3, kind: input, shape index: {}]
  %s4 = inlined_call_operand.vmem [shape: f32[1,32], index: 4, kind: input, shape index: {}]
  %s5 = inlined_call_operand.hbm [shape: f32[32,32], index: 5, kind: input, shape index: {}]
  %s6 = inlined_call_operand.hbm [shape: f32[1,32], index: 6, kind: input, shape index: {}]
  %s7 = inlined_call_operand.hbm [shape: f32[8,16], index: 7, kind: input, shape index: {}]
  %s8 = inlined_call_operand.hbm [shape: f32[8,16], index: 8, kind: input, shape index: {}]
  %s9 = inlined_call_operand.vmem [shape: f32[32,32], index: 9, kind: input, shape index: {}]
  %s10 = inlined_call_operand.vmem [shape: f32[1,32], index: 10, kind: input, shape index: {}]
  %s11 = inlined_call_operand.hbm [shape: f32[2,16,32], index: 11, kind: output, shape index: {}]
  %s12 = sld [smem:[#allocation0]]
  $region82: #{tpu_custom_call.1} parent=0
    _
  %s14 = ssub.s32 1, %s12
  %s15 = scalar_select 0, %s14, %s12
  $region1: #{tpu_custom_call.1} parent=0
    #allocation2 [shape = 'u8[16384]{0}', space=vmem, size = 0x4000, scoped, tag = 'input window, operand 0, single buffered']
    #allocation3 [shape = 's32[1]{0}', space=sflag, size = 0x4, scoped, tag = 'scoped memory for tpu_custom_call.1']
    #allocation4 [shape = 's32[1]{0}', space=sflag, size = 0x4, scoped, tag = 'scoped memory for tpu_custom_call.1']
    #allocation5 [shape = 'u8[16384]{0}', space=vmem, size = 0x4000, scoped, tag = 'input window, operand 1, single buffered']
    #allocation6 [shape = 's32[1]{0}', space=sflag, size = 0x4, scoped, tag = 'scoped memory for tpu_custom_call.1']
    #allocation7 [shape = 'u8[16384]{0}', space=vmem, size = 0x4000, scoped, tag = 'input window, operand 3, single buffered']
    #allocation8 [shape = 'u8[16384]{0}', space=vmem, size = 0x4000, scoped, tag = 'input window, operand 5, single buffered']
    #allocation9 [shape = 's32[1]{0}', space=sflag, size = 0x4, scoped, tag = 'scoped memory for tpu_custom_call.1']
    #allocation10 [shape = 'u8[512]{0}', space=vmem, size = 0x400, scoped, tag = 'input window, operand 6, single buffered']
    #allocation11 [shape = 'u8[4096]{0}', space=vmem, size = 0x1000, scoped, tag = 'input window, operand 7, single buffered']
    #allocation12 [shape = 's32[1]{0}', space=sflag, size = 0x4, scoped, tag = 'scoped memory for tpu_custom_call.1']
    #allocation13 [shape = 'u8[4096]{0}', space=vmem, size = 0x1000, scoped, tag = 'input window, operand 8, single buffered']
    #allocation14 [shape = 'u8[16384]{0}', space=vmem, size = 0x4000, scoped, tag = 'output window, operand 0, single buffered']
    %16 = vsyncpa [#allocation3], 0
    %17 = vsyncpa [#allocation6], 0
    %18 = vsyncpa [#allocation9], 0
    %19 = vsyncpa [#allocation12], 0
    %20 = vsyncpa [#allocation4], 0
    // Predicated region
    $region2: #{tpu_custom_call.1} parent=1 // pred_check
      _
    $region3: #{tpu_custom_call.1} parent=1 // pred_check_branch
      %22 = sbr.rel (0) target = $region5
    $region4: #{tpu_custom_call.1} parent=1 // pred_region
      %s24 = ssub.s32 512, 512
      %25 = vsyncadd [#allocation3], %s24
      %s26 = sshll.u32 [#allocation2], 4
      %s27 = int_to_ptr.vmem [resolvable:$true] %s26
      %32 = dma.hbm_to_vmem [thread:$0]  %s0, 512, %s27, [#allocation3], 128, 128, 8
    $region5: #{tpu_custom_call.1} parent=1 // pred_fallthru
      _
    // Predicated region
    $region6: #{tpu_custom_call.1} parent=1 // pred_check
      _
    $region7: #{tpu_custom_call.1} parent=1 // pred_check_branch
      %34 = sbr.rel (0) target = $region9
    $region8: #{tpu_custom_call.1} parent=1 // pred_region
      %s36 = ssub.s32 512, 512
      %37 = vsyncadd [#allocation6], %s36
      %s38 = sshll.u32 [#allocation5], 4
      %s39 = int_to_ptr.vmem [resolvable:$true] %s38
      %44 = dma.hbm_to_vmem [thread:$0]  %s1, 512, %s39, [#allocation6], 128, 128, 8
    $region9: #{tpu_custom_call.1} parent=1 // pred_fallthru
      _
    // Predicated region
    $region10: #{tpu_custom_call.1} parent=1 // pred_check
      _
    $region11: #{tpu_custom_call.1} parent=1 // pred_check_branch
      %46 = sbr.rel (0) target = $region13
    $region12: #{tpu_custom_call.1} parent=1 // pred_region
      _
    $region13: #{tpu_custom_call.1} parent=1 // pred_fallthru
      _
    // Predicated region
    $region14: #{tpu_custom_call.1} parent=1 // pred_check
      _
    $region15: #{tpu_custom_call.1} parent=1 // pred_check_branch
      %48 = sbr.rel (0) target = $region17
    $region16: #{tpu_custom_call.1} parent=1 // pred_region
      %s50 = ssub.s32 512, 512
      %51 = vsyncadd [#allocation6], %s50
      %s52 = sshll.u32 [#allocation7], 4
      %s53 = int_to_ptr.vmem [resolvable:$true] %s52
      %58 = dma.hbm_to_vmem [thread:$0]  %s3, 512, %s53, [#allocation6], 128, 128, 8
    $region17: #{tpu_custom_call.1} parent=1 // pred_fallthru
      _
    // Predicated region
    $region18: #{tpu_custom_call.1} parent=1 // pred_check
      _
    $region19: #{tpu_custom_call.1} parent=1 // pred_check_branch
      %60 = sbr.rel (0) target = $region21
    $region20: #{tpu_custom_call.1} parent=1 // pred_region
      _
    $region21: #{tpu_custom_call.1} parent=1 // pred_fallthru
      _
    // Predicated region
    $region22: #{tpu_custom_call.1} parent=1 // pred_check
      _
    $region23: #{tpu_custom_call.1} parent=1 // pred_check_branch
      %62 = sbr.rel (0) target = $region25
    $region24: #{tpu_custom_call.1} parent=1 // pred_region
      %s64 = ssub.s32 512, 512
      %65 = vsyncadd [#allocation9], %s64
      %s66 = sshll.u32 [#allocation8], 4
      %s67 = int_to_ptr.vmem [resolvable:$true] %s66
      %72 = dma.hbm_to_vmem [thread:$0]  %s5, 512, %s67, [#allocation9], 128, 128, 8
    $region25: #{tpu_custom_call.1} parent=1 // pred_fallthru
      _
    // Predicated region
    $region26: #{tpu_custom_call.1} parent=1 // pred_check
      _
    $region27: #{tpu_custom_call.1} parent=1 // pred_check_branch
      %74 = sbr.rel (0) target = $region29
    $region28: #{tpu_custom_call.1} parent=1 // pred_region
      %s76 = ssub.s32 16, 16
      %77 = vsyncadd [#allocation9], %s76
      %s79 = sshll.u32 [#allocation10], 4
      %s80 = int_to_ptr.vmem [resolvable:$true] %s79
      %82 = dma.hbm_to_vmem [thread:$0]  %s6, 16, %s80, [#allocation9]
    $region29: #{tpu_custom_call.1} parent=1 // pred_fallthru
      _
    // Predicated region
    $region30: #{tpu_custom_call.1} parent=1 // pred_check
      _
    $region31: #{tpu_custom_call.1} parent=1 // pred_check_branch
      %84 = sbr.rel (0) target = $region33
    $region32: #{tpu_custom_call.1} parent=1 // pred_region
      %s86 = ssub.s32 128, 128
      %87 = vsyncadd [#allocation12], %s86
      %s89 = sshll.u32 [#allocation11], 4
      %s90 = int_to_ptr.vmem [resolvable:$true] %s89
      %92 = dma.hbm_to_vmem [thread:$0]  %s7, 128, %s90, [#allocation12]
    $region33: #{tpu_custom_call.1} parent=1 // pred_fallthru
      _
    // Predicated region
    $region34: #{tpu_custom_call.1} parent=1 // pred_check
      _
    $region35: #{tpu_custom_call.1} parent=1 // pred_check_branch
      %94 = sbr.rel (0) target = $region37
    $region36: #{tpu_custom_call.1} parent=1 // pred_region
      %s96 = ssub.s32 128, 128
      %97 = vsyncadd [#allocation12], %s96
      %s99 = sshll.u32 [#allocation13], 4
      %s100 = int_to_ptr.vmem [resolvable:$true] %s99
      %102 = dma.hbm_to_vmem [thread:$0]  %s8, 128, %s100, [#allocation12]
    $region37: #{tpu_custom_call.1} parent=1 // pred_fallthru
      _
    // Predicated region
    $region38: #{tpu_custom_call.1} parent=1 // pred_check
      _
    $region39: #{tpu_custom_call.1} parent=1 // pred_check_branch
      %104 = sbr.rel (0) target = $region41
    $region40: #{tpu_custom_call.1} parent=1 // pred_region
      _
    $region41: #{tpu_custom_call.1} parent=1 // pred_fallthru
      _
    // Predicated region
    $region42: #{tpu_custom_call.1} parent=1 // pred_check
      _
    $region43: #{tpu_custom_call.1} parent=1 // pred_check_branch
      %106 = sbr.rel (0) target = $region45
    $region44: #{tpu_custom_call.1} parent=1 // pred_region
      _
    $region45: #{tpu_custom_call.1} parent=1 // pred_fallthru
      _
    // Predicated region
    $region46: #{tpu_custom_call.1} parent=1 // pred_check
      _
    $region47: #{tpu_custom_call.1} parent=1 // pred_check_branch
      %108 = sbr.rel (0) target = $region49
    $region48: #{tpu_custom_call.1} parent=1 // pred_region
      %109 = dma.done [#allocation3], 512
    $region49: #{tpu_custom_call.1} parent=1 // pred_fallthru
      _
    // Predicated region
    $region50: #{tpu_custom_call.1} parent=1 // pred_check
      _
    $region51: #{tpu_custom_call.1} parent=1 // pred_check_branch
      %111 = sbr.rel (0) target = $region53
    $region52: #{tpu_custom_call.1} parent=1 // pred_region
      %112 = dma.done [#allocation6], 512
    $region53: #{tpu_custom_call.1} parent=1 // pred_fallthru
      _
    // Predicated region
    $region54: #{tpu_custom_call.1} parent=1 // pred_check
      _
    $region55: #{tpu_custom_call.1} parent=1 // pred_check_branch
      %114 = sbr.rel (0) target = $region57
    $region56: #{tpu_custom_call.1} parent=1 // pred_region
      %115 = dma.done [#allocation6], 512
    $region57: #{tpu_custom_call.1} parent=1 // pred_fallthru
      _
    // Predicated region
    $region58: #{tpu_custom_call.1} parent=1 // pred_check
      _
    $region59: #{tpu_custom_call.1} parent=1 // pred_check_branch
      %117 = sbr.rel (0) target = $region61
    $region60: #{tpu_custom_call.1} parent=1 // pred_region
      %118 = dma.done [#allocation9], 512
    $region61: #{tpu_custom_call.1} parent=1 // pred_fallthru
      _
    // Predicated region
    $region62: #{tpu_custom_call.1} parent=1 // pred_check
      _
    $region63: #{tpu_custom_call.1} parent=1 // pred_check_branch
      %120 = sbr.rel (0) target = $region65
    $region64: #{tpu_custom_call.1} parent=1 // pred_region
      %121 = dma.done [#allocation9], 16
    $region65: #{tpu_custom_call.1} parent=1 // pred_fallthru
      _
    // Predicated region
    $region66: #{tpu_custom_call.1} parent=1 // pred_check
      _
    $region67: #{tpu_custom_call.1} parent=1 // pred_check_branch
      %123 = sbr.rel (0) target = $region69
    $region68: #{tpu_custom_call.1} parent=1 // pred_region
      %124 = dma.done [#allocation12], 128
    $region69: #{tpu_custom_call.1} parent=1 // pred_fallthru
      _
    // Predicated region
    $region70: #{tpu_custom_call.1} parent=1 // pred_check
      _
    $region71: #{tpu_custom_call.1} parent=1 // pred_check_branch
      %126 = sbr.rel (0) target = $region73
    $region72: #{tpu_custom_call.1} parent=1 // pred_region
      %127 = dma.done [#allocation12], 128
    $region73: #{tpu_custom_call.1} parent=1 // pred_fallthru
      _
    %v128 = vld [vmem:[#allocation5] sm:$0xff]
    %v129 = vld [vmem:[#allocation5 + $0x8] sm:$0xff]
    %v130 = vld [vmem:[#allocation5 + $0x10] sm:$0xff]
    %v131 = vld [vmem:[#allocation5 + $0x18] sm:$0xff]
    %v132 = vld [vmem:[#allocation7] sm:$0xff]
    %v133 = vld [vmem:[#allocation7 + $0x8] sm:$0xff]
    %v134 = vld [vmem:[#allocation7 + $0x10] sm:$0xff]
    %v135 = vld [vmem:[#allocation7 + $0x18] sm:$0xff]
    %v136 = vld [vmem:[#allocation8] sm:$0xff]
    %v137 = vld [vmem:[#allocation8 + $0x8] sm:$0xff]
    %v138 = vld [vmem:[#allocation8 + $0x10] sm:$0xff]
    %v139 = vld [vmem:[#allocation8 + $0x18] sm:$0xff]
    %v140 = vld [vmem:[%s9] sm:$0xff]
    %v141 = vld [vmem:[%s9 + $0x8] sm:$0xff]
    %v142 = vld [vmem:[%s9 + $0x10] sm:$0xff]
    %v143 = vld [vmem:[%s9 + $0x18] sm:$0xff]
    %v144 = vld [vmem:[%s2] sm:$0x1]
    %v145 = vld [vmem:[%s4] sm:$0x1]
    %v146 = vld [vmem:[#allocation10] sm:$0x1]
    %v147 = vld [vmem:[%s10] sm:$0x1]
    %v148 = vld [vmem:[#allocation11] sm:$0xff]
    %v149 = vld [vmem:[#allocation13] sm:$0xff]
    %v150 = vld [vmem:[#allocation2] sm:$0xff]
    %v151 = vld [vmem:[#allocation2 + $0x8] sm:$0xff]
    %v152 = vld [vmem:[#allocation2 + $0x10] sm:$0xff]
    %v153 = vld [vmem:[#allocation2 + $0x18] sm:$0xff]
    %v155 = vlaneseq
    %v156 = vshrl.u32 %v155, 7
    %v157 = vsub.s32 0, %v156
    %v158 = vrot.slane %v144, %v157
    %vm160 = vcmask 261120
    %v162 = vsel %vm160, %v150, 0
    %v165 = vsel %vm160, %v151, 0
    %v168 = vsel %vm160, %v152, 0
    %v171 = vsel %vm160, %v153, 0
    %173 = vmatprep.subr.mxu0 0.0
    %174 = vmatpush1.msra.mxu0 %v128
    %175 = vmatprep.subr.mxu0 0.0
    %176 = vmatpush1.msra.mxu0 %v129
    %177 = vmatprep.subr.mxu0 0.0
    %178 = vmatpush1.msra.mxu0 %v130
    %179 = vmatprep.subr.mxu0 0.0
    %180 = vmatpush1.msra.mxu0 %v131
    %181 = vmatprep.subr.mxu0 0.0
    %182 = vmatpush1.msra.mxu0 0.0
    %183 = vmatprep.subr.mxu0 0.0
    %184 = vmatpush1.msra.mxu0 0.0
    %185 = vmatprep.subr.mxu0 0.0
    %186 = vmatpush1.msra.mxu0 0.0
    %187 = vmatprep.subr.mxu0 0.0
    %188 = vmatpush1.msra.mxu0 0.0
    %189 = vmatprep.subr.mxu0 0.0
    %190 = vmatpush1.msra.mxu0 0.0
    %191 = vmatprep.subr.mxu0 0.0
    %192 = vmatpush1.msra.mxu0 0.0
    %193 = vmatprep.subr.mxu0 0.0
    %194 = vmatpush1.msra.mxu0 0.0
    %195 = vmatprep.subr.mxu0 0.0
    %196 = vmatpush1.msra.mxu0 0.0
    %197 = vmatprep.subr.mxu0 0.0
    %198 = vmatpush1.msra.mxu0 0.0
    %199 = vmatprep.subr.mxu0 0.0
    %200 = vmatpush1.msra.mxu0 0.0
    %201 = vmatprep.subr.mxu0 0.0
    %202 = vmatpush1.msra.mxu0 0.0
    %203 = vmatprep.subr.mxu0 0.0
    %204 = vmatpush1.msra.mxu0 0.0
    %205 = vmatprep.subr.mxu0 0.0
    %206 = vmatpush1.msra.mxu0 0.0
    %207 = vmatprep.subr.mxu0 0.0
    %208 = vmatpush1.msra.mxu0 0.0
    %209 = vmatprep.subr.mxu0 0.0
    %210 = vmatpush1.msra.mxu0 0.0
    %211 = vmatprep.subr.mxu0 0.0
    %212 = vmatpush1.msra.mxu0 0.0
    %213 = vmatprep.subr.mxu0 0.0
    %214 = vmatpush1.msra.mxu0 0.0
    %215 = vmatprep.subr.mxu0 0.0
    %216 = vmatpush1.msra.mxu0 0.0
    %217 = vmatprep.subr.mxu0 0.0
    %218 = vmatpush1.msra.mxu0 0.0
    %219 = vmatprep.subr.mxu0 0.0
    %220 = vmatpush1.msra.mxu0 0.0
    %221 = vmatprep.subr.mxu0 0.0
    %222 = vmatpush1.msra.mxu0 0.0
    %223 = vmatprep.subr.mxu0 0.0
    %224 = vmatpush1.msra.mxu0 0.0
    %225 = vmatprep.subr.mxu0 0.0
    %226 = vmatpush1.msra.mxu0 0.0
    %227 = vmatprep.subr.mxu0 0.0
    %228 = vmatpush1.msra.mxu0 0.0
    %229 = vmatprep.subr.mxu0 0.0
    %230 = vmatpush1.msra.mxu0 0.0
    %231 = vmatprep.subr.mxu0 0.0
    %232 = vmatpush1.msra.mxu0 0.0
    %233 = vmatprep.subr.mxu0 0.0
    %234 = vmatpush1.msra.mxu0 0.0
    %235 = vmatprep.subr.mxu0 0.0
    %236 = vmatpush1.msra.mxu0 0.0
    %237 = vmatprep.mubr.f32.mxu0 0.0
    %238 = vmatmul.mubr.f32.gmra.mrb[0].mxu0 %v162
    %v239 = vpop.f32.mrb[0].mxu0
    %v240 = vadd.f32 %v158, %v239
    %v241 = vpop.f32.mrb[0].mxu0
    %242 = vmatprep.mubr.f32.mxu0 0.0
    %243 = vmatmul.mubr.f32.gmra.mrb[0].mxu0 %v165
    %v244 = vpop.f32.mrb[0].mxu0
    %v245 = vadd.f32 %v158, %v244
    %v246 = vpop.f32.mrb[0].mxu0
    %247 = vmatprep.mubr.f32.mxu0 0.0
    %248 = vmatmul.mubr.f32.gmra.mrb[0].mxu0 %v168
    %v249 = vpop.f32.mrb[0].mxu0
    %v250 = vadd.f32 %v158, %v249
    %v251 = vpop.f32.mrb[0].mxu0
    %252 = vmatprep.mubr.f32.mxu0 0.0
    %253 = vmatmul.mubr.f32.gmra.mrb[0].mxu0 %v171
    %v254 = vpop.f32.mrb[0].mxu0
    %v255 = vadd.f32 %v158, %v254
    %v256 = vpop.f32.mrb[0].mxu0
    %257 = vdwg.mxu0
    %v259 = vlaneseq
    %v260 = vshrl.u32 %v259, 7
    %v261 = vsub.s32 0, %v260
    %v262 = vrot.slane %v145, %v261
    %264 = vmatprep.subr.mxu0 0.0
    %265 = vmatpush1.msra.mxu0 %v132
    %266 = vmatprep.subr.mxu0 0.0
    %267 = vmatpush1.msra.mxu0 %v133
    %268 = vmatprep.subr.mxu0 0.0
    %269 = vmatpush1.msra.mxu0 %v134
    %270 = vmatprep.subr.mxu0 0.0
    %271 = vmatpush1.msra.mxu0 %v135
    %272 = vmatprep.subr.mxu0 0.0
    %273 = vmatpush1.msra.mxu0 0.0
    %274 = vmatprep.subr.mxu0 0.0
    %275 = vmatpush1.msra.mxu0 0.0
    %276 = vmatprep.subr.mxu0 0.0
    %277 = vmatpush1.msra.mxu0 0.0
    %278 = vmatprep.subr.mxu0 0.0
    %279 = vmatpush1.msra.mxu0 0.0
    %280 = vmatprep.subr.mxu0 0.0
    %281 = vmatpush1.msra.mxu0 0.0
    %282 = vmatprep.subr.mxu0 0.0
    %283 = vmatpush1.msra.mxu0 0.0
    %284 = vmatprep.subr.mxu0 0.0
    %285 = vmatpush1.msra.mxu0 0.0
    %286 = vmatprep.subr.mxu0 0.0
    %287 = vmatpush1.msra.mxu0 0.0
    %288 = vmatprep.subr.mxu0 0.0
    %289 = vmatpush1.msra.mxu0 0.0
    %290 = vmatprep.subr.mxu0 0.0
    %291 = vmatpush1.msra.mxu0 0.0
    %292 = vmatprep.subr.mxu0 0.0
    %293 = vmatpush1.msra.mxu0 0.0
    %294 = vmatprep.subr.mxu0 0.0
    %295 = vmatpush1.msra.mxu0 0.0
    %296 = vmatprep.subr.mxu0 0.0
    %297 = vmatpush1.msra.mxu0 0.0
    %298 = vmatprep.subr.mxu0 0.0
    %299 = vmatpush1.msra.mxu0 0.0
    %300 = vmatprep.subr.mxu0 0.0
    %301 = vmatpush1.msra.mxu0 0.0
    %302 = vmatprep.subr.mxu0 0.0
    %303 = vmatpush1.msra.mxu0 0.0
    %304 = vmatprep.subr.mxu0 0.0
    %305 = vmatpush1.msra.mxu0 0.0
    %306 = vmatprep.subr.mxu0 0.0
    %307 = vmatpush1.msra.mxu0 0.0
    %308 = vmatprep.subr.mxu0 0.0
    %309 = vmatpush1.msra.mxu0 0.0
    %310 = vmatprep.subr.mxu0 0.0
    %311 = vmatpush1.msra.mxu0 0.0
    %312 = vmatprep.subr.mxu0 0.0
    %313 = vmatpush1.msra.mxu0 0.0
    %314 = vmatprep.subr.mxu0 0.0
    %315 = vmatpush1.msra.mxu0 0.0
    %316 = vmatprep.subr.mxu0 0.0
    %317 = vmatpush1.msra.mxu0 0.0
    %318 = vmatprep.subr.mxu0 0.0
    %319 = vmatpush1.msra.mxu0 0.0
    %320 = vmatprep.subr.mxu0 0.0
    %321 = vmatpush1.msra.mxu0 0.0
    %322 = vmatprep.subr.mxu0 0.0
    %323 = vmatpush1.msra.mxu0 0.0
    %324 = vmatprep.subr.mxu0 0.0
    %325 = vmatpush1.msra.mxu0 0.0
    %326 = vmatprep.subr.mxu0 0.0
    %327 = vmatpush1.msra.mxu0 0.0
    %328 = vmatprep.mubr.f32.mxu0 0.0
    %329 = vmatmul.mubr.f32.gmra.mrb[0].mxu0 %v162
    %v330 = vpop.f32.mrb[0].mxu0
    %v331 = vadd.f32 %v262, %v330
    %v332 = vpop.f32.mrb[0].mxu0
    %333 = vmatprep.mubr.f32.mxu0 0.0
    %334 = vmatmul.mubr.f32.gmra.mrb[0].mxu0 %v165
    %v335 = vpop.f32.mrb[0].mxu0
    %v336 = vadd.f32 %v262, %v335
    %v337 = vpop.f32.mrb[0].mxu0
    %338 = vmatprep.mubr.f32.mxu0 0.0
    %339 = vmatmul.mubr.f32.gmra.mrb[0].mxu0 %v168
    %v340 = vpop.f32.mrb[0].mxu0
    %v341 = vadd.f32 %v262, %v340
    %v342 = vpop.f32.mrb[0].mxu0
    %343 = vmatprep.mubr.f32.mxu0 0.0
    %344 = vmatmul.mubr.f32.gmra.mrb[0].mxu0 %v171
    %v345 = vpop.f32.mrb[0].mxu0
    %v346 = vadd.f32 %v262, %v345
    %v347 = vpop.f32.mrb[0].mxu0
    %348 = vdwg.mxu0
    %v350 = vlaneseq
    %v351 = vshrl.u32 %v350, 7
    %v352 = vsub.s32 0, %v351
    %v353 = vrot.slane %v146, %v352
    %355 = vmatprep.subr.mxu0 0.0
    %356 = vmatpush1.msra.mxu0 %v136
    %357 = vmatprep.subr.mxu0 0.0
    %358 = vmatpush1.msra.mxu0 %v137
    %359 = vmatprep.subr.mxu0 0.0
    %360 = vmatpush1.msra.mxu0 %v138
    %361 = vmatprep.subr.mxu0 0.0
    %362 = vmatpush1.msra.mxu0 %v139
    %363 = vmatprep.subr.mxu0 0.0
    %364 = vmatpush1.msra.mxu0 0.0
    %365 = vmatprep.subr.mxu0 0.0
    %366 = vmatpush1.msra.mxu0 0.0
    %367 = vmatprep.subr.mxu0 0.0
    %368 = vmatpush1.msra.mxu0 0.0
    %369 = vmatprep.subr.mxu0 0.0
    %370 = vmatpush1.msra.mxu0 0.0
    %371 = vmatprep.subr.mxu0 0.0
    %372 = vmatpush1.msra.mxu0 0.0
    %373 = vmatprep.subr.mxu0 0.0
    %374 = vmatpush1.msra.mxu0 0.0
    %375 = vmatprep.subr.mxu0 0.0
    %376 = vmatpush1.msra.mxu0 0.0
    %377 = vmatprep.subr.mxu0 0.0
    %378 = vmatpush1.msra.mxu0 0.0
    %379 = vmatprep.subr.mxu0 0.0
    %380 = vmatpush1.msra.mxu0 0.0
    %381 = vmatprep.subr.mxu0 0.0
    %382 = vmatpush1.msra.mxu0 0.0
    %383 = vmatprep.subr.mxu0 0.0
    %384 = vmatpush1.msra.mxu0 0.0
    %385 = vmatprep.subr.mxu0 0.0
    %386 = vmatpush1.msra.mxu0 0.0
    %387 = vmatprep.subr.mxu0 0.0
    %388 = vmatpush1.msra.mxu0 0.0
    %389 = vmatprep.subr.mxu0 0.0
    %390 = vmatpush1.msra.mxu0 0.0
    %391 = vmatprep.subr.mxu0 0.0
    %392 = vmatpush1.msra.mxu0 0.0
    %393 = vmatprep.subr.mxu0 0.0
    %394 = vmatpush1.msra.mxu0 0.0
    %395 = vmatprep.subr.mxu0 0.0
    %396 = vmatpush1.msra.mxu0 0.0
    %397 = vmatprep.subr.mxu0 0.0
    %398 = vmatpush1.msra.mxu0 0.0
    %399 = vmatprep.subr.mxu0 0.0
    %400 = vmatpush1.msra.mxu0 0.0
    %401 = vmatprep.subr.mxu0 0.0
    %402 = vmatpush1.msra.mxu0 0.0
    %403 = vmatprep.subr.mxu0 0.0
    %404 = vmatpush1.msra.mxu0 0.0
    %405 = vmatprep.subr.mxu0 0.0
    %406 = vmatpush1.msra.mxu0 0.0
    %407 = vmatprep.subr.mxu0 0.0
    %408 = vmatpush1.msra.mxu0 0.0
    %409 = vmatprep.subr.mxu0 0.0
    %410 = vmatpush1.msra.mxu0 0.0
    %411 = vmatprep.subr.mxu0 0.0
    %412 = vmatpush1.msra.mxu0 0.0
    %413 = vmatprep.subr.mxu0 0.0
    %414 = vmatpush1.msra.mxu0 0.0
    %415 = vmatprep.subr.mxu0 0.0
    %416 = vmatpush1.msra.mxu0 0.0
    %417 = vmatprep.subr.mxu0 0.0
    %418 = vmatpush1.msra.mxu0 0.0
    %419 = vmatprep.mubr.f32.mxu0 0.0
    %420 = vmatmul.mubr.f32.gmra.mrb[0].mxu0 %v162
    %v421 = vpop.f32.mrb[0].mxu0
    %v422 = vadd.f32 %v353, %v421
    %v423 = vpop.f32.mrb[0].mxu0
    %424 = vmatprep.mubr.f32.mxu0 0.0
    %425 = vmatmul.mubr.f32.gmra.mrb[0].mxu0 %v165
    %v426 = vpop.f32.mrb[0].mxu0
    %v427 = vadd.f32 %v353, %v426
    %v428 = vpop.f32.mrb[0].mxu0
    %429 = vmatprep.mubr.f32.mxu0 0.0
    %430 = vmatmul.mubr.f32.gmra.mrb[0].mxu0 %v168
    %v431 = vpop.f32.mrb[0].mxu0
    %v432 = vadd.f32 %v353, %v431
    %v433 = vpop.f32.mrb[0].mxu0
    %434 = vmatprep.mubr.f32.mxu0 0.0
    %435 = vmatmul.mubr.f32.gmra.mrb[0].mxu0 %v171
    %v436 = vpop.f32.mrb[0].mxu0
    %v437 = vadd.f32 %v353, %v436
    %v438 = vpop.f32.mrb[0].mxu0
    %439 = vdwg.mxu0
    %vm440 = vcmask 130048
    %v442 = vsel %vm440, %v148, 0
    %444 = vmatprep.subr.mxu0 0.0
    %445 = vmatpush1.msra.mxu0 %v331
    %446 = vmatprep.subr.mxu0 0.0
    %447 = vmatpush1.msra.mxu0 %v336
    %448 = vmatprep.subr.mxu0 0.0
    %449 = vmatpush1.msra.mxu0 0.0
    %450 = vmatprep.subr.mxu0 0.0
    %451 = vmatpush1.msra.mxu0 0.0
    %452 = vmatprep.subr.mxu0 0.0
    %453 = vmatpush1.msra.mxu0 0.0
    %454 = vmatprep.subr.mxu0 0.0
    %455 = vmatpush1.msra.mxu0 0.0
    %456 = vmatprep.subr.mxu0 0.0
    %457 = vmatpush1.msra.mxu0 0.0
    %458 = vmatprep.subr.mxu0 0.0
    %459 = vmatpush1.msra.mxu0 0.0
    %460 = vmatprep.subr.mxu0 0.0
    %461 = vmatpush1.msra.mxu0 0.0
    %462 = vmatprep.subr.mxu0 0.0
    %463 = vmatpush1.msra.mxu0 0.0
    %464 = vmatprep.subr.mxu0 0.0
    %465 = vmatpush1.msra.mxu0 0.0
    %466 = vmatprep.subr.mxu0 0.0
    %467 = vmatpush1.msra.mxu0 0.0
    %468 = vmatprep.subr.mxu0 0.0
    %469 = vmatpush1.msra.mxu0 0.0
    %470 = vmatprep.subr.mxu0 0.0
    %471 = vmatpush1.msra.mxu0 0.0
    %472 = vmatprep.subr.mxu0 0.0
    %473 = vmatpush1.msra.mxu0 0.0
    %474 = vmatprep.subr.mxu0 0.0
    %475 = vmatpush1.msra.mxu0 0.0
    %476 = vmatprep.subr.mxu0 0.0
    %477 = vmatpush1.msra.mxu0 0.0
    %478 = vmatprep.subr.mxu0 0.0
    %479 = vmatpush1.msra.mxu0 0.0
    %480 = vmatprep.subr.mxu0 0.0
    %481 = vmatpush1.msra.mxu0 0.0
    %482 = vmatprep.subr.mxu0 0.0
    %483 = vmatpush1.msra.mxu0 0.0
    %484 = vmatprep.subr.mxu0 0.0
    %485 = vmatpush1.msra.mxu0 0.0
    %486 = vmatprep.subr.mxu0 0.0
    %487 = vmatpush1.msra.mxu0 0.0
    %488 = vmatprep.subr.mxu0 0.0
    %489 = vmatpush1.msra.mxu0 0.0
    %490 = vmatprep.subr.mxu0 0.0
    %491 = vmatpush1.msra.mxu0 0.0
    %492 = vmatprep.subr.mxu0 0.0
    %493 = vmatpush1.msra.mxu0 0.0
    %494 = vmatprep.subr.mxu0 0.0
    %495 = vmatpush1.msra.mxu0 0.0
    %496 = vmatprep.subr.mxu0 0.0
    %497 = vmatpush1.msra.mxu0 0.0
    %498 = vmatprep.subr.mxu0 0.0
    %499 = vmatpush1.msra.mxu0 0.0
    %500 = vmatprep.subr.mxu0 0.0
    %501 = vmatpush1.msra.mxu0 0.0
    %502 = vmatprep.subr.mxu0 0.0
    %503 = vmatpush1.msra.mxu0 0.0
    %504 = vmatprep.subr.mxu0 0.0
    %505 = vmatpush1.msra.mxu0 0.0
    %506 = vmatprep.subr.mxu0 0.0
    %507 = vmatpush1.msra.mxu0 0.0
    %508 = vmatprep.mubr.f32.mxu0 0.0
    %509 = vmatmul.mubr.f32.gmra.mrb[0].mxu0 %v442
    %v510 = vpop.f32.mrb[0].mxu0
    %v511 = vadd.f32 0.0, %v510
    %v512 = vpop.f32.mrb[0].mxu0
    %513 = vdwg.mxu0
    %v515 = vsel %vm440, %v149, 0
    %517 = vmatprep.subr.mxu0 0.0
    %518 = vmatpush1.msra.mxu0 %v422
    %519 = vmatprep.subr.mxu0 0.0
    %520 = vmatpush1.msra.mxu0 %v427
    %521 = vmatprep.subr.mxu0 0.0
    %522 = vmatpush1.msra.mxu0 0.0
    %523 = vmatprep.subr.mxu0 0.0
    %524 = vmatpush1.msra.mxu0 0.0
    %525 = vmatprep.subr.mxu0 0.0
    %526 = vmatpush1.msra.mxu0 0.0
    %527 = vmatprep.subr.mxu0 0.0
    %528 = vmatpush1.msra.mxu0 0.0
    %529 = vmatprep.subr.mxu0 0.0
    %530 = vmatpush1.msra.mxu0 0.0
    %531 = vmatprep.subr.mxu0 0.0
    %532 = vmatpush1.msra.mxu0 0.0
    %533 = vmatprep.subr.mxu0 0.0
    %534 = vmatpush1.msra.mxu0 0.0
    %535 = vmatprep.subr.mxu0 0.0
    %536 = vmatpush1.msra.mxu0 0.0
    %537 = vmatprep.subr.mxu0 0.0
    %538 = vmatpush1.msra.mxu0 0.0
    %539 = vmatprep.subr.mxu0 0.0
    %540 = vmatpush1.msra.mxu0 0.0
    %541 = vmatprep.subr.mxu0 0.0
    %542 = vmatpush1.msra.mxu0 0.0
    %543 = vmatprep.subr.mxu0 0.0
    %544 = vmatpush1.msra.mxu0 0.0
    %545 = vmatprep.subr.mxu0 0.0
    %546 = vmatpush1.msra.mxu0 0.0
    %547 = vmatprep.subr.mxu0 0.0
    %548 = vmatpush1.msra.mxu0 0.0
    %549 = vmatprep.subr.mxu0 0.0
    %550 = vmatpush1.msra.mxu0 0.0
    %551 = vmatprep.subr.mxu0 0.0
    %552 = vmatpush1.msra.mxu0 0.0
    %553 = vmatprep.subr.mxu0 0.0
    %554 = vmatpush1.msra.mxu0 0.0
    %555 = vmatprep.subr.mxu0 0.0
    %556 = vmatpush1.msra.mxu0 0.0
    %557 = vmatprep.subr.mxu0 0.0
    %558 = vmatpush1.msra.mxu0 0.0
    %559 = vmatprep.subr.mxu0 0.0
    %560 = vmatpush1.msra.mxu0 0.0
    %561 = vmatprep.subr.mxu0 0.0
    %562 = vmatpush1.msra.mxu0 0.0
    %563 = vmatprep.subr.mxu0 0.0
    %564 = vmatpush1.msra.mxu0 0.0
    %565 = vmatprep.subr.mxu0 0.0
    %566 = vmatpush1.msra.mxu0 0.0
    %567 = vmatprep.subr.mxu0 0.0
    %568 = vmatpush1.msra.mxu0 0.0
    %569 = vmatprep.subr.mxu0 0.0
    %570 = vmatpush1.msra.mxu0 0.0
    %571 = vmatprep.subr.mxu0 0.0
    %572 = vmatpush1.msra.mxu0 0.0
    %573 = vmatprep.subr.mxu0 0.0
    %574 = vmatpush1.msra.mxu0 0.0
    %575 = vmatprep.subr.mxu0 0.0
    %576 = vmatpush1.msra.mxu0 0.0
    %577 = vmatprep.subr.mxu0 0.0
    %578 = vmatpush1.msra.mxu0 0.0
    %579 = vmatprep.subr.mxu0 0.0
    %580 = vmatpush1.msra.mxu0 0.0
    %581 = vmatprep.mubr.f32.mxu0 0.0
    %582 = vmatmul.mubr.f32.gmra.mrb[0].mxu0 %v515
    %v583 = vpop.f32.mrb[0].mxu0
    %v584 = vadd.f32 0.0, %v583
    %v585 = vpop.f32.mrb[0].mxu0
    %586 = vdwg.mxu0
    %vm587 = vcmask 64512
    %v589 = vsel %vm587, %v240, 0
    %v592 = vsel %vm587, %v245, 0
    %v595 = vsel %vm587, %v511, 0
    %597 = vmatprep.subr.mxu0 0.0
    %598 = vmatpush1.xpose.msra.mxu0 %v595
    %599 = vmatprep.subr.mxu0 0.0
    %600 = vmatpush1.xpose.msra.mxu0 0.0
    %601 = vmatprep.subr.mxu0 0.0
    %602 = vmatpush1.xpose.msra.mxu0 0.0
    %603 = vmatprep.subr.mxu0 0.0
    %604 = vmatpush1.xpose.msra.mxu0 0.0
    %605 = vmatprep.subr.mxu0 0.0
    %606 = vmatpush1.xpose.msra.mxu0 0.0
    %607 = vmatprep.subr.mxu0 0.0
    %608 = vmatpush1.xpose.msra.mxu0 0.0
    %609 = vmatprep.subr.mxu0 0.0
    %610 = vmatpush1.xpose.msra.mxu0 0.0
    %611 = vmatprep.subr.mxu0 0.0
    %612 = vmatpush1.xpose.msra.mxu0 0.0
    %613 = vmatprep.subr.mxu0 0.0
    %614 = vmatpush1.xpose.msra.mxu0 0.0
    %615 = vmatprep.subr.mxu0 0.0
    %616 = vmatpush1.xpose.msra.mxu0 0.0
    %617 = vmatprep.subr.mxu0 0.0
    %618 = vmatpush1.xpose.msra.mxu0 0.0
    %619 = vmatprep.subr.mxu0 0.0
    %620 = vmatpush1.xpose.msra.mxu0 0.0
    %621 = vmatprep.subr.mxu0 0.0
    %622 = vmatpush1.xpose.msra.mxu0 0.0
    %623 = vmatprep.subr.mxu0 0.0
    %624 = vmatpush1.xpose.msra.mxu0 0.0
    %625 = vmatprep.subr.mxu0 0.0
    %626 = vmatpush1.xpose.msra.mxu0 0.0
    %627 = vmatprep.subr.mxu0 0.0
    %628 = vmatpush1.xpose.msra.mxu0 0.0
    %629 = vmatprep.subr.mxu0 0.0
    %630 = vmatpush1.xpose.msra.mxu0 0.0
    %631 = vmatprep.subr.mxu0 0.0
    %632 = vmatpush1.xpose.msra.mxu0 0.0
    %633 = vmatprep.subr.mxu0 0.0
    %634 = vmatpush1.xpose.msra.mxu0 0.0
    %635 = vmatprep.subr.mxu0 0.0
    %636 = vmatpush1.xpose.msra.mxu0 0.0
    %637 = vmatprep.subr.mxu0 0.0
    %638 = vmatpush1.xpose.msra.mxu0 0.0
    %639 = vmatprep.subr.mxu0 0.0
    %640 = vmatpush1.xpose.msra.mxu0 0.0
    %641 = vmatprep.subr.mxu0 0.0
    %642 = vmatpush1.xpose.msra.mxu0 0.0
    %643 = vmatprep.subr.mxu0 0.0
    %644 = vmatpush1.xpose.msra.mxu0 0.0
    %645 = vmatprep.subr.mxu0 0.0
    %646 = vmatpush1.xpose.msra.mxu0 0.0
    %647 = vmatprep.subr.mxu0 0.0
    %648 = vmatpush1.xpose.msra.mxu0 0.0
    %649 = vmatprep.subr.mxu0 0.0
    %650 = vmatpush1.xpose.msra.mxu0 0.0
    %651 = vmatprep.subr.mxu0 0.0
    %652 = vmatpush1.xpose.msra.mxu0 0.0
    %653 = vmatprep.subr.mxu0 0.0
    %654 = vmatpush1.xpose.msra.mxu0 0.0
    %655 = vmatprep.subr.mxu0 0.0
    %656 = vmatpush1.xpose.msra.mxu0 0.0
    %657 = vmatprep.subr.mxu0 0.0
    %658 = vmatpush1.xpose.msra.mxu0 0.0
    %659 = vmatprep.subr.mxu0 0.0
    %660 = vmatpush1.xpose.msra.mxu0 0.0
    %661 = vmatprep.mubr.f32.mxu0 0.0
    %662 = vmatmul.mubr.f32.gmra.mrb[0].mxu0 %v589
    %v663 = vpop.f32.mrb[0].mxu0
    %v664 = vadd.f32 0.0, %v663
    %v665 = vpop.f32.mrb[0].mxu0
    %666 = vmatprep.mubr.f32.mxu0 0.0
    %667 = vmatmul.mubr.f32.gmra.mrb[0].mxu0 %v592
    %v668 = vpop.f32.mrb[0].mxu0
    %v669 = vadd.f32 0.0, %v668
    %v670 = vpop.f32.mrb[0].mxu0
    %671 = vdwg.mxu0
    %v672 = vsel %vm587, %v664, -inf
    %673 = vmax.xlane.f32.xlu0 %v672
    %v674 = vpop.xlane.xlu0 %673
    %v675 = vsel %vm587, %v669, -inf
    %676 = vmax.xlane.f32.xlu0 %v675
    %v677 = vpop.xlane.xlu0 %676
    %v678 = vsub.f32 %v664, %v674
    %v679 = vsub.f32 %v669, %v677
    %v680 = vmul.f32 %v678, 1.442695
    %v681 = vpow.pop %v680
    %v682 = vmul.f32 %v679, 1.442695
    %v683 = vpow.pop %v682
    %v684 = vsel %vm587, %v681, 0.0
    %685 = vadd.xlane.f32.xlu0 %v684
    %v686 = vpop.xlane.xlu0 %685
    %v687 = vsel %vm587, %v683, 0.0
    %688 = vadd.xlane.f32.xlu0 %v687
    %v689 = vpop.xlane.xlu0 %688
    %v690 = vrcp.pop %v686
    %v691 = vmul.f32 %v681, %v690
    %v692 = vrcp.pop %v689
    %v693 = vmul.f32 %v683, %v692
    %v695 = vsel %vm587, %v691, 0
    %v698 = vsel %vm587, %v693, 0
    %700 = vmatprep.subr.mxu0 0.0
    %701 = vmatpush1.msra.mxu0 %v584
    %702 = vmatprep.subr.mxu0 0.0
    %703 = vmatpush1.msra.mxu0 0.0
    %704 = vmatprep.subr.mxu0 0.0
    %705 = vmatpush1.msra.mxu0 0.0
    %706 = vmatprep.subr.mxu0 0.0
    %707 = vmatpush1.msra.mxu0 0.0
    %708 = vmatprep.subr.mxu0 0.0
    %709 = vmatpush1.msra.mxu0 0.0
    %710 = vmatprep.subr.mxu0 0.0
    %711 = vmatpush1.msra.mxu0 0.0
    %712 = vmatprep.subr.mxu0 0.0
    %713 = vmatpush1.msra.mxu0 0.0
    %714 = vmatprep.subr.mxu0 0.0
    %715 = vmatpush1.msra.mxu0 0.0
    %716 = vmatprep.subr.mxu0 0.0
    %717 = vmatpush1.msra.mxu0 0.0
    %718 = vmatprep.subr.mxu0 0.0
    %719 = vmatpush1.msra.mxu0 0.0
    %720 = vmatprep.subr.mxu0 0.0
    %721 = vmatpush1.msra.mxu0 0.0
    %722 = vmatprep.subr.mxu0 0.0
    %723 = vmatpush1.msra.mxu0 0.0
    %724 = vmatprep.subr.mxu0 0.0
    %725 = vmatpush1.msra.mxu0 0.0
    %726 = vmatprep.subr.mxu0 0.0
    %727 = vmatpush1.msra.mxu0 0.0
    %728 = vmatprep.subr.mxu0 0.0
    %729 = vmatpush1.msra.mxu0 0.0
    %730 = vmatprep.subr.mxu0 0.0
    %731 = vmatpush1.msra.mxu0 0.0
    %732 = vmatprep.subr.mxu0 0.0
    %733 = vmatpush1.msra.mxu0 0.0
    %734 = vmatprep.subr.mxu0 0.0
    %735 = vmatpush1.msra.mxu0 0.0
    %736 = vmatprep.subr.mxu0 0.0
    %737 = vmatpush1.msra.mxu0 0.0
    %738 = vmatprep.subr.mxu0 0.0
    %739 = vmatpush1.msra.mxu0 0.0
    %740 = vmatprep.subr.mxu0 0.0
    %741 = vmatpush1.msra.mxu0 0.0
    %742 = vmatprep.subr.mxu0 0.0
    %743 = vmatpush1.msra.mxu0 0.0
    %744 = vmatprep.subr.mxu0 0.0
    %745 = vmatpush1.msra.mxu0 0.0
    %746 = vmatprep.subr.mxu0 0.0
    %747 = vmatpush1.msra.mxu0 0.0
    %748 = vmatprep.subr.mxu0 0.0
    %749 = vmatpush1.msra.mxu0 0.0
    %750 = vmatprep.subr.mxu0 0.0
    %751 = vmatpush1.msra.mxu0 0.0
    %752 = vmatprep.subr.mxu0 0.0
    %753 = vmatpush1.msra.mxu0 0.0
    %754 = vmatprep.subr.mxu0 0.0
    %755 = vmatpush1.msra.mxu0 0.0
    %756 = vmatprep.subr.mxu0 0.0
    %757 = vmatpush1.msra.mxu0 0.0
    %758 = vmatprep.subr.mxu0 0.0
    %759 = vmatpush1.msra.mxu0 0.0
    %760 = vmatprep.subr.mxu0 0.0
    %761 = vmatpush1.msra.mxu0 0.0
    %762 = vmatprep.subr.mxu0 0.0
    %763 = vmatpush1.msra.mxu0 0.0
    %764 = vmatprep.mubr.f32.mxu0 0.0
    %765 = vmatmul.mubr.f32.gmra.mrb[0].mxu0 %v695
    %v766 = vpop.f32.mrb[0].mxu0
    %v767 = vadd.f32 0.0, %v766
    %v768 = vpop.f32.mrb[0].mxu0
    %769 = vmatprep.mubr.f32.mxu0 0.0
    %770 = vmatmul.mubr.f32.gmra.mrb[0].mxu0 %v698
    %v771 = vpop.f32.mrb[0].mxu0
    %v772 = vadd.f32 0.0, %v771
    %v773 = vpop.f32.mrb[0].mxu0
    %774 = vdwg.mxu0
    %775 = vrot.lane.b32.xlu0 %v240, 120
    %v776 = vpop.permute.xlu0 %775
    %777 = vrot.lane.b32.xlu0 %v245, 120
    %v778 = vpop.permute.xlu0 %777
    %779 = vrot.lane.b32.xlu0 %v511, 120
    %v780 = vpop.permute.xlu0 %779
    %v781 = vsel %vm587, %v776, 0
    %v783 = vsel %vm587, %v778, 0
    %v785 = vsel %vm587, %v780, 0
    %787 = vmatprep.subr.mxu0 0.0
    %788 = vmatpush1.xpose.msra.mxu0 %v785
    %789 = vmatprep.subr.mxu0 0.0
    %790 = vmatpush1.xpose.msra.mxu0 0.0
    %791 = vmatprep.subr.mxu0 0.0
    %792 = vmatpush1.xpose.msra.mxu0 0.0
    %793 = vmatprep.subr.mxu0 0.0
    %794 = vmatpush1.xpose.msra.mxu0 0.0
    %795 = vmatprep.subr.mxu0 0.0
    %796 = vmatpush1.xpose.msra.mxu0 0.0
    %797 = vmatprep.subr.mxu0 0.0
    %798 = vmatpush1.xpose.msra.mxu0 0.0
    %799 = vmatprep.subr.mxu0 0.0
    %800 = vmatpush1.xpose.msra.mxu0 0.0
    %801 = vmatprep.subr.mxu0 0.0
    %802 = vmatpush1.xpose.msra.mxu0 0.0
    %803 = vmatprep.subr.mxu0 0.0
    %804 = vmatpush1.xpose.msra.mxu0 0.0
    %805 = vmatprep.subr.mxu0 0.0
    %806 = vmatpush1.xpose.msra.mxu0 0.0
    %807 = vmatprep.subr.mxu0 0.0
    %808 = vmatpush1.xpose.msra.mxu0 0.0
    %809 = vmatprep.subr.mxu0 0.0
    %810 = vmatpush1.xpose.msra.mxu0 0.0
    %811 = vmatprep.subr.mxu0 0.0
    %812 = vmatpush1.xpose.msra.mxu0 0.0
    %813 = vmatprep.subr.mxu0 0.0
    %814 = vmatpush1.xpose.msra.mxu0 0.0
    %815 = vmatprep.subr.mxu0 0.0
    %816 = vmatpush1.xpose.msra.mxu0 0.0
    %817 = vmatprep.subr.mxu0 0.0
    %818 = vmatpush1.xpose.msra.mxu0 0.0
    %819 = vmatprep.subr.mxu0 0.0
    %820 = vmatpush1.xpose.msra.mxu0 0.0
    %821 = vmatprep.subr.mxu0 0.0
    %822 = vmatpush1.xpose.msra.mxu0 0.0
    %823 = vmatprep.subr.mxu0 0.0
    %824 = vmatpush1.xpose.msra.mxu0 0.0
    %825 = vmatprep.subr.mxu0 0.0
    %826 = vmatpush1.xpose.msra.mxu0 0.0
    %827 = vmatprep.subr.mxu0 0.0
    %828 = vmatpush1.xpose.msra.mxu0 0.0
    %829 = vmatprep.subr.mxu0 0.0
    %830 = vmatpush1.xpose.msra.mxu0 0.0
    %831 = vmatprep.subr.mxu0 0.0
    %832 = vmatpush1.xpose.msra.mxu0 0.0
    %833 = vmatprep.subr.mxu0 0.0
    %834 = vmatpush1.xpose.msra.mxu0 0.0
    %835 = vmatprep.subr.mxu0 0.0
    %836 = vmatpush1.xpose.msra.mxu0 0.0
    %837 = vmatprep.subr.mxu0 0.0
    %838 = vmatpush1.xpose.msra.mxu0 0.0
    %839 = vmatprep.subr.mxu0 0.0
    %840 = vmatpush1.xpose.msra.mxu0 0.0
    %841 = vmatprep.subr.mxu0 0.0
    %842 = vmatpush1.xpose.msra.mxu0 0.0
    %843 = vmatprep.subr.mxu0 0.0
    %844 = vmatpush1.xpose.msra.mxu0 0.0
    %845 = vmatprep.subr.mxu0 0.0
    %846 = vmatpush1.xpose.msra.mxu0 0.0
    %847 = vmatprep.subr.mxu0 0.0
    %848 = vmatpush1.xpose.msra.mxu0 0.0
    %849 = vmatprep.subr.mxu0 0.0
    %850 = vmatpush1.xpose.msra.mxu0 0.0
    %851 = vmatprep.mubr.f32.mxu0 0.0
    %852 = vmatmul.mubr.f32.gmra.mrb[0].mxu0 %v781
    %v853 = vpop.f32.mrb[0].mxu0
    %v854 = vadd.f32 0.0, %v853
    %v855 = vpop.f32.mrb[0].mxu0
    %856 = vmatprep.mubr.f32.mxu0 0.0
    %857 = vmatmul.mubr.f32.gmra.mrb[0].mxu0 %v783
    %v858 = vpop.f32.mrb[0].mxu0
    %v859 = vadd.f32 0.0, %v858
    %v860 = vpop.f32.mrb[0].mxu0
    %861 = vdwg.mxu0
    %v862 = vsel %vm587, %v854, -inf
    %863 = vmax.xlane.f32.xlu0 %v862
    %v864 = vpop.xlane.xlu0 %863
    %v865 = vsel %vm587, %v859, -inf
    %866 = vmax.xlane.f32.xlu0 %v865
    %v867 = vpop.xlane.xlu0 %866
    %v868 = vsub.f32 %v854, %v864
    %v869 = vsub.f32 %v859, %v867
    %v870 = vmul.f32 %v868, 1.442695
    %v871 = vpow.pop %v870
    %v872 = vmul.f32 %v869, 1.442695
    %v873 = vpow.pop %v872
    %v874 = vsel %vm587, %v871, 0.0
    %875 = vadd.xlane.f32.xlu0 %v874
    %v876 = vpop.xlane.xlu0 %875
    %v877 = vsel %vm587, %v873, 0.0
    %878 = vadd.xlane.f32.xlu0 %v877
    %v879 = vpop.xlane.xlu0 %878
    %v880 = vrcp.pop %v876
    %v881 = vmul.f32 %v871, %v880
    %v882 = vrcp.pop %v879
    %v883 = vmul.f32 %v873, %v882
    %885 = vrot.lane.b32.xlu0 %v584, 120
    %v886 = vpop.permute.xlu0 %885
    %v889 = vsel %vm587, %v881, 0
    %v892 = vsel %vm587, %v883, 0
    %894 = vmatprep.subr.mxu0 0.0
    %895 = vmatpush1.msra.mxu0 %v886
    %896 = vmatprep.subr.mxu0 0.0
    %897 = vmatpush1.msra.mxu0 0.0
    %898 = vmatprep.subr.mxu0 0.0
    %899 = vmatpush1.msra.mxu0 0.0
    %900 = vmatprep.subr.mxu0 0.0
    %901 = vmatpush1.msra.mxu0 0.0
    %902 = vmatprep.subr.mxu0 0.0
    %903 = vmatpush1.msra.mxu0 0.0
    %904 = vmatprep.subr.mxu0 0.0
    %905 = vmatpush1.msra.mxu0 0.0
    %906 = vmatprep.subr.mxu0 0.0
    %907 = vmatpush1.msra.mxu0 0.0
    %908 = vmatprep.subr.mxu0 0.0
    %909 = vmatpush1.msra.mxu0 0.0
    %910 = vmatprep.subr.mxu0 0.0
    %911 = vmatpush1.msra.mxu0 0.0
    %912 = vmatprep.subr.mxu0 0.0
    %913 = vmatpush1.msra.mxu0 0.0
    %914 = vmatprep.subr.mxu0 0.0
    %915 = vmatpush1.msra.mxu0 0.0
    %916 = vmatprep.subr.mxu0 0.0
    %917 = vmatpush1.msra.mxu0 0.0
    %918 = vmatprep.subr.mxu0 0.0
    %919 = vmatpush1.msra.mxu0 0.0
    %920 = vmatprep.subr.mxu0 0.0
    %921 = vmatpush1.msra.mxu0 0.0
    %922 = vmatprep.subr.mxu0 0.0
    %923 = vmatpush1.msra.mxu0 0.0
    %924 = vmatprep.subr.mxu0 0.0
    %925 = vmatpush1.msra.mxu0 0.0
    %926 = vmatprep.subr.mxu0 0.0
    %927 = vmatpush1.msra.mxu0 0.0
    %928 = vmatprep.subr.mxu0 0.0
    %929 = vmatpush1.msra.mxu0 0.0
    %930 = vmatprep.subr.mxu0 0.0
    %931 = vmatpush1.msra.mxu0 0.0
    %932 = vmatprep.subr.mxu0 0.0
    %933 = vmatpush1.msra.mxu0 0.0
    %934 = vmatprep.subr.mxu0 0.0
    %935 = vmatpush1.msra.mxu0 0.0
    %936 = vmatprep.subr.mxu0 0.0
    %937 = vmatpush1.msra.mxu0 0.0
    %938 = vmatprep.subr.mxu0 0.0
    %939 = vmatpush1.msra.mxu0 0.0
    %940 = vmatprep.subr.mxu0 0.0
    %941 = vmatpush1.msra.mxu0 0.0
    %942 = vmatprep.subr.mxu0 0.0
    %943 = vmatpush1.msra.mxu0 0.0
    %944 = vmatprep.subr.mxu0 0.0
    %945 = vmatpush1.msra.mxu0 0.0
    %946 = vmatprep.subr.mxu0 0.0
    %947 = vmatpush1.msra.mxu0 0.0
    %948 = vmatprep.subr.mxu0 0.0
    %949 = vmatpush1.msra.mxu0 0.0
    %950 = vmatprep.subr.mxu0 0.0
    %951 = vmatpush1.msra.mxu0 0.0
    %952 = vmatprep.subr.mxu0 0.0
    %953 = vmatpush1.msra.mxu0 0.0
    %954 = vmatprep.subr.mxu0 0.0
    %955 = vmatpush1.msra.mxu0 0.0
    %956 = vmatprep.subr.mxu0 0.0
    %957 = vmatpush1.msra.mxu0 0.0
    %958 = vmatprep.mubr.f32.mxu0 0.0
    %959 = vmatmul.mubr.f32.gmra.mrb[0].mxu0 %v889
    %v960 = vpop.f32.mrb[0].mxu0
    %v961 = vadd.f32 0.0, %v960
    %v962 = vpop.f32.mrb[0].mxu0
    %963 = vmatprep.mubr.f32.mxu0 0.0
    %964 = vmatmul.mubr.f32.gmra.mrb[0].mxu0 %v892
    %v965 = vpop.f32.mrb[0].mxu0
    %v966 = vadd.f32 0.0, %v965
    %v967 = vpop.f32.mrb[0].mxu0
    %968 = vdwg.mxu0
    %969 = vrot.lane.b32.xlu0 %v240, 112
    %v970 = vpop.permute.xlu0 %969
    %971 = vrot.lane.b32.xlu0 %v245, 112
    %v972 = vpop.permute.xlu0 %971
    %973 = vrot.lane.b32.xlu0 %v511, 112
    %v974 = vpop.permute.xlu0 %973
    %v975 = vsel %vm587, %v970, 0
    %v977 = vsel %vm587, %v972, 0
    %v979 = vsel %vm587, %v974, 0
    %981 = vmatprep.subr.mxu0 0.0
    %982 = vmatpush1.xpose.msra.mxu0 %v979
    %983 = vmatprep.subr.mxu0 0.0
    %984 = vmatpush1.xpose.msra.mxu0 0.0
    %985 = vmatprep.subr.mxu0 0.0
    %986 = vmatpush1.xpose.msra.mxu0 0.0
    %987 = vmatprep.subr.mxu0 0.0
    %988 = vmatpush1.xpose.msra.mxu0 0.0
    %989 = vmatprep.subr.mxu0 0.0
    %990 = vmatpush1.xpose.msra.mxu0 0.0
    %991 = vmatprep.subr.mxu0 0.0
    %992 = vmatpush1.xpose.msra.mxu0 0.0
    %993 = vmatprep.subr.mxu0 0.0
    %994 = vmatpush1.xpose.msra.mxu0 0.0
    %995 = vmatprep.subr.mxu0 0.0
    %996 = vmatpush1.xpose.msra.mxu0 0.0
    %997 = vmatprep.subr.mxu0 0.0
    %998 = vmatpush1.xpose.msra.mxu0 0.0
    %999 = vmatprep.subr.mxu0 0.0
    %1000 = vmatpush1.xpose.msra.mxu0 0.0
    %1001 = vmatprep.subr.mxu0 0.0
    %1002 = vmatpush1.xpose.msra.mxu0 0.0
    %1003 = vmatprep.subr.mxu0 0.0
    %1004 = vmatpush1.xpose.msra.mxu0 0.0
    %1005 = vmatprep.subr.mxu0 0.0
    %1006 = vmatpush1.xpose.msra.mxu0 0.0
    %1007 = vmatprep.subr.mxu0 0.0
    %1008 = vmatpush1.xpose.msra.mxu0 0.0
    %1009 = vmatprep.subr.mxu0 0.0
    %1010 = vmatpush1.xpose.msra.mxu0 0.0
    %1011 = vmatprep.subr.mxu0 0.0
    %1012 = vmatpush1.xpose.msra.mxu0 0.0
    %1013 = vmatprep.subr.mxu0 0.0
    %1014 = vmatpush1.xpose.msra.mxu0 0.0
    %1015 = vmatprep.subr.mxu0 0.0
    %1016 = vmatpush1.xpose.msra.mxu0 0.0
    %1017 = vmatprep.subr.mxu0 0.0
    %1018 = vmatpush1.xpose.msra.mxu0 0.0
    %1019 = vmatprep.subr.mxu0 0.0
    %1020 = vmatpush1.xpose.msra.mxu0 0.0
    %1021 = vmatprep.subr.mxu0 0.0
    %1022 = vmatpush1.xpose.msra.mxu0 0.0
    %1023 = vmatprep.subr.mxu0 0.0
    %1024 = vmatpush1.xpose.msra.mxu0 0.0
    %1025 = vmatprep.subr.mxu0 0.0
    %1026 = vmatpush1.xpose.msra.mxu0 0.0
    %1027 = vmatprep.subr.mxu0 0.0
    %1028 = vmatpush1.xpose.msra.mxu0 0.0
    %1029 = vmatprep.subr.mxu0 0.0
    %1030 = vmatpush1.xpose.msra.mxu0 0.0
    %1031 = vmatprep.subr.mxu0 0.0
    %1032 = vmatpush1.xpose.msra.mxu0 0.0
    %1033 = vmatprep.subr.mxu0 0.0
    %1034 = vmatpush1.xpose.msra.mxu0 0.0
    %1035 = vmatprep.subr.mxu0 0.0
    %1036 = vmatpush1.xpose.msra.mxu0 0.0
    %1037 = vmatprep.subr.mxu0 0.0
    %1038 = vmatpush1.xpose.msra.mxu0 0.0
    %1039 = vmatprep.subr.mxu0 0.0
    %1040 = vmatpush1.xpose.msra.mxu0 0.0
    %1041 = vmatprep.subr.mxu0 0.0
    %1042 = vmatpush1.xpose.msra.mxu0 0.0
    %1043 = vmatprep.subr.mxu0 0.0
    %1044 = vmatpush1.xpose.msra.mxu0 0.0
    %1045 = vmatprep.mubr.f32.mxu0 0.0
    %1046 = vmatmul.mubr.f32.gmra.mrb[0].mxu0 %v975
    %v1047 = vpop.f32.mrb[0].mxu0
    %v1048 = vadd.f32 0.0, %v1047
    %v1049 = vpop.f32.mrb[0].mxu0
    %1050 = vmatprep.mubr.f32.mxu0 0.0
    %1051 = vmatmul.mubr.f32.gmra.mrb[0].mxu0 %v977
    %v1052 = vpop.f32.mrb[0].mxu0
    %v1053 = vadd.f32 0.0, %v1052
    %v1054 = vpop.f32.mrb[0].mxu0
    %1055 = vdwg.mxu0
    %v1056 = vsel %vm587, %v1048, -inf
    %1057 = vmax.xlane.f32.xlu0 %v1056
    %v1058 = vpop.xlane.xlu0 %1057
    %v1059 = vsel %vm587, %v1053, -inf
    %1060 = vmax.xlane.f32.xlu0 %v1059
    %v1061 = vpop.xlane.xlu0 %1060
    %v1062 = vsub.f32 %v1048, %v1058
    %v1063 = vsub.f32 %v1053, %v1061
    %v1064 = vmul.f32 %v1062, 1.442695
    %v1065 = vpow.pop %v1064
    %v1066 = vmul.f32 %v1063, 1.442695
    %v1067 = vpow.pop %v1066
    %v1068 = vsel %vm587, %v1065, 0.0
    %1069 = vadd.xlane.f32.xlu0 %v1068
    %v1070 = vpop.xlane.xlu0 %1069
    %v1071 = vsel %vm587, %v1067, 0.0
    %1072 = vadd.xlane.f32.xlu0 %v1071
    %v1073 = vpop.xlane.xlu0 %1072
    %v1074 = vrcp.pop %v1070
    %v1075 = vmul.f32 %v1065, %v1074
    %v1076 = vrcp.pop %v1073
    %v1077 = vmul.f32 %v1067, %v1076
    %1078 = vrot.lane.b32.xlu0 %v584, 112
    %v1079 = vpop.permute.xlu0 %1078
    %v1082 = vsel %vm587, %v1075, 0
    %v1085 = vsel %vm587, %v1077, 0
    %1087 = vmatprep.subr.mxu0 0.0
    %1088 = vmatpush1.msra.mxu0 %v1079
    %1089 = vmatprep.subr.mxu0 0.0
    %1090 = vmatpush1.msra.mxu0 0.0
    %1091 = vmatprep.subr.mxu0 0.0
    %1092 = vmatpush1.msra.mxu0 0.0
    %1093 = vmatprep.subr.mxu0 0.0
    %1094 = vmatpush1.msra.mxu0 0.0
    %1095 = vmatprep.subr.mxu0 0.0
    %1096 = vmatpush1.msra.mxu0 0.0
    %1097 = vmatprep.subr.mxu0 0.0
    %1098 = vmatpush1.msra.mxu0 0.0
    %1099 = vmatprep.subr.mxu0 0.0
    %1100 = vmatpush1.msra.mxu0 0.0
    %1101 = vmatprep.subr.mxu0 0.0
    %1102 = vmatpush1.msra.mxu0 0.0
    %1103 = vmatprep.subr.mxu0 0.0
    %1104 = vmatpush1.msra.mxu0 0.0
    %1105 = vmatprep.subr.mxu0 0.0
    %1106 = vmatpush1.msra.mxu0 0.0
    %1107 = vmatprep.subr.mxu0 0.0
    %1108 = vmatpush1.msra.mxu0 0.0
    %1109 = vmatprep.subr.mxu0 0.0
    %1110 = vmatpush1.msra.mxu0 0.0
    %1111 = vmatprep.subr.mxu0 0.0
    %1112 = vmatpush1.msra.mxu0 0.0
    %1113 = vmatprep.subr.mxu0 0.0
    %1114 = vmatpush1.msra.mxu0 0.0
    %1115 = vmatprep.subr.mxu0 0.0
    %1116 = vmatpush1.msra.mxu0 0.0
    %1117 = vmatprep.subr.mxu0 0.0
    %1118 = vmatpush1.msra.mxu0 0.0
    %1119 = vmatprep.subr.mxu0 0.0
    %1120 = vmatpush1.msra.mxu0 0.0
    %1121 = vmatprep.subr.mxu0 0.0
    %1122 = vmatpush1.msra.mxu0 0.0
    %1123 = vmatprep.subr.mxu0 0.0
    %1124 = vmatpush1.msra.mxu0 0.0
    %1125 = vmatprep.subr.mxu0 0.0
    %1126 = vmatpush1.msra.mxu0 0.0
    %1127 = vmatprep.subr.mxu0 0.0
    %1128 = vmatpush1.msra.mxu0 0.0
    %1129 = vmatprep.subr.mxu0 0.0
    %1130 = vmatpush1.msra.mxu0 0.0
    %1131 = vmatprep.subr.mxu0 0.0
    %1132 = vmatpush1.msra.mxu0 0.0
    %1133 = vmatprep.subr.mxu0 0.0
    %1134 = vmatpush1.msra.mxu0 0.0
    %1135 = vmatprep.subr.mxu0 0.0
    %1136 = vmatpush1.msra.mxu0 0.0
    %1137 = vmatprep.subr.mxu0 0.0
    %1138 = vmatpush1.msra.mxu0 0.0
    %1139 = vmatprep.subr.mxu0 0.0
    %1140 = vmatpush1.msra.mxu0 0.0
    %1141 = vmatprep.subr.mxu0 0.0
    %1142 = vmatpush1.msra.mxu0 0.0
    %1143 = vmatprep.subr.mxu0 0.0
    %1144 = vmatpush1.msra.mxu0 0.0
    %1145 = vmatprep.subr.mxu0 0.0
    %1146 = vmatpush1.msra.mxu0 0.0
    %1147 = vmatprep.subr.mxu0 0.0
    %1148 = vmatpush1.msra.mxu0 0.0
    %1149 = vmatprep.subr.mxu0 0.0
    %1150 = vmatpush1.msra.mxu0 0.0
    %1151 = vmatprep.mubr.f32.mxu0 0.0
    %1152 = vmatmul.mubr.f32.gmra.mrb[0].mxu0 %v1082
    %v1153 = vpop.f32.mrb[0].mxu0
    %v1154 = vadd.f32 0.0, %v1153
    %v1155 = vpop.f32.mrb[0].mxu0
    %1156 = vmatprep.mubr.f32.mxu0 0.0
    %1157 = vmatmul.mubr.f32.gmra.mrb[0].mxu0 %v1085
    %v1158 = vpop.f32.mrb[0].mxu0
    %v1159 = vadd.f32 0.0, %v1158
    %v1160 = vpop.f32.mrb[0].mxu0
    %1161 = vdwg.mxu0
    %1162 = vrot.lane.b32.xlu0 %v240, 104
    %v1163 = vpop.permute.xlu0 %1162
    %1164 = vrot.lane.b32.xlu0 %v245, 104
    %v1165 = vpop.permute.xlu0 %1164
    %1166 = vrot.lane.b32.xlu0 %v511, 104
    %v1167 = vpop.permute.xlu0 %1166
    %v1168 = vsel %vm587, %v1163, 0
    %v1170 = vsel %vm587, %v1165, 0
    %v1172 = vsel %vm587, %v1167, 0
    %1174 = vmatprep.subr.mxu0 0.0
    %1175 = vmatpush1.xpose.msra.mxu0 %v1172
    %1176 = vmatprep.subr.mxu0 0.0
    %1177 = vmatpush1.xpose.msra.mxu0 0.0
    %1178 = vmatprep.subr.mxu0 0.0
    %1179 = vmatpush1.xpose.msra.mxu0 0.0
    %1180 = vmatprep.subr.mxu0 0.0
    %1181 = vmatpush1.xpose.msra.mxu0 0.0
    %1182 = vmatprep.subr.mxu0 0.0
    %1183 = vmatpush1.xpose.msra.mxu0 0.0
    %1184 = vmatprep.subr.mxu0 0.0
    %1185 = vmatpush1.xpose.msra.mxu0 0.0
    %1186 = vmatprep.subr.mxu0 0.0
    %1187 = vmatpush1.xpose.msra.mxu0 0.0
    %1188 = vmatprep.subr.mxu0 0.0
    %1189 = vmatpush1.xpose.msra.mxu0 0.0
    %1190 = vmatprep.subr.mxu0 0.0
    %1191 = vmatpush1.xpose.msra.mxu0 0.0
    %1192 = vmatprep.subr.mxu0 0.0
    %1193 = vmatpush1.xpose.msra.mxu0 0.0
    %1194 = vmatprep.subr.mxu0 0.0
    %1195 = vmatpush1.xpose.msra.mxu0 0.0
    %1196 = vmatprep.subr.mxu0 0.0
    %1197 = vmatpush1.xpose.msra.mxu0 0.0
    %1198 = vmatprep.subr.mxu0 0.0
    %1199 = vmatpush1.xpose.msra.mxu0 0.0
    %1200 = vmatprep.subr.mxu0 0.0
    %1201 = vmatpush1.xpose.msra.mxu0 0.0
    %1202 = vmatprep.subr.mxu0 0.0
    %1203 = vmatpush1.xpose.msra.mxu0 0.0
    %1204 = vmatprep.subr.mxu0 0.0
    %1205 = vmatpush1.xpose.msra.mxu0 0.0
    %1206 = vmatprep.subr.mxu0 0.0
    %1207 = vmatpush1.xpose.msra.mxu0 0.0
    %1208 = vmatprep.subr.mxu0 0.0
    %1209 = vmatpush1.xpose.msra.mxu0 0.0
    %1210 = vmatprep.subr.mxu0 0.0
    %1211 = vmatpush1.xpose.msra.mxu0 0.0
    %1212 = vmatprep.subr.mxu0 0.0
    %1213 = vmatpush1.xpose.msra.mxu0 0.0
    %1214 = vmatprep.subr.mxu0 0.0
    %1215 = vmatpush1.xpose.msra.mxu0 0.0
    %1216 = vmatprep.subr.mxu0 0.0
    %1217 = vmatpush1.xpose.msra.mxu0 0.0
    %1218 = vmatprep.subr.mxu0 0.0
    %1219 = vmatpush1.xpose.msra.mxu0 0.0
    %1220 = vmatprep.subr.mxu0 0.0
    %1221 = vmatpush1.xpose.msra.mxu0 0.0
    %1222 = vmatprep.subr.mxu0 0.0
    %1223 = vmatpush1.xpose.msra.mxu0 0.0
    %1224 = vmatprep.subr.mxu0 0.0
    %1225 = vmatpush1.xpose.msra.mxu0 0.0
    %1226 = vmatprep.subr.mxu0 0.0
    %1227 = vmatpush1.xpose.msra.mxu0 0.0
    %1228 = vmatprep.subr.mxu0 0.0
    %1229 = vmatpush1.xpose.msra.mxu0 0.0
    %1230 = vmatprep.subr.mxu0 0.0
    %1231 = vmatpush1.xpose.msra.mxu0 0.0
    %1232 = vmatprep.subr.mxu0 0.0
    %1233 = vmatpush1.xpose.msra.mxu0 0.0
    %1234 = vmatprep.subr.mxu0 0.0
    %1235 = vmatpush1.xpose.msra.mxu0 0.0
    %1236 = vmatprep.subr.mxu0 0.0
    %1237 = vmatpush1.xpose.msra.mxu0 0.0
    %1238 = vmatprep.mubr.f32.mxu0 0.0
    %1239 = vmatmul.mubr.f32.gmra.mrb[0].mxu0 %v1168
    %v1240 = vpop.f32.mrb[0].mxu0
    %v1241 = vadd.f32 0.0, %v1240
    %v1242 = vpop.f32.mrb[0].mxu0
    %1243 = vmatprep.mubr.f32.mxu0 0.0
    %1244 = vmatmul.mubr.f32.gmra.mrb[0].mxu0 %v1170
    %v1245 = vpop.f32.mrb[0].mxu0
    %v1246 = vadd.f32 0.0, %v1245
    %v1247 = vpop.f32.mrb[0].mxu0
    %1248 = vdwg.mxu0
    %v1249 = vsel %vm587, %v1241, -inf
    %1250 = vmax.xlane.f32.xlu0 %v1249
    %v1251 = vpop.xlane.xlu0 %1250
    %v1252 = vsel %vm587, %v1246, -inf
    %1253 = vmax.xlane.f32.xlu0 %v1252
    %v1254 = vpop.xlane.xlu0 %1253
    %v1255 = vsub.f32 %v1241, %v1251
    %v1256 = vsub.f32 %v1246, %v1254
    %v1257 = vmul.f32 %v1255, 1.442695
    %v1258 = vpow.pop %v1257
    %v1259 = vmul.f32 %v1256, 1.442695
    %v1260 = vpow.pop %v1259
    %v1261 = vsel %vm587, %v1258, 0.0
    %1262 = vadd.xlane.f32.xlu0 %v1261
    %v1263 = vpop.xlane.xlu0 %1262
    %v1264 = vsel %vm587, %v1260, 0.0
    %1265 = vadd.xlane.f32.xlu0 %v1264
    %v1266 = vpop.xlane.xlu0 %1265
    %v1267 = vrcp.pop %v1263
    %v1268 = vmul.f32 %v1258, %v1267
    %v1269 = vrcp.pop %v1266
    %v1270 = vmul.f32 %v1260, %v1269
    %1271 = vrot.lane.b32.xlu0 %v584, 104
    %v1272 = vpop.permute.xlu0 %1271
    %v1275 = vsel %vm587, %v1268, 0
    %v1278 = vsel %vm587, %v1270, 0
    %1280 = vmatprep.subr.mxu0 0.0
    %1281 = vmatpush1.msra.mxu0 %v1272
    %1282 = vmatprep.subr.mxu0 0.0
    %1283 = vmatpush1.msra.mxu0 0.0
    %1284 = vmatprep.subr.mxu0 0.0
    %1285 = vmatpush1.msra.mxu0 0.0
    %1286 = vmatprep.subr.mxu0 0.0
    %1287 = vmatpush1.msra.mxu0 0.0
    %1288 = vmatprep.subr.mxu0 0.0
    %1289 = vmatpush1.msra.mxu0 0.0
    %1290 = vmatprep.subr.mxu0 0.0
    %1291 = vmatpush1.msra.mxu0 0.0
    %1292 = vmatprep.subr.mxu0 0.0
    %1293 = vmatpush1.msra.mxu0 0.0
    %1294 = vmatprep.subr.mxu0 0.0
    %1295 = vmatpush1.msra.mxu0 0.0
    %1296 = vmatprep.subr.mxu0 0.0
    %1297 = vmatpush1.msra.mxu0 0.0
    %1298 = vmatprep.subr.mxu0 0.0
    %1299 = vmatpush1.msra.mxu0 0.0
    %1300 = vmatprep.subr.mxu0 0.0
    %1301 = vmatpush1.msra.mxu0 0.0
    %1302 = vmatprep.subr.mxu0 0.0
    %1303 = vmatpush1.msra.mxu0 0.0
    %1304 = vmatprep.subr.mxu0 0.0
    %1305 = vmatpush1.msra.mxu0 0.0
    %1306 = vmatprep.subr.mxu0 0.0
    %1307 = vmatpush1.msra.mxu0 0.0
    %1308 = vmatprep.subr.mxu0 0.0
    %1309 = vmatpush1.msra.mxu0 0.0
    %1310 = vmatprep.subr.mxu0 0.0
    %1311 = vmatpush1.msra.mxu0 0.0
    %1312 = vmatprep.subr.mxu0 0.0
    %1313 = vmatpush1.msra.mxu0 0.0
    %1314 = vmatprep.subr.mxu0 0.0
    %1315 = vmatpush1.msra.mxu0 0.0
    %1316 = vmatprep.subr.mxu0 0.0
    %1317 = vmatpush1.msra.mxu0 0.0
    %1318 = vmatprep.subr.mxu0 0.0
    %1319 = vmatpush1.msra.mxu0 0.0
    %1320 = vmatprep.subr.mxu0 0.0
    %1321 = vmatpush1.msra.mxu0 0.0
    %1322 = vmatprep.subr.mxu0 0.0
    %1323 = vmatpush1.msra.mxu0 0.0
    %1324 = vmatprep.subr.mxu0 0.0
    %1325 = vmatpush1.msra.mxu0 0.0
    %1326 = vmatprep.subr.mxu0 0.0
    %1327 = vmatpush1.msra.mxu0 0.0
    %1328 = vmatprep.subr.mxu0 0.0
    %1329 = vmatpush1.msra.mxu0 0.0
    %1330 = vmatprep.subr.mxu0 0.0
    %1331 = vmatpush1.msra.mxu0 0.0
    %1332 = vmatprep.subr.mxu0 0.0
    %1333 = vmatpush1.msra.mxu0 0.0
    %1334 = vmatprep.subr.mxu0 0.0
    %1335 = vmatpush1.msra.mxu0 0.0
    %1336 = vmatprep.subr.mxu0 0.0
    %1337 = vmatpush1.msra.mxu0 0.0
    %1338 = vmatprep.subr.mxu0 0.0
    %1339 = vmatpush1.msra.mxu0 0.0
    %1340 = vmatprep.subr.mxu0 0.0
    %1341 = vmatpush1.msra.mxu0 0.0
    %1342 = vmatprep.subr.mxu0 0.0
    %1343 = vmatpush1.msra.mxu0 0.0
    %1344 = vmatprep.mubr.f32.mxu0 0.0
    %1345 = vmatmul.mubr.f32.gmra.mrb[0].mxu0 %v1275
    %v1346 = vpop.f32.mrb[0].mxu0
    %v1347 = vadd.f32 0.0, %v1346
    %v1348 = vpop.f32.mrb[0].mxu0
    %1349 = vmatprep.mubr.f32.mxu0 0.0
    %1350 = vmatmul.mubr.f32.gmra.mrb[0].mxu0 %v1278
    %v1351 = vpop.f32.mrb[0].mxu0
    %v1352 = vadd.f32 0.0, %v1351
    %v1353 = vpop.f32.mrb[0].mxu0
    %1354 = vdwg.mxu0
    %1357 = vrot.lane.b32.xlu0 %v961, 8
    %v1358 = vpop.permute.xlu0 %1357
    %1359 = vrot.lane.b32.xlu0 %v966, 8
    %v1360 = vpop.permute.xlu0 %1359
    %1365 = vrot.lane.b32.xlu0 %v1154, 16
    %v1366 = vpop.permute.xlu0 %1365
    %1367 = vrot.lane.b32.xlu0 %v1159, 16
    %v1368 = vpop.permute.xlu0 %1367
    %1373 = vrot.lane.b32.xlu0 %v1347, 24
    %v1374 = vpop.permute.xlu0 %1373
    %1375 = vrot.lane.b32.xlu0 %v1352, 24
    %v1376 = vpop.permute.xlu0 %1375
    %v1379 = vsel %vm587, %v767, %v1358
    %v1380 = vsel %vm587, %v772, %v1360
    %v1381 = vsel %vm440, %v1379, %v1366
    %v1382 = vsel %vm440, %v1380, %v1368
    %vm1383 = vcmask 195584
    %v1384 = vsel %vm1383, %v1381, %v1374
    %v1385 = vsel %vm1383, %v1382, %v1376
    %v1387 = vlaneseq
    %v1388 = vshrl.u32 %v1387, 7
    %v1389 = vsub.s32 0, %v1388
    %v1390 = vrot.slane %v147, %v1389
    %v1393 = vsel %vm160, %v1384, 0
    %v1396 = vsel %vm160, %v1385, 0
    %1398 = vmatprep.subr.mxu0 0.0
    %1399 = vmatpush1.msra.mxu0 %v140
    %1400 = vmatprep.subr.mxu0 0.0
    %1401 = vmatpush1.msra.mxu0 %v141
    %1402 = vmatprep.subr.mxu0 0.0
    %1403 = vmatpush1.msra.mxu0 %v142
    %1404 = vmatprep.subr.mxu0 0.0
    %1405 = vmatpush1.msra.mxu0 %v143
    %1406 = vmatprep.subr.mxu0 0.0
    %1407 = vmatpush1.msra.mxu0 0.0
    %1408 = vmatprep.subr.mxu0 0.0
    %1409 = vmatpush1.msra.mxu0 0.0
    %1410 = vmatprep.subr.mxu0 0.0
    %1411 = vmatpush1.msra.mxu0 0.0
    %1412 = vmatprep.subr.mxu0 0.0
    %1413 = vmatpush1.msra.mxu0 0.0
    %1414 = vmatprep.subr.mxu0 0.0
    %1415 = vmatpush1.msra.mxu0 0.0
    %1416 = vmatprep.subr.mxu0 0.0
    %1417 = vmatpush1.msra.mxu0 0.0
    %1418 = vmatprep.subr.mxu0 0.0
    %1419 = vmatpush1.msra.mxu0 0.0
    %1420 = vmatprep.subr.mxu0 0.0
    %1421 = vmatpush1.msra.mxu0 0.0
    %1422 = vmatprep.subr.mxu0 0.0
    %1423 = vmatpush1.msra.mxu0 0.0
    %1424 = vmatprep.subr.mxu0 0.0
    %1425 = vmatpush1.msra.mxu0 0.0
    %1426 = vmatprep.subr.mxu0 0.0
    %1427 = vmatpush1.msra.mxu0 0.0
    %1428 = vmatprep.subr.mxu0 0.0
    %1429 = vmatpush1.msra.mxu0 0.0
    %1430 = vmatprep.subr.mxu0 0.0
    %1431 = vmatpush1.msra.mxu0 0.0
    %1432 = vmatprep.subr.mxu0 0.0
    %1433 = vmatpush1.msra.mxu0 0.0
    %1434 = vmatprep.subr.mxu0 0.0
    %1435 = vmatpush1.msra.mxu0 0.0
    %1436 = vmatprep.subr.mxu0 0.0
    %1437 = vmatpush1.msra.mxu0 0.0
    %1438 = vmatprep.subr.mxu0 0.0
    %1439 = vmatpush1.msra.mxu0 0.0
    %1440 = vmatprep.subr.mxu0 0.0
    %1441 = vmatpush1.msra.mxu0 0.0
    %1442 = vmatprep.subr.mxu0 0.0
    %1443 = vmatpush1.msra.mxu0 0.0
    %1444 = vmatprep.subr.mxu0 0.0
    %1445 = vmatpush1.msra.mxu0 0.0
    %1446 = vmatprep.subr.mxu0 0.0
    %1447 = vmatpush1.msra.mxu0 0.0
    %1448 = vmatprep.subr.mxu0 0.0
    %1449 = vmatpush1.msra.mxu0 0.0
    %1450 = vmatprep.subr.mxu0 0.0
    %1451 = vmatpush1.msra.mxu0 0.0
    %1452 = vmatprep.subr.mxu0 0.0
    %1453 = vmatpush1.msra.mxu0 0.0
    %1454 = vmatprep.subr.mxu0 0.0
    %1455 = vmatpush1.msra.mxu0 0.0
    %1456 = vmatprep.subr.mxu0 0.0
    %1457 = vmatpush1.msra.mxu0 0.0
    %1458 = vmatprep.subr.mxu0 0.0
    %1459 = vmatpush1.msra.mxu0 0.0
    %1460 = vmatprep.subr.mxu0 0.0
    %1461 = vmatpush1.msra.mxu0 0.0
    %1462 = vmatprep.mubr.f32.mxu0 0.0
    %1463 = vmatmul.mubr.f32.gmra.mrb[0].mxu0 %v1393
    %v1464 = vpop.f32.mrb[0].mxu0
    %v1465 = vadd.f32 %v1390, %v1464
    %v1466 = vpop.f32.mrb[0].mxu0
    %1467 = vmatprep.mubr.f32.mxu0 0.0
    %1468 = vmatmul.mubr.f32.gmra.mrb[0].mxu0 %v1396
    %v1469 = vpop.f32.mrb[0].mxu0
    %v1470 = vadd.f32 %v1390, %v1469
    %v1471 = vpop.f32.mrb[0].mxu0
    %1472 = vdwg.mxu0
    %1473 = vst.msk [vmem:[#allocation14] sm:$0xff] %vm160, %v1465
    %1474 = vst.msk [vmem:[#allocation14 + $0x8] sm:$0xff] %vm160, %v1470
    %1475 = vmatprep.subr.mxu0 0.0
    %1476 = vmatpush1.msra.mxu0 %v341
    %1477 = vmatprep.subr.mxu0 0.0
    %1478 = vmatpush1.msra.mxu0 %v346
    %1479 = vmatprep.subr.mxu0 0.0
    %1480 = vmatpush1.msra.mxu0 0.0
    %1481 = vmatprep.subr.mxu0 0.0
    %1482 = vmatpush1.msra.mxu0 0.0
    %1483 = vmatprep.subr.mxu0 0.0
    %1484 = vmatpush1.msra.mxu0 0.0
    %1485 = vmatprep.subr.mxu0 0.0
    %1486 = vmatpush1.msra.mxu0 0.0
    %1487 = vmatprep.subr.mxu0 0.0
    %1488 = vmatpush1.msra.mxu0 0.0
    %1489 = vmatprep.subr.mxu0 0.0
    %1490 = vmatpush1.msra.mxu0 0.0
    %1491 = vmatprep.subr.mxu0 0.0
    %1492 = vmatpush1.msra.mxu0 0.0
    %1493 = vmatprep.subr.mxu0 0.0
    %1494 = vmatpush1.msra.mxu0 0.0
    %1495 = vmatprep.subr.mxu0 0.0
    %1496 = vmatpush1.msra.mxu0 0.0
    %1497 = vmatprep.subr.mxu0 0.0
    %1498 = vmatpush1.msra.mxu0 0.0
    %1499 = vmatprep.subr.mxu0 0.0
    %1500 = vmatpush1.msra.mxu0 0.0
    %1501 = vmatprep.subr.mxu0 0.0
    %1502 = vmatpush1.msra.mxu0 0.0
    %1503 = vmatprep.subr.mxu0 0.0
    %1504 = vmatpush1.msra.mxu0 0.0
    %1505 = vmatprep.subr.mxu0 0.0
    %1506 = vmatpush1.msra.mxu0 0.0
    %1507 = vmatprep.subr.mxu0 0.0
    %1508 = vmatpush1.msra.mxu0 0.0
    %1509 = vmatprep.subr.mxu0 0.0
    %1510 = vmatpush1.msra.mxu0 0.0
    %1511 = vmatprep.subr.mxu0 0.0
    %1512 = vmatpush1.msra.mxu0 0.0
    %1513 = vmatprep.subr.mxu0 0.0
    %1514 = vmatpush1.msra.mxu0 0.0
    %1515 = vmatprep.subr.mxu0 0.0
    %1516 = vmatpush1.msra.mxu0 0.0
    %1517 = vmatprep.subr.mxu0 0.0
    %1518 = vmatpush1.msra.mxu0 0.0
    %1519 = vmatprep.subr.mxu0 0.0
    %1520 = vmatpush1.msra.mxu0 0.0
    %1521 = vmatprep.subr.mxu0 0.0
    %1522 = vmatpush1.msra.mxu0 0.0
    %1523 = vmatprep.subr.mxu0 0.0
    %1524 = vmatpush1.msra.mxu0 0.0
    %1525 = vmatprep.subr.mxu0 0.0
    %1526 = vmatpush1.msra.mxu0 0.0
    %1527 = vmatprep.subr.mxu0 0.0
    %1528 = vmatpush1.msra.mxu0 0.0
    %1529 = vmatprep.subr.mxu0 0.0
    %1530 = vmatpush1.msra.mxu0 0.0
    %1531 = vmatprep.subr.mxu0 0.0
    %1532 = vmatpush1.msra.mxu0 0.0
    %1533 = vmatprep.subr.mxu0 0.0
    %1534 = vmatpush1.msra.mxu0 0.0
    %1535 = vmatprep.subr.mxu0 0.0
    %1536 = vmatpush1.msra.mxu0 0.0
    %1537 = vmatprep.subr.mxu0 0.0
    %1538 = vmatpush1.msra.mxu0 0.0
    %1539 = vmatprep.mubr.f32.mxu0 0.0
    %1540 = vmatmul.mubr.f32.gmra.mrb[0].mxu0 %v442
    %v1541 = vpop.f32.mrb[0].mxu0
    %v1542 = vadd.f32 0.0, %v1541
    %v1543 = vpop.f32.mrb[0].mxu0
    %1544 = vdwg.mxu0
    %1545 = vmatprep.subr.mxu0 0.0
    %1546 = vmatpush1.msra.mxu0 %v432
    %1547 = vmatprep.subr.mxu0 0.0
    %1548 = vmatpush1.msra.mxu0 %v437
    %1549 = vmatprep.subr.mxu0 0.0
    %1550 = vmatpush1.msra.mxu0 0.0
    %1551 = vmatprep.subr.mxu0 0.0
    %1552 = vmatpush1.msra.mxu0 0.0
    %1553 = vmatprep.subr.mxu0 0.0
    %1554 = vmatpush1.msra.mxu0 0.0
    %1555 = vmatprep.subr.mxu0 0.0
    %1556 = vmatpush1.msra.mxu0 0.0
    %1557 = vmatprep.subr.mxu0 0.0
    %1558 = vmatpush1.msra.mxu0 0.0
    %1559 = vmatprep.subr.mxu0 0.0
    %1560 = vmatpush1.msra.mxu0 0.0
    %1561 = vmatprep.subr.mxu0 0.0
    %1562 = vmatpush1.msra.mxu0 0.0
    %1563 = vmatprep.subr.mxu0 0.0
    %1564 = vmatpush1.msra.mxu0 0.0
    %1565 = vmatprep.subr.mxu0 0.0
    %1566 = vmatpush1.msra.mxu0 0.0
    %1567 = vmatprep.subr.mxu0 0.0
    %1568 = vmatpush1.msra.mxu0 0.0
    %1569 = vmatprep.subr.mxu0 0.0
    %1570 = vmatpush1.msra.mxu0 0.0
    %1571 = vmatprep.subr.mxu0 0.0
    %1572 = vmatpush1.msra.mxu0 0.0
    %1573 = vmatprep.subr.mxu0 0.0
    %1574 = vmatpush1.msra.mxu0 0.0
    %1575 = vmatprep.subr.mxu0 0.0
    %1576 = vmatpush1.msra.mxu0 0.0
    %1577 = vmatprep.subr.mxu0 0.0
    %1578 = vmatpush1.msra.mxu0 0.0
    %1579 = vmatprep.subr.mxu0 0.0
    %1580 = vmatpush1.msra.mxu0 0.0
    %1581 = vmatprep.subr.mxu0 0.0
    %1582 = vmatpush1.msra.mxu0 0.0
    %1583 = vmatprep.subr.mxu0 0.0
    %1584 = vmatpush1.msra.mxu0 0.0
    %1585 = vmatprep.subr.mxu0 0.0
    %1586 = vmatpush1.msra.mxu0 0.0
    %1587 = vmatprep.subr.mxu0 0.0
    %1588 = vmatpush1.msra.mxu0 0.0
    %1589 = vmatprep.subr.mxu0 0.0
    %1590 = vmatpush1.msra.mxu0 0.0
    %1591 = vmatprep.subr.mxu0 0.0
    %1592 = vmatpush1.msra.mxu0 0.0
    %1593 = vmatprep.subr.mxu0 0.0
    %1594 = vmatpush1.msra.mxu0 0.0
    %1595 = vmatprep.subr.mxu0 0.0
    %1596 = vmatpush1.msra.mxu0 0.0
    %1597 = vmatprep.subr.mxu0 0.0
    %1598 = vmatpush1.msra.mxu0 0.0
    %1599 = vmatprep.subr.mxu0 0.0
    %1600 = vmatpush1.msra.mxu0 0.0
    %1601 = vmatprep.subr.mxu0 0.0
    %1602 = vmatpush1.msra.mxu0 0.0
    %1603 = vmatprep.subr.mxu0 0.0
    %1604 = vmatpush1.msra.mxu0 0.0
    %1605 = vmatprep.subr.mxu0 0.0
    %1606 = vmatpush1.msra.mxu0 0.0
    %1607 = vmatprep.subr.mxu0 0.0
    %1608 = vmatpush1.msra.mxu0 0.0
    %1609 = vmatprep.mubr.f32.mxu0 0.0
    %1610 = vmatmul.mubr.f32.gmra.mrb[0].mxu0 %v515
    %v1611 = vpop.f32.mrb[0].mxu0
    %v1612 = vadd.f32 0.0, %v1611
    %v1613 = vpop.f32.mrb[0].mxu0
    %1614 = vdwg.mxu0
    %v1616 = vsel %vm587, %v250, 0
    %v1619 = vsel %vm587, %v255, 0
    %v1622 = vsel %vm587, %v1542, 0
    %1624 = vmatprep.subr.mxu0 0.0
    %1625 = vmatpush1.xpose.msra.mxu0 %v1622
    %1626 = vmatprep.subr.mxu0 0.0
    %1627 = vmatpush1.xpose.msra.mxu0 0.0
    %1628 = vmatprep.subr.mxu0 0.0
    %1629 = vmatpush1.xpose.msra.mxu0 0.0
    %1630 = vmatprep.subr.mxu0 0.0
    %1631 = vmatpush1.xpose.msra.mxu0 0.0
    %1632 = vmatprep.subr.mxu0 0.0
    %1633 = vmatpush1.xpose.msra.mxu0 0.0
    %1634 = vmatprep.subr.mxu0 0.0
    %1635 = vmatpush1.xpose.msra.mxu0 0.0
    %1636 = vmatprep.subr.mxu0 0.0
    %1637 = vmatpush1.xpose.msra.mxu0 0.0
    %1638 = vmatprep.subr.mxu0 0.0
    %1639 = vmatpush1.xpose.msra.mxu0 0.0
    %1640 = vmatprep.subr.mxu0 0.0
    %1641 = vmatpush1.xpose.msra.mxu0 0.0
    %1642 = vmatprep.subr.mxu0 0.0
    %1643 = vmatpush1.xpose.msra.mxu0 0.0
    %1644 = vmatprep.subr.mxu0 0.0
    %1645 = vmatpush1.xpose.msra.mxu0 0.0
    %1646 = vmatprep.subr.mxu0 0.0
    %1647 = vmatpush1.xpose.msra.mxu0 0.0
    %1648 = vmatprep.subr.mxu0 0.0
    %1649 = vmatpush1.xpose.msra.mxu0 0.0
    %1650 = vmatprep.subr.mxu0 0.0
    %1651 = vmatpush1.xpose.msra.mxu0 0.0
    %1652 = vmatprep.subr.mxu0 0.0
    %1653 = vmatpush1.xpose.msra.mxu0 0.0
    %1654 = vmatprep.subr.mxu0 0.0
    %1655 = vmatpush1.xpose.msra.mxu0 0.0
    %1656 = vmatprep.subr.mxu0 0.0
    %1657 = vmatpush1.xpose.msra.mxu0 0.0
    %1658 = vmatprep.subr.mxu0 0.0
    %1659 = vmatpush1.xpose.msra.mxu0 0.0
    %1660 = vmatprep.subr.mxu0 0.0
    %1661 = vmatpush1.xpose.msra.mxu0 0.0
    %1662 = vmatprep.subr.mxu0 0.0
    %1663 = vmatpush1.xpose.msra.mxu0 0.0
    %1664 = vmatprep.subr.mxu0 0.0
    %1665 = vmatpush1.xpose.msra.mxu0 0.0
    %1666 = vmatprep.subr.mxu0 0.0
    %1667 = vmatpush1.xpose.msra.mxu0 0.0
    %1668 = vmatprep.subr.mxu0 0.0
    %1669 = vmatpush1.xpose.msra.mxu0 0.0
    %1670 = vmatprep.subr.mxu0 0.0
    %1671 = vmatpush1.xpose.msra.mxu0 0.0
    %1672 = vmatprep.subr.mxu0 0.0
    %1673 = vmatpush1.xpose.msra.mxu0 0.0
    %1674 = vmatprep.subr.mxu0 0.0
    %1675 = vmatpush1.xpose.msra.mxu0 0.0
    %1676 = vmatprep.subr.mxu0 0.0
    %1677 = vmatpush1.xpose.msra.mxu0 0.0
    %1678 = vmatprep.subr.mxu0 0.0
    %1679 = vmatpush1.xpose.msra.mxu0 0.0
    %1680 = vmatprep.subr.mxu0 0.0
    %1681 = vmatpush1.xpose.msra.mxu0 0.0
    %1682 = vmatprep.subr.mxu0 0.0
    %1683 = vmatpush1.xpose.msra.mxu0 0.0
    %1684 = vmatprep.subr.mxu0 0.0
    %1685 = vmatpush1.xpose.msra.mxu0 0.0
    %1686 = vmatprep.subr.mxu0 0.0
    %1687 = vmatpush1.xpose.msra.mxu0 0.0
    %1688 = vmatprep.mubr.f32.mxu0 0.0
    %1689 = vmatmul.mubr.f32.gmra.mrb[0].mxu0 %v1616
    %v1690 = vpop.f32.mrb[0].mxu0
    %v1691 = vadd.f32 0.0, %v1690
    %v1692 = vpop.f32.mrb[0].mxu0
    %1693 = vmatprep.mubr.f32.mxu0 0.0
    %1694 = vmatmul.mubr.f32.gmra.mrb[0].mxu0 %v1619
    %v1695 = vpop.f32.mrb[0].mxu0
    %v1696 = vadd.f32 0.0, %v1695
    %v1697 = vpop.f32.mrb[0].mxu0
    %1698 = vdwg.mxu0
    %v1699 = vsel %vm587, %v1691, -inf
    %1700 = vmax.xlane.f32.xlu0 %v1699
    %v1701 = vpop.xlane.xlu0 %1700
    %v1702 = vsel %vm587, %v1696, -inf
    %1703 = vmax.xlane.f32.xlu0 %v1702
    %v1704 = vpop.xlane.xlu0 %1703
    %v1705 = vsub.f32 %v1691, %v1701
    %v1706 = vsub.f32 %v1696, %v1704
    %v1707 = vmul.f32 %v1705, 1.442695
    %v1708 = vpow.pop %v1707
    %v1709 = vmul.f32 %v1706, 1.442695
    %v1710 = vpow.pop %v1709
    %v1711 = vsel %vm587, %v1708, 0.0
    %1712 = vadd.xlane.f32.xlu0 %v1711
    %v1713 = vpop.xlane.xlu0 %1712
    %v1714 = vsel %vm587, %v1710, 0.0
    %1715 = vadd.xlane.f32.xlu0 %v1714
    %v1716 = vpop.xlane.xlu0 %1715
    %v1717 = vrcp.pop %v1713
    %v1718 = vmul.f32 %v1708, %v1717
    %v1719 = vrcp.pop %v1716
    %v1720 = vmul.f32 %v1710, %v1719
    %v1722 = vsel %vm587, %v1718, 0
    %v1725 = vsel %vm587, %v1720, 0
    %1727 = vmatprep.subr.mxu0 0.0
    %1728 = vmatpush1.msra.mxu0 %v1612
    %1729 = vmatprep.subr.mxu0 0.0
    %1730 = vmatpush1.msra.mxu0 0.0
    %1731 = vmatprep.subr.mxu0 0.0
    %1732 = vmatpush1.msra.mxu0 0.0
    %1733 = vmatprep.subr.mxu0 0.0
    %1734 = vmatpush1.msra.mxu0 0.0
    %1735 = vmatprep.subr.mxu0 0.0
    %1736 = vmatpush1.msra.mxu0 0.0
    %1737 = vmatprep.subr.mxu0 0.0
    %1738 = vmatpush1.msra.mxu0 0.0
    %1739 = vmatprep.subr.mxu0 0.0
    %1740 = vmatpush1.msra.mxu0 0.0
    %1741 = vmatprep.subr.mxu0 0.0
    %1742 = vmatpush1.msra.mxu0 0.0
    %1743 = vmatprep.subr.mxu0 0.0
    %1744 = vmatpush1.msra.mxu0 0.0
    %1745 = vmatprep.subr.mxu0 0.0
    %1746 = vmatpush1.msra.mxu0 0.0
    %1747 = vmatprep.subr.mxu0 0.0
    %1748 = vmatpush1.msra.mxu0 0.0
    %1749 = vmatprep.subr.mxu0 0.0
    %1750 = vmatpush1.msra.mxu0 0.0
    %1751 = vmatprep.subr.mxu0 0.0
    %1752 = vmatpush1.msra.mxu0 0.0
    %1753 = vmatprep.subr.mxu0 0.0
    %1754 = vmatpush1.msra.mxu0 0.0
    %1755 = vmatprep.subr.mxu0 0.0
    %1756 = vmatpush1.msra.mxu0 0.0
    %1757 = vmatprep.subr.mxu0 0.0
    %1758 = vmatpush1.msra.mxu0 0.0
    %1759 = vmatprep.subr.mxu0 0.0
    %1760 = vmatpush1.msra.mxu0 0.0
    %1761 = vmatprep.subr.mxu0 0.0
    %1762 = vmatpush1.msra.mxu0 0.0
    %1763 = vmatprep.subr.mxu0 0.0
    %1764 = vmatpush1.msra.mxu0 0.0
    %1765 = vmatprep.subr.mxu0 0.0
    %1766 = vmatpush1.msra.mxu0 0.0
    %1767 = vmatprep.subr.mxu0 0.0
    %1768 = vmatpush1.msra.mxu0 0.0
    %1769 = vmatprep.subr.mxu0 0.0
    %1770 = vmatpush1.msra.mxu0 0.0
    %1771 = vmatprep.subr.mxu0 0.0
    %1772 = vmatpush1.msra.mxu0 0.0
    %1773 = vmatprep.subr.mxu0 0.0
    %1774 = vmatpush1.msra.mxu0 0.0
    %1775 = vmatprep.subr.mxu0 0.0
    %1776 = vmatpush1.msra.mxu0 0.0
    %1777 = vmatprep.subr.mxu0 0.0
    %1778 = vmatpush1.msra.mxu0 0.0
    %1779 = vmatprep.subr.mxu0 0.0
    %1780 = vmatpush1.msra.mxu0 0.0
    %1781 = vmatprep.subr.mxu0 0.0
    %1782 = vmatpush1.msra.mxu0 0.0
    %1783 = vmatprep.subr.mxu0 0.0
    %1784 = vmatpush1.msra.mxu0 0.0
    %1785 = vmatprep.subr.mxu0 0.0
    %1786 = vmatpush1.msra.mxu0 0.0
    %1787 = vmatprep.subr.mxu0 0.0
    %1788 = vmatpush1.msra.mxu0 0.0
    %1789 = vmatprep.subr.mxu0 0.0
    %1790 = vmatpush1.msra.mxu0 0.0
    %1791 = vmatprep.mubr.f32.mxu0 0.0
    %1792 = vmatmul.mubr.f32.gmra.mrb[0].mxu0 %v1722
    %v1793 = vpop.f32.mrb[0].mxu0
    %v1794 = vadd.f32 0.0, %v1793
    %v1795 = vpop.f32.mrb[0].mxu0
    %1796 = vmatprep.mubr.f32.mxu0 0.0
    %1797 = vmatmul.mubr.f32.gmra.mrb[0].mxu0 %v1725
    %v1798 = vpop.f32.mrb[0].mxu0
    %v1799 = vadd.f32 0.0, %v1798
    %v1800 = vpop.f32.mrb[0].mxu0
    %1801 = vdwg.mxu0
    %1802 = vrot.lane.b32.xlu0 %v250, 120
    %v1803 = vpop.permute.xlu0 %1802
    %1804 = vrot.lane.b32.xlu0 %v255, 120
    %v1805 = vpop.permute.xlu0 %1804
    %1806 = vrot.lane.b32.xlu0 %v1542, 120
    %v1807 = vpop.permute.xlu0 %1806
    %v1808 = vsel %vm587, %v1803, 0
    %v1810 = vsel %vm587, %v1805, 0
    %v1812 = vsel %vm587, %v1807, 0
    %1814 = vmatprep.subr.mxu0 0.0
    %1815 = vmatpush1.xpose.msra.mxu0 %v1812
    %1816 = vmatprep.subr.mxu0 0.0
    %1817 = vmatpush1.xpose.msra.mxu0 0.0
    %1818 = vmatprep.subr.mxu0 0.0
    %1819 = vmatpush1.xpose.msra.mxu0 0.0
    %1820 = vmatprep.subr.mxu0 0.0
    %1821 = vmatpush1.xpose.msra.mxu0 0.0
    %1822 = vmatprep.subr.mxu0 0.0
    %1823 = vmatpush1.xpose.msra.mxu0 0.0
    %1824 = vmatprep.subr.mxu0 0.0
    %1825 = vmatpush1.xpose.msra.mxu0 0.0
    %1826 = vmatprep.subr.mxu0 0.0
    %1827 = vmatpush1.xpose.msra.mxu0 0.0
    %1828 = vmatprep.subr.mxu0 0.0
    %1829 = vmatpush1.xpose.msra.mxu0 0.0
    %1830 = vmatprep.subr.mxu0 0.0
    %1831 = vmatpush1.xpose.msra.mxu0 0.0
    %1832 = vmatprep.subr.mxu0 0.0
    %1833 = vmatpush1.xpose.msra.mxu0 0.0
    %1834 = vmatprep.subr.mxu0 0.0
    %1835 = vmatpush1.xpose.msra.mxu0 0.0
    %1836 = vmatprep.subr.mxu0 0.0
    %1837 = vmatpush1.xpose.msra.mxu0 0.0
    %1838 = vmatprep.subr.mxu0 0.0
    %1839 = vmatpush1.xpose.msra.mxu0 0.0
    %1840 = vmatprep.subr.mxu0 0.0
    %1841 = vmatpush1.xpose.msra.mxu0 0.0
    %1842 = vmatprep.subr.mxu0 0.0
    %1843 = vmatpush1.xpose.msra.mxu0 0.0
    %1844 = vmatprep.subr.mxu0 0.0
    %1845 = vmatpush1.xpose.msra.mxu0 0.0
    %1846 = vmatprep.subr.mxu0 0.0
    %1847 = vmatpush1.xpose.msra.mxu0 0.0
    %1848 = vmatprep.subr.mxu0 0.0
    %1849 = vmatpush1.xpose.msra.mxu0 0.0
    %1850 = vmatprep.subr.mxu0 0.0
    %1851 = vmatpush1.xpose.msra.mxu0 0.0
    %1852 = vmatprep.subr.mxu0 0.0
    %1853 = vmatpush1.xpose.msra.mxu0 0.0
    %1854 = vmatprep.subr.mxu0 0.0
    %1855 = vmatpush1.xpose.msra.mxu0 0.0
    %1856 = vmatprep.subr.mxu0 0.0
    %1857 = vmatpush1.xpose.msra.mxu0 0.0
    %1858 = vmatprep.subr.mxu0 0.0
    %1859 = vmatpush1.xpose.msra.mxu0 0.0
    %1860 = vmatprep.subr.mxu0 0.0
    %1861 = vmatpush1.xpose.msra.mxu0 0.0
    %1862 = vmatprep.subr.mxu0 0.0
    %1863 = vmatpush1.xpose.msra.mxu0 0.0
    %1864 = vmatprep.subr.mxu0 0.0
    %1865 = vmatpush1.xpose.msra.mxu0 0.0
    %1866 = vmatprep.subr.mxu0 0.0
    %1867 = vmatpush1.xpose.msra.mxu0 0.0
    %1868 = vmatprep.subr.mxu0 0.0
    %1869 = vmatpush1.xpose.msra.mxu0 0.0
    %1870 = vmatprep.subr.mxu0 0.0
    %1871 = vmatpush1.xpose.msra.mxu0 0.0
    %1872 = vmatprep.subr.mxu0 0.0
    %1873 = vmatpush1.xpose.msra.mxu0 0.0
    %1874 = vmatprep.subr.mxu0 0.0
    %1875 = vmatpush1.xpose.msra.mxu0 0.0
    %1876 = vmatprep.subr.mxu0 0.0
    %1877 = vmatpush1.xpose.msra.mxu0 0.0
    %1878 = vmatprep.mubr.f32.mxu0 0.0
    %1879 = vmatmul.mubr.f32.gmra.mrb[0].mxu0 %v1808
    %v1880 = vpop.f32.mrb[0].mxu0
    %v1881 = vadd.f32 0.0, %v1880
    %v1882 = vpop.f32.mrb[0].mxu0
    %1883 = vmatprep.mubr.f32.mxu0 0.0
    %1884 = vmatmul.mubr.f32.gmra.mrb[0].mxu0 %v1810
    %v1885 = vpop.f32.mrb[0].mxu0
    %v1886 = vadd.f32 0.0, %v1885
    %v1887 = vpop.f32.mrb[0].mxu0
    %1888 = vdwg.mxu0
    %v1889 = vsel %vm587, %v1881, -inf
    %1890 = vmax.xlane.f32.xlu0 %v1889
    %v1891 = vpop.xlane.xlu0 %1890
    %v1892 = vsel %vm587, %v1886, -inf
    %1893 = vmax.xlane.f32.xlu0 %v1892
    %v1894 = vpop.xlane.xlu0 %1893
    %v1895 = vsub.f32 %v1881, %v1891
    %v1896 = vsub.f32 %v1886, %v1894
    %v1897 = vmul.f32 %v1895, 1.442695
    %v1898 = vpow.pop %v1897
    %v1899 = vmul.f32 %v1896, 1.442695
    %v1900 = vpow.pop %v1899
    %v1901 = vsel %vm587, %v1898, 0.0
    %1902 = vadd.xlane.f32.xlu0 %v1901
    %v1903 = vpop.xlane.xlu0 %1902
    %v1904 = vsel %vm587, %v1900, 0.0
    %1905 = vadd.xlane.f32.xlu0 %v1904
    %v1906 = vpop.xlane.xlu0 %1905
    %v1907 = vrcp.pop %v1903
    %v1908 = vmul.f32 %v1898, %v1907
    %v1909 = vrcp.pop %v1906
    %v1910 = vmul.f32 %v1900, %v1909
    %1912 = vrot.lane.b32.xlu0 %v1612, 120
    %v1913 = vpop.permute.xlu0 %1912
    %v1916 = vsel %vm587, %v1908, 0
    %v1919 = vsel %vm587, %v1910, 0
    %1921 = vmatprep.subr.mxu0 0.0
    %1922 = vmatpush1.msra.mxu0 %v1913
    %1923 = vmatprep.subr.mxu0 0.0
    %1924 = vmatpush1.msra.mxu0 0.0
    %1925 = vmatprep.subr.mxu0 0.0
    %1926 = vmatpush1.msra.mxu0 0.0
    %1927 = vmatprep.subr.mxu0 0.0
    %1928 = vmatpush1.msra.mxu0 0.0
    %1929 = vmatprep.subr.mxu0 0.0
    %1930 = vmatpush1.msra.mxu0 0.0
    %1931 = vmatprep.subr.mxu0 0.0
    %1932 = vmatpush1.msra.mxu0 0.0
    %1933 = vmatprep.subr.mxu0 0.0
    %1934 = vmatpush1.msra.mxu0 0.0
    %1935 = vmatprep.subr.mxu0 0.0
    %1936 = vmatpush1.msra.mxu0 0.0
    %1937 = vmatprep.subr.mxu0 0.0
    %1938 = vmatpush1.msra.mxu0 0.0
    %1939 = vmatprep.subr.mxu0 0.0
    %1940 = vmatpush1.msra.mxu0 0.0
    %1941 = vmatprep.subr.mxu0 0.0
    %1942 = vmatpush1.msra.mxu0 0.0
    %1943 = vmatprep.subr.mxu0 0.0
    %1944 = vmatpush1.msra.mxu0 0.0
    %1945 = vmatprep.subr.mxu0 0.0
    %1946 = vmatpush1.msra.mxu0 0.0
    %1947 = vmatprep.subr.mxu0 0.0
    %1948 = vmatpush1.msra.mxu0 0.0
    %1949 = vmatprep.subr.mxu0 0.0
    %1950 = vmatpush1.msra.mxu0 0.0
    %1951 = vmatprep.subr.mxu0 0.0
    %1952 = vmatpush1.msra.mxu0 0.0
    %1953 = vmatprep.subr.mxu0 0.0
    %1954 = vmatpush1.msra.mxu0 0.0
    %1955 = vmatprep.subr.mxu0 0.0
    %1956 = vmatpush1.msra.mxu0 0.0
    %1957 = vmatprep.subr.mxu0 0.0
    %1958 = vmatpush1.msra.mxu0 0.0
    %1959 = vmatprep.subr.mxu0 0.0
    %1960 = vmatpush1.msra.mxu0 0.0
    %1961 = vmatprep.subr.mxu0 0.0
    %1962 = vmatpush1.msra.mxu0 0.0
    %1963 = vmatprep.subr.mxu0 0.0
    %1964 = vmatpush1.msra.mxu0 0.0
    %1965 = vmatprep.subr.mxu0 0.0
    %1966 = vmatpush1.msra.mxu0 0.0
    %1967 = vmatprep.subr.mxu0 0.0
    %1968 = vmatpush1.msra.mxu0 0.0
    %1969 = vmatprep.subr.mxu0 0.0
    %1970 = vmatpush1.msra.mxu0 0.0
    %1971 = vmatprep.subr.mxu0 0.0
    %1972 = vmatpush1.msra.mxu0 0.0
    %1973 = vmatprep.subr.mxu0 0.0
    %1974 = vmatpush1.msra.mxu0 0.0
    %1975 = vmatprep.subr.mxu0 0.0
    %1976 = vmatpush1.msra.mxu0 0.0
    %1977 = vmatprep.subr.mxu0 0.0
    %1978 = vmatpush1.msra.mxu0 0.0
    %1979 = vmatprep.subr.mxu0 0.0
    %1980 = vmatpush1.msra.mxu0 0.0
    %1981 = vmatprep.subr.mxu0 0.0
    %1982 = vmatpush1.msra.mxu0 0.0
    %1983 = vmatprep.subr.mxu0 0.0
    %1984 = vmatpush1.msra.mxu0 0.0
    %1985 = vmatprep.mubr.f32.mxu0 0.0
    %1986 = vmatmul.mubr.f32.gmra.mrb[0].mxu0 %v1916
    %v1987 = vpop.f32.mrb[0].mxu0
    %v1988 = vadd.f32 0.0, %v1987
    %v1989 = vpop.f32.mrb[0].mxu0
    %1990 = vmatprep.mubr.f32.mxu0 0.0
    %1991 = vmatmul.mubr.f32.gmra.mrb[0].mxu0 %v1919
    %v1992 = vpop.f32.mrb[0].mxu0
    %v1993 = vadd.f32 0.0, %v1992
    %v1994 = vpop.f32.mrb[0].mxu0
    %1995 = vdwg.mxu0
    %1996 = vrot.lane.b32.xlu0 %v250, 112
    %v1997 = vpop.permute.xlu0 %1996
    %1998 = vrot.lane.b32.xlu0 %v255, 112
    %v1999 = vpop.permute.xlu0 %1998
    %2000 = vrot.lane.b32.xlu0 %v1542, 112
    %v2001 = vpop.permute.xlu0 %2000
    %v2002 = vsel %vm587, %v1997, 0
    %v2004 = vsel %vm587, %v1999, 0
    %v2006 = vsel %vm587, %v2001, 0
    %2008 = vmatprep.subr.mxu0 0.0
    %2009 = vmatpush1.xpose.msra.mxu0 %v2006
    %2010 = vmatprep.subr.mxu0 0.0
    %2011 = vmatpush1.xpose.msra.mxu0 0.0
    %2012 = vmatprep.subr.mxu0 0.0
    %2013 = vmatpush1.xpose.msra.mxu0 0.0
    %2014 = vmatprep.subr.mxu0 0.0
    %2015 = vmatpush1.xpose.msra.mxu0 0.0
    %2016 = vmatprep.subr.mxu0 0.0
    %2017 = vmatpush1.xpose.msra.mxu0 0.0
    %2018 = vmatprep.subr.mxu0 0.0
    %2019 = vmatpush1.xpose.msra.mxu0 0.0
    %2020 = vmatprep.subr.mxu0 0.0
    %2021 = vmatpush1.xpose.msra.mxu0 0.0
    %2022 = vmatprep.subr.mxu0 0.0
    %2023 = vmatpush1.xpose.msra.mxu0 0.0
    %2024 = vmatprep.subr.mxu0 0.0
    %2025 = vmatpush1.xpose.msra.mxu0 0.0
    %2026 = vmatprep.subr.mxu0 0.0
    %2027 = vmatpush1.xpose.msra.mxu0 0.0
    %2028 = vmatprep.subr.mxu0 0.0
    %2029 = vmatpush1.xpose.msra.mxu0 0.0
    %2030 = vmatprep.subr.mxu0 0.0
    %2031 = vmatpush1.xpose.msra.mxu0 0.0
    %2032 = vmatprep.subr.mxu0 0.0
    %2033 = vmatpush1.xpose.msra.mxu0 0.0
    %2034 = vmatprep.subr.mxu0 0.0
    %2035 = vmatpush1.xpose.msra.mxu0 0.0
    %2036 = vmatprep.subr.mxu0 0.0
    %2037 = vmatpush1.xpose.msra.mxu0 0.0
    %2038 = vmatprep.subr.mxu0 0.0
    %2039 = vmatpush1.xpose.msra.mxu0 0.0
    %2040 = vmatprep.subr.mxu0 0.0
    %2041 = vmatpush1.xpose.msra.mxu0 0.0
    %2042 = vmatprep.subr.mxu0 0.0
    %2043 = vmatpush1.xpose.msra.mxu0 0.0
    %2044 = vmatprep.subr.mxu0 0.0
    %2045 = vmatpush1.xpose.msra.mxu0 0.0
    %2046 = vmatprep.subr.mxu0 0.0
    %2047 = vmatpush1.xpose.msra.mxu0 0.0
    %2048 = vmatprep.subr.mxu0 0.0
    %2049 = vmatpush1.xpose.msra.mxu0 0.0
    %2050 = vmatprep.subr.mxu0 0.0
    %2051 = vmatpush1.xpose.msra.mxu0 0.0
    %2052 = vmatprep.subr.mxu0 0.0
    %2053 = vmatpush1.xpose.msra.mxu0 0.0
    %2054 = vmatprep.subr.mxu0 0.0
    %2055 = vmatpush1.xpose.msra.mxu0 0.0
    %2056 = vmatprep.subr.mxu0 0.0
    %2057 = vmatpush1.xpose.msra.mxu0 0.0
    %2058 = vmatprep.subr.mxu0 0.0
    %2059 = vmatpush1.xpose.msra.mxu0 0.0
    %2060 = vmatprep.subr.mxu0 0.0
    %2061 = vmatpush1.xpose.msra.mxu0 0.0
    %2062 = vmatprep.subr.mxu0 0.0
    %2063 = vmatpush1.xpose.msra.mxu0 0.0
    %2064 = vmatprep.subr.mxu0 0.0
    %2065 = vmatpush1.xpose.msra.mxu0 0.0
    %2066 = vmatprep.subr.mxu0 0.0
    %2067 = vmatpush1.xpose.msra.mxu0 0.0
    %2068 = vmatprep.subr.mxu0 0.0
    %2069 = vmatpush1.xpose.msra.mxu0 0.0
    %2070 = vmatprep.subr.mxu0 0.0
    %2071 = vmatpush1.xpose.msra.mxu0 0.0
    %2072 = vmatprep.mubr.f32.mxu0 0.0
    %2073 = vmatmul.mubr.f32.gmra.mrb[0].mxu0 %v2002
    %v2074 = vpop.f32.mrb[0].mxu0
    %v2075 = vadd.f32 0.0, %v2074
    %v2076 = vpop.f32.mrb[0].mxu0
    %2077 = vmatprep.mubr.f32.mxu0 0.0
    %2078 = vmatmul.mubr.f32.gmra.mrb[0].mxu0 %v2004
    %v2079 = vpop.f32.mrb[0].mxu0
    %v2080 = vadd.f32 0.0, %v2079
    %v2081 = vpop.f32.mrb[0].mxu0
    %2082 = vdwg.mxu0
    %v2083 = vsel %vm587, %v2075, -inf
    %2084 = vmax.xlane.f32.xlu0 %v2083
    %v2085 = vpop.xlane.xlu0 %2084
    %v2086 = vsel %vm587, %v2080, -inf
    %2087 = vmax.xlane.f32.xlu0 %v2086
    %v2088 = vpop.xlane.xlu0 %2087
    %v2089 = vsub.f32 %v2075, %v2085
    %v2090 = vsub.f32 %v2080, %v2088
    %v2091 = vmul.f32 %v2089, 1.442695
    %v2092 = vpow.pop %v2091
    %v2093 = vmul.f32 %v2090, 1.442695
    %v2094 = vpow.pop %v2093
    %v2095 = vsel %vm587, %v2092, 0.0
    %2096 = vadd.xlane.f32.xlu0 %v2095
    %v2097 = vpop.xlane.xlu0 %2096
    %v2098 = vsel %vm587, %v2094, 0.0
    %2099 = vadd.xlane.f32.xlu0 %v2098
    %v2100 = vpop.xlane.xlu0 %2099
    %v2101 = vrcp.pop %v2097
    %v2102 = vmul.f32 %v2092, %v2101
    %v2103 = vrcp.pop %v2100
    %v2104 = vmul.f32 %v2094, %v2103
    %2105 = vrot.lane.b32.xlu0 %v1612, 112
    %v2106 = vpop.permute.xlu0 %2105
    %v2109 = vsel %vm587, %v2102, 0
    %v2112 = vsel %vm587, %v2104, 0
    %2114 = vmatprep.subr.mxu0 0.0
    %2115 = vmatpush1.msra.mxu0 %v2106
    %2116 = vmatprep.subr.mxu0 0.0
    %2117 = vmatpush1.msra.mxu0 0.0
    %2118 = vmatprep.subr.mxu0 0.0
    %2119 = vmatpush1.msra.mxu0 0.0
    %2120 = vmatprep.subr.mxu0 0.0
    %2121 = vmatpush1.msra.mxu0 0.0
    %2122 = vmatprep.subr.mxu0 0.0
    %2123 = vmatpush1.msra.mxu0 0.0
    %2124 = vmatprep.subr.mxu0 0.0
    %2125 = vmatpush1.msra.mxu0 0.0
    %2126 = vmatprep.subr.mxu0 0.0
    %2127 = vmatpush1.msra.mxu0 0.0
    %2128 = vmatprep.subr.mxu0 0.0
    %2129 = vmatpush1.msra.mxu0 0.0
    %2130 = vmatprep.subr.mxu0 0.0
    %2131 = vmatpush1.msra.mxu0 0.0
    %2132 = vmatprep.subr.mxu0 0.0
    %2133 = vmatpush1.msra.mxu0 0.0
    %2134 = vmatprep.subr.mxu0 0.0
    %2135 = vmatpush1.msra.mxu0 0.0
    %2136 = vmatprep.subr.mxu0 0.0
    %2137 = vmatpush1.msra.mxu0 0.0
    %2138 = vmatprep.subr.mxu0 0.0
    %2139 = vmatpush1.msra.mxu0 0.0
    %2140 = vmatprep.subr.mxu0 0.0
    %2141 = vmatpush1.msra.mxu0 0.0
    %2142 = vmatprep.subr.mxu0 0.0
    %2143 = vmatpush1.msra.mxu0 0.0
    %2144 = vmatprep.subr.mxu0 0.0
    %2145 = vmatpush1.msra.mxu0 0.0
    %2146 = vmatprep.subr.mxu0 0.0
    %2147 = vmatpush1.msra.mxu0 0.0
    %2148 = vmatprep.subr.mxu0 0.0
    %2149 = vmatpush1.msra.mxu0 0.0
    %2150 = vmatprep.subr.mxu0 0.0
    %2151 = vmatpush1.msra.mxu0 0.0
    %2152 = vmatprep.subr.mxu0 0.0
    %2153 = vmatpush1.msra.mxu0 0.0
    %2154 = vmatprep.subr.mxu0 0.0
    %2155 = vmatpush1.msra.mxu0 0.0
    %2156 = vmatprep.subr.mxu0 0.0
    %2157 = vmatpush1.msra.mxu0 0.0
    %2158 = vmatprep.subr.mxu0 0.0
    %2159 = vmatpush1.msra.mxu0 0.0
    %2160 = vmatprep.subr.mxu0 0.0
    %2161 = vmatpush1.msra.mxu0 0.0
    %2162 = vmatprep.subr.mxu0 0.0
    %2163 = vmatpush1.msra.mxu0 0.0
    %2164 = vmatprep.subr.mxu0 0.0
    %2165 = vmatpush1.msra.mxu0 0.0
    %2166 = vmatprep.subr.mxu0 0.0
    %2167 = vmatpush1.msra.mxu0 0.0
    %2168 = vmatprep.subr.mxu0 0.0
    %2169 = vmatpush1.msra.mxu0 0.0
    %2170 = vmatprep.subr.mxu0 0.0
    %2171 = vmatpush1.msra.mxu0 0.0
    %2172 = vmatprep.subr.mxu0 0.0
    %2173 = vmatpush1.msra.mxu0 0.0
    %2174 = vmatprep.subr.mxu0 0.0
    %2175 = vmatpush1.msra.mxu0 0.0
    %2176 = vmatprep.subr.mxu0 0.0
    %2177 = vmatpush1.msra.mxu0 0.0
    %2178 = vmatprep.mubr.f32.mxu0 0.0
    %2179 = vmatmul.mubr.f32.gmra.mrb[0].mxu0 %v2109
    %v2180 = vpop.f32.mrb[0].mxu0
    %v2181 = vadd.f32 0.0, %v2180
    %v2182 = vpop.f32.mrb[0].mxu0
    %2183 = vmatprep.mubr.f32.mxu0 0.0
    %2184 = vmatmul.mubr.f32.gmra.mrb[0].mxu0 %v2112
    %v2185 = vpop.f32.mrb[0].mxu0
    %v2186 = vadd.f32 0.0, %v2185
    %v2187 = vpop.f32.mrb[0].mxu0
    %2188 = vdwg.mxu0
    %2189 = vrot.lane.b32.xlu0 %v250, 104
    %v2190 = vpop.permute.xlu0 %2189
    %2191 = vrot.lane.b32.xlu0 %v255, 104
    %v2192 = vpop.permute.xlu0 %2191
    %2193 = vrot.lane.b32.xlu0 %v1542, 104
    %v2194 = vpop.permute.xlu0 %2193
    %v2195 = vsel %vm587, %v2190, 0
    %v2197 = vsel %vm587, %v2192, 0
    %v2199 = vsel %vm587, %v2194, 0
    %2201 = vmatprep.subr.mxu0 0.0
    %2202 = vmatpush1.xpose.msra.mxu0 %v2199
    %2203 = vmatprep.subr.mxu0 0.0
    %2204 = vmatpush1.xpose.msra.mxu0 0.0
    %2205 = vmatprep.subr.mxu0 0.0
    %2206 = vmatpush1.xpose.msra.mxu0 0.0
    %2207 = vmatprep.subr.mxu0 0.0
    %2208 = vmatpush1.xpose.msra.mxu0 0.0
    %2209 = vmatprep.subr.mxu0 0.0
    %2210 = vmatpush1.xpose.msra.mxu0 0.0
    %2211 = vmatprep.subr.mxu0 0.0
    %2212 = vmatpush1.xpose.msra.mxu0 0.0
    %2213 = vmatprep.subr.mxu0 0.0
    %2214 = vmatpush1.xpose.msra.mxu0 0.0
    %2215 = vmatprep.subr.mxu0 0.0
    %2216 = vmatpush1.xpose.msra.mxu0 0.0
    %2217 = vmatprep.subr.mxu0 0.0
    %2218 = vmatpush1.xpose.msra.mxu0 0.0
    %2219 = vmatprep.subr.mxu0 0.0
    %2220 = vmatpush1.xpose.msra.mxu0 0.0
    %2221 = vmatprep.subr.mxu0 0.0
    %2222 = vmatpush1.xpose.msra.mxu0 0.0
    %2223 = vmatprep.subr.mxu0 0.0
    %2224 = vmatpush1.xpose.msra.mxu0 0.0
    %2225 = vmatprep.subr.mxu0 0.0
    %2226 = vmatpush1.xpose.msra.mxu0 0.0
    %2227 = vmatprep.subr.mxu0 0.0
    %2228 = vmatpush1.xpose.msra.mxu0 0.0
    %2229 = vmatprep.subr.mxu0 0.0
    %2230 = vmatpush1.xpose.msra.mxu0 0.0
    %2231 = vmatprep.subr.mxu0 0.0
    %2232 = vmatpush1.xpose.msra.mxu0 0.0
    %2233 = vmatprep.subr.mxu0 0.0
    %2234 = vmatpush1.xpose.msra.mxu0 0.0
    %2235 = vmatprep.subr.mxu0 0.0
    %2236 = vmatpush1.xpose.msra.mxu0 0.0
    %2237 = vmatprep.subr.mxu0 0.0
    %2238 = vmatpush1.xpose.msra.mxu0 0.0
    %2239 = vmatprep.subr.mxu0 0.0
    %2240 = vmatpush1.xpose.msra.mxu0 0.0
    %2241 = vmatprep.subr.mxu0 0.0
    %2242 = vmatpush1.xpose.msra.mxu0 0.0
    %2243 = vmatprep.subr.mxu0 0.0
    %2244 = vmatpush1.xpose.msra.mxu0 0.0
    %2245 = vmatprep.subr.mxu0 0.0
    %2246 = vmatpush1.xpose.msra.mxu0 0.0
    %2247 = vmatprep.subr.mxu0 0.0
    %2248 = vmatpush1.xpose.msra.mxu0 0.0
    %2249 = vmatprep.subr.mxu0 0.0
    %2250 = vmatpush1.xpose.msra.mxu0 0.0
    %2251 = vmatprep.subr.mxu0 0.0
    %2252 = vmatpush1.xpose.msra.mxu0 0.0
    %2253 = vmatprep.subr.mxu0 0.0
    %2254 = vmatpush1.xpose.msra.mxu0 0.0
    %2255 = vmatprep.subr.mxu0 0.0
    %2256 = vmatpush1.xpose.msra.mxu0 0.0
    %2257 = vmatprep.subr.mxu0 0.0
    %2258 = vmatpush1.xpose.msra.mxu0 0.0
    %2259 = vmatprep.subr.mxu0 0.0
    %2260 = vmatpush1.xpose.msra.mxu0 0.0
    %2261 = vmatprep.subr.mxu0 0.0
    %2262 = vmatpush1.xpose.msra.mxu0 0.0
    %2263 = vmatprep.subr.mxu0 0.0
    %2264 = vmatpush1.xpose.msra.mxu0 0.0
    %2265 = vmatprep.mubr.f32.mxu0 0.0
    %2266 = vmatmul.mubr.f32.gmra.mrb[0].mxu0 %v2195
    %v2267 = vpop.f32.mrb[0].mxu0
    %v2268 = vadd.f32 0.0, %v2267
    %v2269 = vpop.f32.mrb[0].mxu0
    %2270 = vmatprep.mubr.f32.mxu0 0.0
    %2271 = vmatmul.mubr.f32.gmra.mrb[0].mxu0 %v2197
    %v2272 = vpop.f32.mrb[0].mxu0
    %v2273 = vadd.f32 0.0, %v2272
    %v2274 = vpop.f32.mrb[0].mxu0
    %2275 = vdwg.mxu0
    %v2276 = vsel %vm587, %v2268, -inf
    %2277 = vmax.xlane.f32.xlu0 %v2276
    %v2278 = vpop.xlane.xlu0 %2277
    %v2279 = vsel %vm587, %v2273, -inf
    %2280 = vmax.xlane.f32.xlu0 %v2279
    %v2281 = vpop.xlane.xlu0 %2280
    %v2282 = vsub.f32 %v2268, %v2278
    %v2283 = vsub.f32 %v2273, %v2281
    %v2284 = vmul.f32 %v2282, 1.442695
    %v2285 = vpow.pop %v2284
    %v2286 = vmul.f32 %v2283, 1.442695
    %v2287 = vpow.pop %v2286
    %v2288 = vsel %vm587, %v2285, 0.0
    %2289 = vadd.xlane.f32.xlu0 %v2288
    %v2290 = vpop.xlane.xlu0 %2289
    %v2291 = vsel %vm587, %v2287, 0.0
    %2292 = vadd.xlane.f32.xlu0 %v2291
    %v2293 = vpop.xlane.xlu0 %2292
    %v2294 = vrcp.pop %v2290
    %v2295 = vmul.f32 %v2285, %v2294
    %v2296 = vrcp.pop %v2293
    %v2297 = vmul.f32 %v2287, %v2296
    %2298 = vrot.lane.b32.xlu0 %v1612, 104
    %v2299 = vpop.permute.xlu0 %2298
    %v2302 = vsel %vm587, %v2295, 0
    %v2305 = vsel %vm587, %v2297, 0
    %2307 = vmatprep.subr.mxu0 0.0
    %2308 = vmatpush1.msra.mxu0 %v2299
    %2309 = vmatprep.subr.mxu0 0.0
    %2310 = vmatpush1.msra.mxu0 0.0
    %2311 = vmatprep.subr.mxu0 0.0
    %2312 = vmatpush1.msra.mxu0 0.0
    %2313 = vmatprep.subr.mxu0 0.0
    %2314 = vmatpush1.msra.mxu0 0.0
    %2315 = vmatprep.subr.mxu0 0.0
    %2316 = vmatpush1.msra.mxu0 0.0
    %2317 = vmatprep.subr.mxu0 0.0
    %2318 = vmatpush1.msra.mxu0 0.0
    %2319 = vmatprep.subr.mxu0 0.0
    %2320 = vmatpush1.msra.mxu0 0.0
    %2321 = vmatprep.subr.mxu0 0.0
    %2322 = vmatpush1.msra.mxu0 0.0
    %2323 = vmatprep.subr.mxu0 0.0
    %2324 = vmatpush1.msra.mxu0 0.0
    %2325 = vmatprep.subr.mxu0 0.0
    %2326 = vmatpush1.msra.mxu0 0.0
    %2327 = vmatprep.subr.mxu0 0.0
    %2328 = vmatpush1.msra.mxu0 0.0
    %2329 = vmatprep.subr.mxu0 0.0
    %2330 = vmatpush1.msra.mxu0 0.0
    %2331 = vmatprep.subr.mxu0 0.0
    %2332 = vmatpush1.msra.mxu0 0.0
    %2333 = vmatprep.subr.mxu0 0.0
    %2334 = vmatpush1.msra.mxu0 0.0
    %2335 = vmatprep.subr.mxu0 0.0
    %2336 = vmatpush1.msra.mxu0 0.0
    %2337 = vmatprep.subr.mxu0 0.0
    %2338 = vmatpush1.msra.mxu0 0.0
    %2339 = vmatprep.subr.mxu0 0.0
    %2340 = vmatpush1.msra.mxu0 0.0
    %2341 = vmatprep.subr.mxu0 0.0
    %2342 = vmatpush1.msra.mxu0 0.0
    %2343 = vmatprep.subr.mxu0 0.0
    %2344 = vmatpush1.msra.mxu0 0.0
    %2345 = vmatprep.subr.mxu0 0.0
    %2346 = vmatpush1.msra.mxu0 0.0
    %2347 = vmatprep.subr.mxu0 0.0
    %2348 = vmatpush1.msra.mxu0 0.0
    %2349 = vmatprep.subr.mxu0 0.0
    %2350 = vmatpush1.msra.mxu0 0.0
    %2351 = vmatprep.subr.mxu0 0.0
    %2352 = vmatpush1.msra.mxu0 0.0
    %2353 = vmatprep.subr.mxu0 0.0
    %2354 = vmatpush1.msra.mxu0 0.0
    %2355 = vmatprep.subr.mxu0 0.0
    %2356 = vmatpush1.msra.mxu0 0.0
    %2357 = vmatprep.subr.mxu0 0.0
    %2358 = vmatpush1.msra.mxu0 0.0
    %2359 = vmatprep.subr.mxu0 0.0
    %2360 = vmatpush1.msra.mxu0 0.0
    %2361 = vmatprep.subr.mxu0 0.0
    %2362 = vmatpush1.msra.mxu0 0.0
    %2363 = vmatprep.subr.mxu0 0.0
    %2364 = vmatpush1.msra.mxu0 0.0
    %2365 = vmatprep.subr.mxu0 0.0
    %2366 = vmatpush1.msra.mxu0 0.0
    %2367 = vmatprep.subr.mxu0 0.0
    %2368 = vmatpush1.msra.mxu0 0.0
    %2369 = vmatprep.subr.mxu0 0.0
    %2370 = vmatpush1.msra.mxu0 0.0
    %2371 = vmatprep.mubr.f32.mxu0 0.0
    %2372 = vmatmul.mubr.f32.gmra.mrb[0].mxu0 %v2302
    %v2373 = vpop.f32.mrb[0].mxu0
    %v2374 = vadd.f32 0.0, %v2373
    %v2375 = vpop.f32.mrb[0].mxu0
    %2376 = vmatprep.mubr.f32.mxu0 0.0
    %2377 = vmatmul.mubr.f32.gmra.mrb[0].mxu0 %v2305
    %v2378 = vpop.f32.mrb[0].mxu0
    %v2379 = vadd.f32 0.0, %v2378
    %v2380 = vpop.f32.mrb[0].mxu0
    %2381 = vdwg.mxu0
    %2384 = vrot.lane.b32.xlu0 %v1988, 8
    %v2385 = vpop.permute.xlu0 %2384
    %2386 = vrot.lane.b32.xlu0 %v1993, 8
    %v2387 = vpop.permute.xlu0 %2386
    %2392 = vrot.lane.b32.xlu0 %v2181, 16
    %v2393 = vpop.permute.xlu0 %2392
    %2394 = vrot.lane.b32.xlu0 %v2186, 16
    %v2395 = vpop.permute.xlu0 %2394
    %2400 = vrot.lane.b32.xlu0 %v2374, 24
    %v2401 = vpop.permute.xlu0 %2400
    %2402 = vrot.lane.b32.xlu0 %v2379, 24
    %v2403 = vpop.permute.xlu0 %2402
    %v2406 = vsel %vm587, %v1794, %v2385
    %v2407 = vsel %vm587, %v1799, %v2387
    %v2408 = vsel %vm440, %v2406, %v2393
    %v2409 = vsel %vm440, %v2407, %v2395
    %v2410 = vsel %vm1383, %v2408, %v2401
    %v2411 = vsel %vm1383, %v2409, %v2403
    %v2413 = vsel %vm160, %v2410, 0
    %v2416 = vsel %vm160, %v2411, 0
    %2418 = vmatprep.subr.mxu0 0.0
    %2419 = vmatpush1.msra.mxu0 %v140
    %2420 = vmatprep.subr.mxu0 0.0
    %2421 = vmatpush1.msra.mxu0 %v141
    %2422 = vmatprep.subr.mxu0 0.0
    %2423 = vmatpush1.msra.mxu0 %v142
    %2424 = vmatprep.subr.mxu0 0.0
    %2425 = vmatpush1.msra.mxu0 %v143
    %2426 = vmatprep.subr.mxu0 0.0
    %2427 = vmatpush1.msra.mxu0 0.0
    %2428 = vmatprep.subr.mxu0 0.0
    %2429 = vmatpush1.msra.mxu0 0.0
    %2430 = vmatprep.subr.mxu0 0.0
    %2431 = vmatpush1.msra.mxu0 0.0
    %2432 = vmatprep.subr.mxu0 0.0
    %2433 = vmatpush1.msra.mxu0 0.0
    %2434 = vmatprep.subr.mxu0 0.0
    %2435 = vmatpush1.msra.mxu0 0.0
    %2436 = vmatprep.subr.mxu0 0.0
    %2437 = vmatpush1.msra.mxu0 0.0
    %2438 = vmatprep.subr.mxu0 0.0
    %2439 = vmatpush1.msra.mxu0 0.0
    %2440 = vmatprep.subr.mxu0 0.0
    %2441 = vmatpush1.msra.mxu0 0.0
    %2442 = vmatprep.subr.mxu0 0.0
    %2443 = vmatpush1.msra.mxu0 0.0
    %2444 = vmatprep.subr.mxu0 0.0
    %2445 = vmatpush1.msra.mxu0 0.0
    %2446 = vmatprep.subr.mxu0 0.0
    %2447 = vmatpush1.msra.mxu0 0.0
    %2448 = vmatprep.subr.mxu0 0.0
    %2449 = vmatpush1.msra.mxu0 0.0
    %2450 = vmatprep.subr.mxu0 0.0
    %2451 = vmatpush1.msra.mxu0 0.0
    %2452 = vmatprep.subr.mxu0 0.0
    %2453 = vmatpush1.msra.mxu0 0.0
    %2454 = vmatprep.subr.mxu0 0.0
    %2455 = vmatpush1.msra.mxu0 0.0
    %2456 = vmatprep.subr.mxu0 0.0
    %2457 = vmatpush1.msra.mxu0 0.0
    %2458 = vmatprep.subr.mxu0 0.0
    %2459 = vmatpush1.msra.mxu0 0.0
    %2460 = vmatprep.subr.mxu0 0.0
    %2461 = vmatpush1.msra.mxu0 0.0
    %2462 = vmatprep.subr.mxu0 0.0
    %2463 = vmatpush1.msra.mxu0 0.0
    %2464 = vmatprep.subr.mxu0 0.0
    %2465 = vmatpush1.msra.mxu0 0.0
    %2466 = vmatprep.subr.mxu0 0.0
    %2467 = vmatpush1.msra.mxu0 0.0
    %2468 = vmatprep.subr.mxu0 0.0
    %2469 = vmatpush1.msra.mxu0 0.0
    %2470 = vmatprep.subr.mxu0 0.0
    %2471 = vmatpush1.msra.mxu0 0.0
    %2472 = vmatprep.subr.mxu0 0.0
    %2473 = vmatpush1.msra.mxu0 0.0
    %2474 = vmatprep.subr.mxu0 0.0
    %2475 = vmatpush1.msra.mxu0 0.0
    %2476 = vmatprep.subr.mxu0 0.0
    %2477 = vmatpush1.msra.mxu0 0.0
    %2478 = vmatprep.subr.mxu0 0.0
    %2479 = vmatpush1.msra.mxu0 0.0
    %2480 = vmatprep.subr.mxu0 0.0
    %2481 = vmatpush1.msra.mxu0 0.0
    %2482 = vmatprep.mubr.f32.mxu0 0.0
    %2483 = vmatmul.mubr.f32.gmra.mrb[0].mxu0 %v2413
    %v2484 = vpop.f32.mrb[0].mxu0
    %v2485 = vadd.f32 %v1390, %v2484
    %v2486 = vpop.f32.mrb[0].mxu0
    %2487 = vmatprep.mubr.f32.mxu0 0.0
    %2488 = vmatmul.mubr.f32.gmra.mrb[0].mxu0 %v2416
    %v2489 = vpop.f32.mrb[0].mxu0
    %v2490 = vadd.f32 %v1390, %v2489
    %v2491 = vpop.f32.mrb[0].mxu0
    %2492 = vdwg.mxu0
    %s2493 = scalar_lea.vmem [#allocation14], 16
    %2494 = vst.msk [vmem:[%s2493] sm:$0xff] %vm160, %v2485
    %2495 = vst.msk [vmem:[%s2493 + $0x8] sm:$0xff] %vm160, %v2490
    // Predicated region
    $region74: #{tpu_custom_call.1} parent=1 // pred_check
      _
    $region75: #{tpu_custom_call.1} parent=1 // pred_check_branch
      %2497 = sbr.rel (0) target = $region77
    $region76: #{tpu_custom_call.1} parent=1 // pred_region
      %s2499 = ssub.s32 512, 512
      %2500 = vsyncadd [#allocation4], %s2499
      %s2501 = sshll.u32 [#allocation14], 4
      %s2502 = int_to_ptr.vmem [resolvable:$true] %s2501
      %2507 = dma.vmem_to_hbm [thread:$0]  %s2502, 512, %s11, [#allocation4], 128, 128, 8
    $region77: #{tpu_custom_call.1} parent=1 // pred_fallthru
      _
    // Predicated region
    $region78: #{tpu_custom_call.1} parent=1 // pred_check
      _
    $region79: #{tpu_custom_call.1} parent=1 // pred_check_branch
      %2509 = sbr.rel (0) target = $region81
    $region80: #{tpu_custom_call.1} parent=1 // pred_region
      %2510 = dma.done [#allocation4], 512
    $region81: #{tpu_custom_call.1} parent=1 // pred_fallthru
      _
    %2511 = vsyncpa [#allocation3], 1
    %2512 = vsyncpa [#allocation6], 1
    %2513 = vsyncpa [#allocation9], 1
    %2514 = vsyncpa [#allocation12], 1
    %2515 = vsyncpa [#allocation4], 1

// kernel: tpu_custom_call.1
$region0: #{tpu_custom_call.1}
  #allocation0 [shape = 'u32[]', space=smem, size = 0x4, offset = 0x4, fixed_abs, tag = 'smem constant byte address 0x4 - core index']
  #allocation1 [shape = 'u32[144,128]{1,0:T(1,128)}', space=vmem, size = 0x12000, scoped, tag = 'internal scratch']
  %s0 = inlined_call_operand.hbm [shape: f32[2,16,32], index: 0, kind: input, shape index: {}]
  %s1 = inlined_call_operand.hbm [shape: f32[32,32], index: 1, kind: input, shape index: {}]
  %s2 = inlined_call_operand.vmem [shape: f32[1,32], index: 2, kind: input, shape index: {}]
  %s3 = inlined_call_operand.hbm [shape: f32[32,32], index: 3, kind: input, shape index: {}]
  %s4 = inlined_call_operand.vmem [shape: f32[1,32], index: 4, kind: input, shape index: {}]
  %s5 = inlined_call_operand.hbm [shape: f32[32,32], index: 5, kind: input, shape index: {}]
  %s6 = inlined_call_operand.hbm [shape: f32[1,32], index: 6, kind: input, shape index: {}]
  %s7 = inlined_call_operand.hbm [shape: f32[8,16], index: 7, kind: input, shape index: {}]
  %s8 = inlined_call_operand.hbm [shape: f32[8,16], index: 8, kind: input, shape index: {}]
  %s9 = inlined_call_operand.vmem [shape: f32[32,32], index: 9, kind: input, shape index: {}]
  %s10 = inlined_call_operand.vmem [shape: f32[1,32], index: 10, kind: input, shape index: {}]
  %s11 = inlined_call_operand.hbm [shape: f32[2,16,32], index: 11, kind: output, shape index: {}]
  %s12 = sld [smem:[#allocation0]]
  $region82: #{tpu_custom_call.1} parent=0
    _
  %s14 = ssub.s32 1, %s12
  %s15 = scalar_select 0, %s14, %s12
  $region1: #{tpu_custom_call.1} parent=0
    #allocation2 [shape = 'u8[16384]{0}', space=vmem, size = 0x4000, scoped, tag = 'input window, operand 0, single buffered']
    #allocation3 [shape = 's32[1]{0}', space=sflag, size = 0x4, scoped, tag = 'scoped memory for tpu_custom_call.1']
    #allocation4 [shape = 's32[1]{0}', space=sflag, size = 0x4, scoped, tag = 'scoped memory for tpu_custom_call.1']
    #allocation5 [shape = 'u8[16384]{0}', space=vmem, size = 0x4000, scoped, tag = 'input window, operand 1, single buffered']
    #allocation6 [shape = 's32[1]{0}', space=sflag, size = 0x4, scoped, tag = 'scoped memory for tpu_custom_call.1']
    #allocation7 [shape = 'u8[16384]{0}', space=vmem, size = 0x4000, scoped, tag = 'input window, operand 3, single buffered']
    #allocation8 [shape = 'u8[16384]{0}', space=vmem, size = 0x4000, scoped, tag = 'input window, operand 5, single buffered']
    #allocation9 [shape = 's32[1]{0}', space=sflag, size = 0x4, scoped, tag = 'scoped memory for tpu_custom_call.1']
    #allocation10 [shape = 'u8[512]{0}', space=vmem, size = 0x400, scoped, tag = 'input window, operand 6, single buffered']
    #allocation11 [shape = 'u8[4096]{0}', space=vmem, size = 0x1000, scoped, tag = 'input window, operand 7, single buffered']
    #allocation12 [shape = 's32[1]{0}', space=sflag, size = 0x4, scoped, tag = 'scoped memory for tpu_custom_call.1']
    #allocation13 [shape = 'u8[4096]{0}', space=vmem, size = 0x1000, scoped, tag = 'input window, operand 8, single buffered']
    #allocation14 [shape = 'u8[16384]{0}', space=vmem, size = 0x4000, scoped, tag = 'output window, operand 0, single buffered']
    %16 = vsyncpa [#allocation3], 0
    %17 = vsyncpa [#allocation6], 0
    %18 = vsyncpa [#allocation9], 0
    %19 = vsyncpa [#allocation12], 0
    %20 = vsyncpa [#allocation4], 0
    // Predicated region
    $region2: #{tpu_custom_call.1} parent=1 // pred_check
      _
    $region3: #{tpu_custom_call.1} parent=1 // pred_check_branch
      %22 = sbr.rel (0) target = $region5
    $region4: #{tpu_custom_call.1} parent=1 // pred_region
      %s24 = ssub.s32 512, 512
      %25 = vsyncadd [#allocation3], %s24
      %s26 = sshll.u32 [#allocation2], 4
      %s27 = int_to_ptr.vmem [resolvable:$true] %s26
      %32 = dma.hbm_to_vmem [thread:$0]  %s0, 512, %s27, [#allocation3], 128, 128, 8
    $region5: #{tpu_custom_call.1} parent=1 // pred_fallthru
      _
    // Predicated region
    $region6: #{tpu_custom_call.1} parent=1 // pred_check
      _
    $region7: #{tpu_custom_call.1} parent=1 // pred_check_branch
      %34 = sbr.rel (0) target = $region9
    $region8: #{tpu_custom_call.1} parent=1 // pred_region
      %s36 = ssub.s32 512, 512
      %37 = vsyncadd [#allocation6], %s36
      %s38 = sshll.u32 [#allocation5], 4
      %s39 = int_to_ptr.vmem [resolvable:$true] %s38
      %44 = dma.hbm_to_vmem [thread:$0]  %s1, 512, %s39, [#allocation6], 128, 128, 8
    $region9: #{tpu_custom_call.1} parent=1 // pred_fallthru
      _
    // Predicated region
    $region10: #{tpu_custom_call.1} parent=1 // pred_check
      _
    $region11: #{tpu_custom_call.1} parent=1 // pred_check_branch
      %46 = sbr.rel (0) target = $region13
    $region12: #{tpu_custom_call.1} parent=1 // pred_region
      _
    $region13: #{tpu_custom_call.1} parent=1 // pred_fallthru
      _
    // Predicated region
    $region14: #{tpu_custom_call.1} parent=1 // pred_check
      _
    $region15: #{tpu_custom_call.1} parent=1 // pred_check_branch
      %48 = sbr.rel (0) target = $region17
    $region16: #{tpu_custom_call.1} parent=1 // pred_region
      %s50 = ssub.s32 512, 512
      %51 = vsyncadd [#allocation6], %s50
      %s52 = sshll.u32 [#allocation7], 4
      %s53 = int_to_ptr.vmem [resolvable:$true] %s52
      %58 = dma.hbm_to_vmem [thread:$0]  %s3, 512, %s53, [#allocation6], 128, 128, 8
    $region17: #{tpu_custom_call.1} parent=1 // pred_fallthru
      _
    // Predicated region
    $region18: #{tpu_custom_call.1} parent=1 // pred_check
      _
    $region19: #{tpu_custom_call.1} parent=1 // pred_check_branch
      %60 = sbr.rel (0) target = $region21
    $region20: #{tpu_custom_call.1} parent=1 // pred_region
      _
    $region21: #{tpu_custom_call.1} parent=1 // pred_fallthru
      _
    // Predicated region
    $region22: #{tpu_custom_call.1} parent=1 // pred_check
      _
    $region23: #{tpu_custom_call.1} parent=1 // pred_check_branch
      %62 = sbr.rel (0) target = $region25
    $region24: #{tpu_custom_call.1} parent=1 // pred_region
      %s64 = ssub.s32 512, 512
      %65 = vsyncadd [#allocation9], %s64
      %s66 = sshll.u32 [#allocation8], 4
      %s67 = int_to_ptr.vmem [resolvable:$true] %s66
      %72 = dma.hbm_to_vmem [thread:$0]  %s5, 512, %s67, [#allocation9], 128, 128, 8
    $region25: #{tpu_custom_call.1} parent=1 // pred_fallthru
      _
    // Predicated region
    $region26: #{tpu_custom_call.1} parent=1 // pred_check
      _
    $region27: #{tpu_custom_call.1} parent=1 // pred_check_branch
      %74 = sbr.rel (0) target = $region29
    $region28: #{tpu_custom_call.1} parent=1 // pred_region
      %s76 = ssub.s32 16, 16
      %77 = vsyncadd [#allocation9], %s76
      %s79 = sshll.u32 [#allocation10], 4
      %s80 = int_to_ptr.vmem [resolvable:$true] %s79
      %82 = dma.hbm_to_vmem [thread:$0]  %s6, 16, %s80, [#allocation9]
    $region29: #{tpu_custom_call.1} parent=1 // pred_fallthru
      _
    // Predicated region
    $region30: #{tpu_custom_call.1} parent=1 // pred_check
      _
    $region31: #{tpu_custom_call.1} parent=1 // pred_check_branch
      %84 = sbr.rel (0) target = $region33
    $region32: #{tpu_custom_call.1} parent=1 // pred_region
      %s86 = ssub.s32 128, 128
      %87 = vsyncadd [#allocation12], %s86
      %s89 = sshll.u32 [#allocation11], 4
      %s90 = int_to_ptr.vmem [resolvable:$true] %s89
      %92 = dma.hbm_to_vmem [thread:$0]  %s7, 128, %s90, [#allocation12]
    $region33: #{tpu_custom_call.1} parent=1 // pred_fallthru
      _
    // Predicated region
    $region34: #{tpu_custom_call.1} parent=1 // pred_check
      _
    $region35: #{tpu_custom_call.1} parent=1 // pred_check_branch
      %94 = sbr.rel (0) target = $region37
    $region36: #{tpu_custom_call.1} parent=1 // pred_region
      %s96 = ssub.s32 128, 128
      %97 = vsyncadd [#allocation12], %s96
      %s99 = sshll.u32 [#allocation13], 4
      %s100 = int_to_ptr.vmem [resolvable:$true] %s99
      %102 = dma.hbm_to_vmem [thread:$0]  %s8, 128, %s100, [#allocation12]
    $region37: #{tpu_custom_call.1} parent=1 // pred_fallthru
      _
    // Predicated region
    $region38: #{tpu_custom_call.1} parent=1 // pred_check
      _
    $region39: #{tpu_custom_call.1} parent=1 // pred_check_branch
      %104 = sbr.rel (0) target = $region41
    $region40: #{tpu_custom_call.1} parent=1 // pred_region
      _
    $region41: #{tpu_custom_call.1} parent=1 // pred_fallthru
      _
    // Predicated region
    $region42: #{tpu_custom_call.1} parent=1 // pred_check
      _
    $region43: #{tpu_custom_call.1} parent=1 // pred_check_branch
      %106 = sbr.rel (0) target = $region45
    $region44: #{tpu_custom_call.1} parent=1 // pred_region
      _
    $region45: #{tpu_custom_call.1} parent=1 // pred_fallthru
      _
    // Predicated region
    $region46: #{tpu_custom_call.1} parent=1 // pred_check
      _
    $region47: #{tpu_custom_call.1} parent=1 // pred_check_branch
      %108 = sbr.rel (0) target = $region49
    $region48: #{tpu_custom_call.1} parent=1 // pred_region
      %109 = dma.done [#allocation3], 512
    $region49: #{tpu_custom_call.1} parent=1 // pred_fallthru
      _
    // Predicated region
    $region50: #{tpu_custom_call.1} parent=1 // pred_check
      _
    $region51: #{tpu_custom_call.1} parent=1 // pred_check_branch
      %111 = sbr.rel (0) target = $region53
    $region52: #{tpu_custom_call.1} parent=1 // pred_region
      %112 = dma.done [#allocation6], 512
    $region53: #{tpu_custom_call.1} parent=1 // pred_fallthru
      _
    // Predicated region
    $region54: #{tpu_custom_call.1} parent=1 // pred_check
      _
    $region55: #{tpu_custom_call.1} parent=1 // pred_check_branch
      %114 = sbr.rel (0) target = $region57
    $region56: #{tpu_custom_call.1} parent=1 // pred_region
      %115 = dma.done [#allocation6], 512
    $region57: #{tpu_custom_call.1} parent=1 // pred_fallthru
      _
    // Predicated region
    $region58: #{tpu_custom_call.1} parent=1 // pred_check
      _
    $region59: #{tpu_custom_call.1} parent=1 // pred_check_branch
      %117 = sbr.rel (0) target = $region61
    $region60: #{tpu_custom_call.1} parent=1 // pred_region
      %118 = dma.done [#allocation9], 512
    $region61: #{tpu_custom_call.1} parent=1 // pred_fallthru
      _
    // Predicated region
    $region62: #{tpu_custom_call.1} parent=1 // pred_check
      _
    $region63: #{tpu_custom_call.1} parent=1 // pred_check_branch
      %120 = sbr.rel (0) target = $region65
    $region64: #{tpu_custom_call.1} parent=1 // pred_region
      %121 = dma.done [#allocation9], 16
    $region65: #{tpu_custom_call.1} parent=1 // pred_fallthru
      _
    // Predicated region
    $region66: #{tpu_custom_call.1} parent=1 // pred_check
      _
    $region67: #{tpu_custom_call.1} parent=1 // pred_check_branch
      %123 = sbr.rel (0) target = $region69
    $region68: #{tpu_custom_call.1} parent=1 // pred_region
      %124 = dma.done [#allocation12], 128
    $region69: #{tpu_custom_call.1} parent=1 // pred_fallthru
      _
    // Predicated region
    $region70: #{tpu_custom_call.1} parent=1 // pred_check
      _
    $region71: #{tpu_custom_call.1} parent=1 // pred_check_branch
      %126 = sbr.rel (0) target = $region73
    $region72: #{tpu_custom_call.1} parent=1 // pred_region
      %127 = dma.done [#allocation12], 128
    $region73: #{tpu_custom_call.1} parent=1 // pred_fallthru
      _
    %v128 = vld [vmem:[#allocation5] sm:$0xff]
    %v129 = vld [vmem:[#allocation5 + $0x8] sm:$0xff]
    %v130 = vld [vmem:[#allocation5 + $0x10] sm:$0xff]
    %v131 = vld [vmem:[#allocation5 + $0x18] sm:$0xff]
    %v132 = vld [vmem:[#allocation7] sm:$0xff]
    %v133 = vld [vmem:[#allocation7 + $0x8] sm:$0xff]
    %v134 = vld [vmem:[#allocation7 + $0x10] sm:$0xff]
    %v135 = vld [vmem:[#allocation7 + $0x18] sm:$0xff]
    %v136 = vld [vmem:[#allocation8] sm:$0xff]
    %v137 = vld [vmem:[#allocation8 + $0x8] sm:$0xff]
    %v138 = vld [vmem:[#allocation8 + $0x10] sm:$0xff]
    %v139 = vld [vmem:[#allocation8 + $0x18] sm:$0xff]
    %v140 = vld [vmem:[%s9] sm:$0xff]
    %v141 = vld [vmem:[%s9 + $0x8] sm:$0xff]
    %v142 = vld [vmem:[%s9 + $0x10] sm:$0xff]
    %v143 = vld [vmem:[%s9 + $0x18] sm:$0xff]
    %v144 = vld [vmem:[%s2] sm:$0x1]
    %v145 = vld [vmem:[%s4] sm:$0x1]
    %v146 = vld [vmem:[#allocation10] sm:$0x1]
    %v147 = vld [vmem:[%s10] sm:$0x1]
    %v148 = vld [vmem:[#allocation11] sm:$0xff]
    %v149 = vld [vmem:[#allocation13] sm:$0xff]
    %v150 = vld [vmem:[#allocation2] sm:$0xff]
    %v151 = vld [vmem:[#allocation2 + $0x8] sm:$0xff]
    %v152 = vld [vmem:[#allocation2 + $0x10] sm:$0xff]
    %v153 = vld [vmem:[#allocation2 + $0x18] sm:$0xff]
    %v155 = vlaneseq
    %v156 = vshrl.u32 %v155, 7
    %v157 = vsub.s32 0, %v156
    %v158 = vrot.slane %v144, %v157
    %vm160 = vcmask 261120
    %v162 = vsel %vm160, %v150, 0
    %v165 = vsel %vm160, %v151, 0
    %v168 = vsel %vm160, %v152, 0
    %v171 = vsel %vm160, %v153, 0
    %173 = vmatprep.subr.mxu0 0.0
    %174 = vmatpush1.msra.mxu0 %v128
    %175 = vmatprep.subr.mxu0 0.0
    %176 = vmatpush1.msra.mxu0 %v129
    %177 = vmatprep.subr.mxu0 0.0
    %178 = vmatpush1.msra.mxu0 %v130
    %179 = vmatprep.subr.mxu0 0.0
    %180 = vmatpush1.msra.mxu0 %v131
    %181 = vmatprep.subr.mxu0 0.0
    %182 = vmatpush1.msra.mxu0 0.0
    %183 = vmatprep.subr.mxu0 0.0
    %184 = vmatpush1.msra.mxu0 0.0
    %185 = vmatprep.subr.mxu0 0.0
    %186 = vmatpush1.msra.mxu0 0.0
    %187 = vmatprep.subr.mxu0 0.0
    %188 = vmatpush1.msra.mxu0 0.0
    %189 = vmatprep.subr.mxu0 0.0
    %190 = vmatpush1.msra.mxu0 0.0
    %191 = vmatprep.subr.mxu0 0.0
    %192 = vmatpush1.msra.mxu0 0.0
    %193 = vmatprep.subr.mxu0 0.0
    %194 = vmatpush1.msra.mxu0 0.0
    %195 = vmatprep.subr.mxu0 0.0
    %196 = vmatpush1.msra.mxu0 0.0
    %197 = vmatprep.subr.mxu0 0.0
    %198 = vmatpush1.msra.mxu0 0.0
    %199 = vmatprep.subr.mxu0 0.0
    %200 = vmatpush1.msra.mxu0 0.0
    %201 = vmatprep.subr.mxu0 0.0
    %202 = vmatpush1.msra.mxu0 0.0
    %203 = vmatprep.subr.mxu0 0.0
    %204 = vmatpush1.msra.mxu0 0.0
    %205 = vmatprep.subr.mxu0 0.0
    %206 = vmatpush1.msra.mxu0 0.0
    %207 = vmatprep.subr.mxu0 0.0
    %208 = vmatpush1.msra.mxu0 0.0
    %209 = vmatprep.subr.mxu0 0.0
    %210 = vmatpush1.msra.mxu0 0.0
    %211 = vmatprep.subr.mxu0 0.0
    %212 = vmatpush1.msra.mxu0 0.0
    %213 = vmatprep.subr.mxu0 0.0
    %214 = vmatpush1.msra.mxu0 0.0
    %215 = vmatprep.subr.mxu0 0.0
    %216 = vmatpush1.msra.mxu0 0.0
    %217 = vmatprep.subr.mxu0 0.0
    %218 = vmatpush1.msra.mxu0 0.0
    %219 = vmatprep.subr.mxu0 0.0
    %220 = vmatpush1.msra.mxu0 0.0
    %221 = vmatprep.subr.mxu0 0.0
    %222 = vmatpush1.msra.mxu0 0.0
    %223 = vmatprep.subr.mxu0 0.0
    %224 = vmatpush1.msra.mxu0 0.0
    %225 = vmatprep.subr.mxu0 0.0
    %226 = vmatpush1.msra.mxu0 0.0
    %227 = vmatprep.subr.mxu0 0.0
    %228 = vmatpush1.msra.mxu0 0.0
    %229 = vmatprep.subr.mxu0 0.0
    %230 = vmatpush1.msra.mxu0 0.0
    %231 = vmatprep.subr.mxu0 0.0
    %232 = vmatpush1.msra.mxu0 0.0
    %233 = vmatprep.subr.mxu0 0.0
    %234 = vmatpush1.msra.mxu0 0.0
    %235 = vmatprep.subr.mxu0 0.0
    %236 = vmatpush1.msra.mxu0 0.0
    %237 = vmatprep.mubr.f32.mxu0 0.0
    %238 = vmatmul.mubr.f32.gmra.mrb[0].mxu0 %v162
    %v239 = vpop.f32.mrb[0].mxu0
    %v240 = vadd.f32 %v158, %v239
    %v241 = vpop.f32.mrb[0].mxu0
    %242 = vmatprep.mubr.f32.mxu0 0.0
    %243 = vmatmul.mubr.f32.gmra.mrb[0].mxu0 %v165
    %v244 = vpop.f32.mrb[0].mxu0
    %v245 = vadd.f32 %v158, %v244
    %v246 = vpop.f32.mrb[0].mxu0
    %247 = vmatprep.mubr.f32.mxu0 0.0
    %248 = vmatmul.mubr.f32.gmra.mrb[0].mxu0 %v168
    %v249 = vpop.f32.mrb[0].mxu0
    %v250 = vadd.f32 %v158, %v249
    %v251 = vpop.f32.mrb[0].mxu0
    %252 = vmatprep.mubr.f32.mxu0 0.0
    %253 = vmatmul.mubr.f32.gmra.mrb[0].mxu0 %v171
    %v254 = vpop.f32.mrb[0].mxu0
    %v255 = vadd.f32 %v158, %v254
    %v256 = vpop.f32.mrb[0].mxu0
    %257 = vdwg.mxu0
    %v259 = vlaneseq
    %v260 = vshrl.u32 %v259, 7
    %v261 = vsub.s32 0, %v260
    %v262 = vrot.slane %v145, %v261
    %264 = vmatprep.subr.mxu0 0.0
    %265 = vmatpush1.msra.mxu0 %v132
    %266 = vmatprep.subr.mxu0 0.0
    %267 = vmatpush1.msra.mxu0 %v133
    %268 = vmatprep.subr.mxu0 0.0
    %269 = vmatpush1.msra.mxu0 %v134
    %270 = vmatprep.subr.mxu0 0.0
    %271 = vmatpush1.msra.mxu0 %v135
    %272 = vmatprep.subr.mxu0 0.0
    %273 = vmatpush1.msra.mxu0 0.0
    %274 = vmatprep.subr.mxu0 0.0
    %275 = vmatpush1.msra.mxu0 0.0
    %276 = vmatprep.subr.mxu0 0.0
    %277 = vmatpush1.msra.mxu0 0.0
    %278 = vmatprep.subr.mxu0 0.0
    %279 = vmatpush1.msra.mxu0 0.0
    %280 = vmatprep.subr.mxu0 0.0
    %281 = vmatpush1.msra.mxu0 0.0
    %282 = vmatprep.subr.mxu0 0.0
    %283 = vmatpush1.msra.mxu0 0.0
    %284 = vmatprep.subr.mxu0 0.0
    %285 = vmatpush1.msra.mxu0 0.0
    %286 = vmatprep.subr.mxu0 0.0
    %287 = vmatpush1.msra.mxu0 0.0
    %288 = vmatprep.subr.mxu0 0.0
    %289 = vmatpush1.msra.mxu0 0.0
    %290 = vmatprep.subr.mxu0 0.0
    %291 = vmatpush1.msra.mxu0 0.0
    %292 = vmatprep.subr.mxu0 0.0
    %293 = vmatpush1.msra.mxu0 0.0
    %294 = vmatprep.subr.mxu0 0.0
    %295 = vmatpush1.msra.mxu0 0.0
    %296 = vmatprep.subr.mxu0 0.0
    %297 = vmatpush1.msra.mxu0 0.0
    %298 = vmatprep.subr.mxu0 0.0
    %299 = vmatpush1.msra.mxu0 0.0
    %300 = vmatprep.subr.mxu0 0.0
    %301 = vmatpush1.msra.mxu0 0.0
    %302 = vmatprep.subr.mxu0 0.0
    %303 = vmatpush1.msra.mxu0 0.0
    %304 = vmatprep.subr.mxu0 0.0
    %305 = vmatpush1.msra.mxu0 0.0
    %306 = vmatprep.subr.mxu0 0.0
    %307 = vmatpush1.msra.mxu0 0.0
    %308 = vmatprep.subr.mxu0 0.0
    %309 = vmatpush1.msra.mxu0 0.0
    %310 = vmatprep.subr.mxu0 0.0
    %311 = vmatpush1.msra.mxu0 0.0
    %312 = vmatprep.subr.mxu0 0.0
    %313 = vmatpush1.msra.mxu0 0.0
    %314 = vmatprep.subr.mxu0 0.0
    %315 = vmatpush1.msra.mxu0 0.0
    %316 = vmatprep.subr.mxu0 0.0
    %317 = vmatpush1.msra.mxu0 0.0
    %318 = vmatprep.subr.mxu0 0.0
    %319 = vmatpush1.msra.mxu0 0.0
    %320 = vmatprep.subr.mxu0 0.0
    %321 = vmatpush1.msra.mxu0 0.0
    %322 = vmatprep.subr.mxu0 0.0
    %323 = vmatpush1.msra.mxu0 0.0
    %324 = vmatprep.subr.mxu0 0.0
    %325 = vmatpush1.msra.mxu0 0.0
    %326 = vmatprep.subr.mxu0 0.0
    %327 = vmatpush1.msra.mxu0 0.0
    %328 = vmatprep.mubr.f32.mxu0 0.0
    %329 = vmatmul.mubr.f32.gmra.mrb[0].mxu0 %v162
    %v330 = vpop.f32.mrb[0].mxu0
    %v331 = vadd.f32 %v262, %v330
    %v332 = vpop.f32.mrb[0].mxu0
    %333 = vmatprep.mubr.f32.mxu0 0.0
    %334 = vmatmul.mubr.f32.gmra.mrb[0].mxu0 %v165
    %v335 = vpop.f32.mrb[0].mxu0
    %v336 = vadd.f32 %v262, %v335
    %v337 = vpop.f32.mrb[0].mxu0
    %338 = vmatprep.mubr.f32.mxu0 0.0
    %339 = vmatmul.mubr.f32.gmra.mrb[0].mxu0 %v168
    %v340 = vpop.f32.mrb[0].mxu0
    %v341 = vadd.f32 %v262, %v340
    %v342 = vpop.f32.mrb[0].mxu0
    %343 = vmatprep.mubr.f32.mxu0 0.0
    %344 = vmatmul.mubr.f32.gmra.mrb[0].mxu0 %v171
    %v345 = vpop.f32.mrb[0].mxu0
    %v346 = vadd.f32 %v262, %v345
    %v347 = vpop.f32.mrb[0].mxu0
    %348 = vdwg.mxu0
    %v350 = vlaneseq
    %v351 = vshrl.u32 %v350, 7
    %v352 = vsub.s32 0, %v351
    %v353 = vrot.slane %v146, %v352
    %355 = vmatprep.subr.mxu0 0.0
    %356 = vmatpush1.msra.mxu0 %v136
    %357 = vmatprep.subr.mxu0 0.0
    %358 = vmatpush1.msra.mxu0 %v137
    %359 = vmatprep.subr.mxu0 0.0
    %360 = vmatpush1.msra.mxu0 %v138
    %361 = vmatprep.subr.mxu0 0.0
    %362 = vmatpush1.msra.mxu0 %v139
    %363 = vmatprep.subr.mxu0 0.0
    %364 = vmatpush1.msra.mxu0 0.0
    %365 = vmatprep.subr.mxu0 0.0
    %366 = vmatpush1.msra.mxu0 0.0
    %367 = vmatprep.subr.mxu0 0.0
    %368 = vmatpush1.msra.mxu0 0.0
    %369 = vmatprep.subr.mxu0 0.0
    %370 = vmatpush1.msra.mxu0 0.0
    %371 = vmatprep.subr.mxu0 0.0
    %372 = vmatpush1.msra.mxu0 0.0
    %373 = vmatprep.subr.mxu0 0.0
    %374 = vmatpush1.msra.mxu0 0.0
    %375 = vmatprep.subr.mxu0 0.0
    %376 = vmatpush1.msra.mxu0 0.0
    %377 = vmatprep.subr.mxu0 0.0
    %378 = vmatpush1.msra.mxu0 0.0
    %379 = vmatprep.subr.mxu0 0.0
    %380 = vmatpush1.msra.mxu0 0.0
    %381 = vmatprep.subr.mxu0 0.0
    %382 = vmatpush1.msra.mxu0 0.0
    %383 = vmatprep.subr.mxu0 0.0
    %384 = vmatpush1.msra.mxu0 0.0
    %385 = vmatprep.subr.mxu0 0.0
    %386 = vmatpush1.msra.mxu0 0.0
    %387 = vmatprep.subr.mxu0 0.0
    %388 = vmatpush1.msra.mxu0 0.0
    %389 = vmatprep.subr.mxu0 0.0
    %390 = vmatpush1.msra.mxu0 0.0
    %391 = vmatprep.subr.mxu0 0.0
    %392 = vmatpush1.msra.mxu0 0.0
    %393 = vmatprep.subr.mxu0 0.0
    %394 = vmatpush1.msra.mxu0 0.0
    %395 = vmatprep.subr.mxu0 0.0
    %396 = vmatpush1.msra.mxu0 0.0
    %397 = vmatprep.subr.mxu0 0.0
    %398 = vmatpush1.msra.mxu0 0.0
    %399 = vmatprep.subr.mxu0 0.0
    %400 = vmatpush1.msra.mxu0 0.0
    %401 = vmatprep.subr.mxu0 0.0
    %402 = vmatpush1.msra.mxu0 0.0
    %403 = vmatprep.subr.mxu0 0.0
    %404 = vmatpush1.msra.mxu0 0.0
    %405 = vmatprep.subr.mxu0 0.0
    %406 = vmatpush1.msra.mxu0 0.0
    %407 = vmatprep.subr.mxu0 0.0
    %408 = vmatpush1.msra.mxu0 0.0
    %409 = vmatprep.subr.mxu0 0.0
    %410 = vmatpush1.msra.mxu0 0.0
    %411 = vmatprep.subr.mxu0 0.0
    %412 = vmatpush1.msra.mxu0 0.0
    %413 = vmatprep.subr.mxu0 0.0
    %414 = vmatpush1.msra.mxu0 0.0
    %415 = vmatprep.subr.mxu0 0.0
    %416 = vmatpush1.msra.mxu0 0.0
    %417 = vmatprep.subr.mxu0 0.0
    %418 = vmatpush1.msra.mxu0 0.0
    %419 = vmatprep.mubr.f32.mxu0 0.0
    %420 = vmatmul.mubr.f32.gmra.mrb[0].mxu0 %v162
    %v421 = vpop.f32.mrb[0].mxu0
    %v422 = vadd.f32 %v353, %v421
    %v423 = vpop.f32.mrb[0].mxu0
    %424 = vmatprep.mubr.f32.mxu0 0.0
    %425 = vmatmul.mubr.f32.gmra.mrb[0].mxu0 %v165
    %v426 = vpop.f32.mrb[0].mxu0
    %v427 = vadd.f32 %v353, %v426
    %v428 = vpop.f32.mrb[0].mxu0
    %429 = vmatprep.mubr.f32.mxu0 0.0
    %430 = vmatmul.mubr.f32.gmra.mrb[0].mxu0 %v168
    %v431 = vpop.f32.mrb[0].mxu0
    %v432 = vadd.f32 %v353, %v431
    %v433 = vpop.f32.mrb[0].mxu0
    %434 = vmatprep.mubr.f32.mxu0 0.0
    %435 = vmatmul.mubr.f32.gmra.mrb[0].mxu0 %v171
    %v436 = vpop.f32.mrb[0].mxu0
    %v437 = vadd.f32 %v353, %v436
    %v438 = vpop.f32.mrb[0].mxu0
    %439 = vdwg.mxu0
    %vm440 = vcmask 130048
    %v442 = vsel %vm440, %v148, 0
    %444 = vmatprep.subr.mxu0 0.0
    %445 = vmatpush1.msra.mxu0 %v331
    %446 = vmatprep.subr.mxu0 0.0
    %447 = vmatpush1.msra.mxu0 %v336
    %448 = vmatprep.subr.mxu0 0.0
    %449 = vmatpush1.msra.mxu0 0.0
    %450 = vmatprep.subr.mxu0 0.0
    %451 = vmatpush1.msra.mxu0 0.0
    %452 = vmatprep.subr.mxu0 0.0
    %453 = vmatpush1.msra.mxu0 0.0
    %454 = vmatprep.subr.mxu0 0.0
    %455 = vmatpush1.msra.mxu0 0.0
    %456 = vmatprep.subr.mxu0 0.0
    %457 = vmatpush1.msra.mxu0 0.0
    %458 = vmatprep.subr.mxu0 0.0
    %459 = vmatpush1.msra.mxu0 0.0
    %460 = vmatprep.subr.mxu0 0.0
    %461 = vmatpush1.msra.mxu0 0.0
    %462 = vmatprep.subr.mxu0 0.0
    %463 = vmatpush1.msra.mxu0 0.0
    %464 = vmatprep.subr.mxu0 0.0
    %465 = vmatpush1.msra.mxu0 0.0
    %466 = vmatprep.subr.mxu0 0.0
    %467 = vmatpush1.msra.mxu0 0.0
    %468 = vmatprep.subr.mxu0 0.0
    %469 = vmatpush1.msra.mxu0 0.0
    %470 = vmatprep.subr.mxu0 0.0
    %471 = vmatpush1.msra.mxu0 0.0
    %472 = vmatprep.subr.mxu0 0.0
    %473 = vmatpush1.msra.mxu0 0.0
    %474 = vmatprep.subr.mxu0 0.0
    %475 = vmatpush1.msra.mxu0 0.0
    %476 = vmatprep.subr.mxu0 0.0
    %477 = vmatpush1.msra.mxu0 0.0
    %478 = vmatprep.subr.mxu0 0.0
    %479 = vmatpush1.msra.mxu0 0.0
    %480 = vmatprep.subr.mxu0 0.0
    %481 = vmatpush1.msra.mxu0 0.0
    %482 = vmatprep.subr.mxu0 0.0
    %483 = vmatpush1.msra.mxu0 0.0
    %484 = vmatprep.subr.mxu0 0.0
    %485 = vmatpush1.msra.mxu0 0.0
    %486 = vmatprep.subr.mxu0 0.0
    %487 = vmatpush1.msra.mxu0 0.0
    %488 = vmatprep.subr.mxu0 0.0
    %489 = vmatpush1.msra.mxu0 0.0
    %490 = vmatprep.subr.mxu0 0.0
    %491 = vmatpush1.msra.mxu0 0.0
    %492 = vmatprep.subr.mxu0 0.0
    %493 = vmatpush1.msra.mxu0 0.0
    %494 = vmatprep.subr.mxu0 0.0
    %495 = vmatpush1.msra.mxu0 0.0
    %496 = vmatprep.subr.mxu0 0.0
    %497 = vmatpush1.msra.mxu0 0.0
    %498 = vmatprep.subr.mxu0 0.0
    %499 = vmatpush1.msra.mxu0 0.0
    %500 = vmatprep.subr.mxu0 0.0
    %501 = vmatpush1.msra.mxu0 0.0
    %502 = vmatprep.subr.mxu0 0.0
    %503 = vmatpush1.msra.mxu0 0.0
    %504 = vmatprep.subr.mxu0 0.0
    %505 = vmatpush1.msra.mxu0 0.0
    %506 = vmatprep.subr.mxu0 0.0
    %507 = vmatpush1.msra.mxu0 0.0
    %508 = vmatprep.mubr.f32.mxu0 0.0
    %509 = vmatmul.mubr.f32.gmra.mrb[0].mxu0 %v442
    %v510 = vpop.f32.mrb[0].mxu0
    %v511 = vadd.f32 0.0, %v510
    %v512 = vpop.f32.mrb[0].mxu0
    %513 = vdwg.mxu0
    %v515 = vsel %vm440, %v149, 0
    %517 = vmatprep.subr.mxu0 0.0
    %518 = vmatpush1.msra.mxu0 %v422
    %519 = vmatprep.subr.mxu0 0.0
    %520 = vmatpush1.msra.mxu0 %v427
    %521 = vmatprep.subr.mxu0 0.0
    %522 = vmatpush1.msra.mxu0 0.0
    %523 = vmatprep.subr.mxu0 0.0
    %524 = vmatpush1.msra.mxu0 0.0
    %525 = vmatprep.subr.mxu0 0.0
    %526 = vmatpush1.msra.mxu0 0.0
    %527 = vmatprep.subr.mxu0 0.0
    %528 = vmatpush1.msra.mxu0 0.0
    %529 = vmatprep.subr.mxu0 0.0
    %530 = vmatpush1.msra.mxu0 0.0
    %531 = vmatprep.subr.mxu0 0.0
    %532 = vmatpush1.msra.mxu0 0.0
    %533 = vmatprep.subr.mxu0 0.0
    %534 = vmatpush1.msra.mxu0 0.0
    %535 = vmatprep.subr.mxu0 0.0
    %536 = vmatpush1.msra.mxu0 0.0
    %537 = vmatprep.subr.mxu0 0.0
    %538 = vmatpush1.msra.mxu0 0.0
    %539 = vmatprep.subr.mxu0 0.0
    %540 = vmatpush1.msra.mxu0 0.0
    %541 = vmatprep.subr.mxu0 0.0
    %542 = vmatpush1.msra.mxu0 0.0
    %543 = vmatprep.subr.mxu0 0.0
    %544 = vmatpush1.msra.mxu0 0.0
    %545 = vmatprep.subr.mxu0 0.0
    %546 = vmatpush1.msra.mxu0 0.0
    %547 = vmatprep.subr.mxu0 0.0
    %548 = vmatpush1.msra.mxu0 0.0
    %549 = vmatprep.subr.mxu0 0.0
    %550 = vmatpush1.msra.mxu0 0.0
    %551 = vmatprep.subr.mxu0 0.0
    %552 = vmatpush1.msra.mxu0 0.0
    %553 = vmatprep.subr.mxu0 0.0
    %554 = vmatpush1.msra.mxu0 0.0
    %555 = vmatprep.subr.mxu0 0.0
    %556 = vmatpush1.msra.mxu0 0.0
    %557 = vmatprep.subr.mxu0 0.0
    %558 = vmatpush1.msra.mxu0 0.0
    %559 = vmatprep.subr.mxu0 0.0
    %560 = vmatpush1.msra.mxu0 0.0
    %561 = vmatprep.subr.mxu0 0.0
    %562 = vmatpush1.msra.mxu0 0.0
    %563 = vmatprep.subr.mxu0 0.0
    %564 = vmatpush1.msra.mxu0 0.0
    %565 = vmatprep.subr.mxu0 0.0
    %566 = vmatpush1.msra.mxu0 0.0
    %567 = vmatprep.subr.mxu0 0.0
    %568 = vmatpush1.msra.mxu0 0.0
    %569 = vmatprep.subr.mxu0 0.0
    %570 = vmatpush1.msra.mxu0 0.0
    %571 = vmatprep.subr.mxu0 0.0
    %572 = vmatpush1.msra.mxu0 0.0
    %573 = vmatprep.subr.mxu0 0.0
    %574 = vmatpush1.msra.mxu0 0.0
    %575 = vmatprep.subr.mxu0 0.0
    %576 = vmatpush1.msra.mxu0 0.0
    %577 = vmatprep.subr.mxu0 0.0
    %578 = vmatpush1.msra.mxu0 0.0
    %579 = vmatprep.subr.mxu0 0.0
    %580 = vmatpush1.msra.mxu0 0.0
    %581 = vmatprep.mubr.f32.mxu0 0.0
    %582 = vmatmul.mubr.f32.gmra.mrb[0].mxu0 %v515
    %v583 = vpop.f32.mrb[0].mxu0
    %v584 = vadd.f32 0.0, %v583
    %v585 = vpop.f32.mrb[0].mxu0
    %586 = vdwg.mxu0
    %vm587 = vcmask 64512
    %v589 = vsel %vm587, %v240, 0
    %v592 = vsel %vm587, %v245, 0
    %v595 = vsel %vm587, %v511, 0
    %597 = vmatprep.subr.mxu0 0.0
    %598 = vmatpush1.xpose.msra.mxu0 %v595
    %599 = vmatprep.subr.mxu0 0.0
    %600 = vmatpush1.xpose.msra.mxu0 0.0
    %601 = vmatprep.subr.mxu0 0.0
    %602 = vmatpush1.xpose.msra.mxu0 0.0
    %603 = vmatprep.subr.mxu0 0.0
    %604 = vmatpush1.xpose.msra.mxu0 0.0
    %605 = vmatprep.subr.mxu0 0.0
    %606 = vmatpush1.xpose.msra.mxu0 0.0
    %607 = vmatprep.subr.mxu0 0.0
    %608 = vmatpush1.xpose.msra.mxu0 0.0
    %609 = vmatprep.subr.mxu0 0.0
    %610 = vmatpush1.xpose.msra.mxu0 0.0
    %611 = vmatprep.subr.mxu0 0.0
    %612 = vmatpush1.xpose.msra.mxu0 0.0
    %613 = vmatprep.subr.mxu0 0.0
    %614 = vmatpush1.xpose.msra.mxu0 0.0
    %615 = vmatprep.subr.mxu0 0.0
    %616 = vmatpush1.xpose.msra.mxu0 0.0
    %617 = vmatprep.subr.mxu0 0.0
    %618 = vmatpush1.xpose.msra.mxu0 0.0
    %619 = vmatprep.subr.mxu0 0.0
    %620 = vmatpush1.xpose.msra.mxu0 0.0
    %621 = vmatprep.subr.mxu0 0.0
    %622 = vmatpush1.xpose.msra.mxu0 0.0
    %623 = vmatprep.subr.mxu0 0.0
    %624 = vmatpush1.xpose.msra.mxu0 0.0
    %625 = vmatprep.subr.mxu0 0.0
    %626 = vmatpush1.xpose.msra.mxu0 0.0
    %627 = vmatprep.subr.mxu0 0.0
    %628 = vmatpush1.xpose.msra.mxu0 0.0
    %629 = vmatprep.subr.mxu0 0.0
    %630 = vmatpush1.xpose.msra.mxu0 0.0
    %631 = vmatprep.subr.mxu0 0.0
    %632 = vmatpush1.xpose.msra.mxu0 0.0
    %633 = vmatprep.subr.mxu0 0.0
    %634 = vmatpush1.xpose.msra.mxu0 0.0
    %635 = vmatprep.subr.mxu0 0.0
    %636 = vmatpush1.xpose.msra.mxu0 0.0
    %637 = vmatprep.subr.mxu0 0.0
    %638 = vmatpush1.xpose.msra.mxu0 0.0
    %639 = vmatprep.subr.mxu0 0.0
    %640 = vmatpush1.xpose.msra.mxu0 0.0
    %641 = vmatprep.subr.mxu0 0.0
    %642 = vmatpush1.xpose.msra.mxu0 0.0
    %643 = vmatprep.subr.mxu0 0.0
    %644 = vmatpush1.xpose.msra.mxu0 0.0
    %645 = vmatprep.subr.mxu0 0.0
    %646 = vmatpush1.xpose.msra.mxu0 0.0
    %647 = vmatprep.subr.mxu0 0.0
    %648 = vmatpush1.xpose.msra.mxu0 0.0
    %649 = vmatprep.subr.mxu0 0.0
    %650 = vmatpush1.xpose.msra.mxu0 0.0
    %651 = vmatprep.subr.mxu0 0.0
    %652 = vmatpush1.xpose.msra.mxu0 0.0
    %653 = vmatprep.subr.mxu0 0.0
    %654 = vmatpush1.xpose.msra.mxu0 0.0
    %655 = vmatprep.subr.mxu0 0.0
    %656 = vmatpush1.xpose.msra.mxu0 0.0
    %657 = vmatprep.subr.mxu0 0.0
    %658 = vmatpush1.xpose.msra.mxu0 0.0
    %659 = vmatprep.subr.mxu0 0.0
    %660 = vmatpush1.xpose.msra.mxu0 0.0
    %661 = vmatprep.mubr.f32.mxu0 0.0
    %662 = vmatmul.mubr.f32.gmra.mrb[0].mxu0 %v589
    %v663 = vpop.f32.mrb[0].mxu0
    %v664 = vadd.f32 0.0, %v663
    %v665 = vpop.f32.mrb[0].mxu0
    %666 = vmatprep.mubr.f32.mxu0 0.0
    %667 = vmatmul.mubr.f32.gmra.mrb[0].mxu0 %v592
    %v668 = vpop.f32.mrb[0].mxu0
    %v669 = vadd.f32 0.0, %v668
    %v670 = vpop.f32.mrb[0].mxu0
    %671 = vdwg.mxu0
    %v672 = vsel %vm587, %v664, -inf
    %673 = vmax.xlane.f32.xlu0 %v672
    %v674 = vpop.xlane.xlu0 %673
    %v675 = vsel %vm587, %v669, -inf
    %676 = vmax.xlane.f32.xlu0 %v675
    %v677 = vpop.xlane.xlu0 %676
    %v678 = vsub.f32 %v664, %v674
    %v679 = vsub.f32 %v669, %v677
    %v680 = vmul.f32 %v678, 1.442695
    %v681 = vpow.pop %v680
    %v682 = vmul.f32 %v679, 1.442695
    %v683 = vpow.pop %v682
    %v684 = vsel %vm587, %v681, 0.0
    %685 = vadd.xlane.f32.xlu0 %v684
    %v686 = vpop.xlane.xlu0 %685
    %v687 = vsel %vm587, %v683, 0.0
    %688 = vadd.xlane.f32.xlu0 %v687
    %v689 = vpop.xlane.xlu0 %688
    %v690 = vrcp.pop %v686
    %v691 = vmul.f32 %v681, %v690
    %v692 = vrcp.pop %v689
    %v693 = vmul.f32 %v683, %v692
    %v695 = vsel %vm587, %v691, 0
    %v698 = vsel %vm587, %v693, 0
    %700 = vmatprep.subr.mxu0 0.0
    %701 = vmatpush1.msra.mxu0 %v584
    %702 = vmatprep.subr.mxu0 0.0
    %703 = vmatpush1.msra.mxu0 0.0
    %704 = vmatprep.subr.mxu0 0.0
    %705 = vmatpush1.msra.mxu0 0.0
    %706 = vmatprep.subr.mxu0 0.0
    %707 = vmatpush1.msra.mxu0 0.0
    %708 = vmatprep.subr.mxu0 0.0
    %709 = vmatpush1.msra.mxu0 0.0
    %710 = vmatprep.subr.mxu0 0.0
    %711 = vmatpush1.msra.mxu0 0.0
    %712 = vmatprep.subr.mxu0 0.0
    %713 = vmatpush1.msra.mxu0 0.0
    %714 = vmatprep.subr.mxu0 0.0
    %715 = vmatpush1.msra.mxu0 0.0
    %716 = vmatprep.subr.mxu0 0.0
    %717 = vmatpush1.msra.mxu0 0.0
    %718 = vmatprep.subr.mxu0 0.0
    %719 = vmatpush1.msra.mxu0 0.0
    %720 = vmatprep.subr.mxu0 0.0
    %721 = vmatpush1.msra.mxu0 0.0
    %722 = vmatprep.subr.mxu0 0.0
    %723 = vmatpush1.msra.mxu0 0.0
    %724 = vmatprep.subr.mxu0 0.0
    %725 = vmatpush1.msra.mxu0 0.0
    %726 = vmatprep.subr.mxu0 0.0
    %727 = vmatpush1.msra.mxu0 0.0
    %728 = vmatprep.subr.mxu0 0.0
    %729 = vmatpush1.msra.mxu0 0.0
    %730 = vmatprep.subr.mxu0 0.0
    %731 = vmatpush1.msra.mxu0 0.0
    %732 = vmatprep.subr.mxu0 0.0
    %733 = vmatpush1.msra.mxu0 0.0
    %734 = vmatprep.subr.mxu0 0.0
    %735 = vmatpush1.msra.mxu0 0.0
    %736 = vmatprep.subr.mxu0 0.0
    %737 = vmatpush1.msra.mxu0 0.0
    %738 = vmatprep.subr.mxu0 0.0
    %739 = vmatpush1.msra.mxu0 0.0
    %740 = vmatprep.subr.mxu0 0.0
    %741 = vmatpush1.msra.mxu0 0.0
    %742 = vmatprep.subr.mxu0 0.0
    %743 = vmatpush1.msra.mxu0 0.0
    %744 = vmatprep.subr.mxu0 0.0
    %745 = vmatpush1.msra.mxu0 0.0
    %746 = vmatprep.subr.mxu0 0.0
    %747 = vmatpush1.msra.mxu0 0.0
    %748 = vmatprep.subr.mxu0 0.0
    %749 = vmatpush1.msra.mxu0 0.0
    %750 = vmatprep.subr.mxu0 0.0
    %751 = vmatpush1.msra.mxu0 0.0
    %752 = vmatprep.subr.mxu0 0.0
    %753 = vmatpush1.msra.mxu0 0.0
    %754 = vmatprep.subr.mxu0 0.0
    %755 = vmatpush1.msra.mxu0 0.0
    %756 = vmatprep.subr.mxu0 0.0
    %757 = vmatpush1.msra.mxu0 0.0
    %758 = vmatprep.subr.mxu0 0.0
    %759 = vmatpush1.msra.mxu0 0.0
    %760 = vmatprep.subr.mxu0 0.0
    %761 = vmatpush1.msra.mxu0 0.0
    %762 = vmatprep.subr.mxu0 0.0
    %763 = vmatpush1.msra.mxu0 0.0
    %764 = vmatprep.mubr.f32.mxu0 0.0
    %765 = vmatmul.mubr.f32.gmra.mrb[0].mxu0 %v695
    %v766 = vpop.f32.mrb[0].mxu0
    %v767 = vadd.f32 0.0, %v766
    %v768 = vpop.f32.mrb[0].mxu0
    %769 = vmatprep.mubr.f32.mxu0 0.0
    %770 = vmatmul.mubr.f32.gmra.mrb[0].mxu0 %v698
    %v771 = vpop.f32.mrb[0].mxu0
    %v772 = vadd.f32 0.0, %v771
    %v773 = vpop.f32.mrb[0].mxu0
    %774 = vdwg.mxu0
    %775 = vrot.lane.b32.xlu0 %v240, 120
    %v776 = vpop.permute.xlu0 %775
    %777 = vrot.lane.b32.xlu0 %v245, 120
    %v778 = vpop.permute.xlu0 %777
    %779 = vrot.lane.b32.xlu0 %v511, 120
    %v780 = vpop.permute.xlu0 %779
    %v781 = vsel %vm587, %v776, 0
    %v783 = vsel %vm587, %v778, 0
    %v785 = vsel %vm587, %v780, 0
    %787 = vmatprep.subr.mxu0 0.0
    %788 = vmatpush1.xpose.msra.mxu0 %v785
    %789 = vmatprep.subr.mxu0 0.0
    %790 = vmatpush1.xpose.msra.mxu0 0.0
    %791 = vmatprep.subr.mxu0 0.0
    %792 = vmatpush1.xpose.msra.mxu0 0.0
    %793 = vmatprep.subr.mxu0 0.0
    %794 = vmatpush1.xpose.msra.mxu0 0.0
    %795 = vmatprep.subr.mxu0 0.0
    %796 = vmatpush1.xpose.msra.mxu0 0.0
    %797 = vmatprep.subr.mxu0 0.0
    %798 = vmatpush1.xpose.msra.mxu0 0.0
    %799 = vmatprep.subr.mxu0 0.0
    %800 = vmatpush1.xpose.msra.mxu0 0.0
    %801 = vmatprep.subr.mxu0 0.0
    %802 = vmatpush1.xpose.msra.mxu0 0.0
    %803 = vmatprep.subr.mxu0 0.0
    %804 = vmatpush1.xpose.msra.mxu0 0.0
    %805 = vmatprep.subr.mxu0 0.0
    %806 = vmatpush1.xpose.msra.mxu0 0.0
    %807 = vmatprep.subr.mxu0 0.0
    %808 = vmatpush1.xpose.msra.mxu0 0.0
    %809 = vmatprep.subr.mxu0 0.0
    %810 = vmatpush1.xpose.msra.mxu0 0.0
    %811 = vmatprep.subr.mxu0 0.0
    %812 = vmatpush1.xpose.msra.mxu0 0.0
    %813 = vmatprep.subr.mxu0 0.0
    %814 = vmatpush1.xpose.msra.mxu0 0.0
    %815 = vmatprep.subr.mxu0 0.0
    %816 = vmatpush1.xpose.msra.mxu0 0.0
    %817 = vmatprep.subr.mxu0 0.0
    %818 = vmatpush1.xpose.msra.mxu0 0.0
    %819 = vmatprep.subr.mxu0 0.0
    %820 = vmatpush1.xpose.msra.mxu0 0.0
    %821 = vmatprep.subr.mxu0 0.0
    %822 = vmatpush1.xpose.msra.mxu0 0.0
    %823 = vmatprep.subr.mxu0 0.0
    %824 = vmatpush1.xpose.msra.mxu0 0.0
    %825 = vmatprep.subr.mxu0 0.0
    %826 = vmatpush1.xpose.msra.mxu0 0.0
    %827 = vmatprep.subr.mxu0 0.0
    %828 = vmatpush1.xpose.msra.mxu0 0.0
    %829 = vmatprep.subr.mxu0 0.0
    %830 = vmatpush1.xpose.msra.mxu0 0.0
    %831 = vmatprep.subr.mxu0 0.0
    %832 = vmatpush1.xpose.msra.mxu0 0.0
    %833 = vmatprep.subr.mxu0 0.0
    %834 = vmatpush1.xpose.msra.mxu0 0.0
    %835 = vmatprep.subr.mxu0 0.0
    %836 = vmatpush1.xpose.msra.mxu0 0.0
    %837 = vmatprep.subr.mxu0 0.0
    %838 = vmatpush1.xpose.msra.mxu0 0.0
    %839 = vmatprep.subr.mxu0 0.0
    %840 = vmatpush1.xpose.msra.mxu0 0.0
    %841 = vmatprep.subr.mxu0 0.0
    %842 = vmatpush1.xpose.msra.mxu0 0.0
    %843 = vmatprep.subr.mxu0 0.0
    %844 = vmatpush1.xpose.msra.mxu0 0.0
    %845 = vmatprep.subr.mxu0 0.0
    %846 = vmatpush1.xpose.msra.mxu0 0.0
    %847 = vmatprep.subr.mxu0 0.0
    %848 = vmatpush1.xpose.msra.mxu0 0.0
    %849 = vmatprep.subr.mxu0 0.0
    %850 = vmatpush1.xpose.msra.mxu0 0.0
    %851 = vmatprep.mubr.f32.mxu0 0.0
    %852 = vmatmul.mubr.f32.gmra.mrb[0].mxu0 %v781
    %v853 = vpop.f32.mrb[0].mxu0
    %v854 = vadd.f32 0.0, %v853
    %v855 = vpop.f32.mrb[0].mxu0
    %856 = vmatprep.mubr.f32.mxu0 0.0
    %857 = vmatmul.mubr.f32.gmra.mrb[0].mxu0 %v783
    %v858 = vpop.f32.mrb[0].mxu0
    %v859 = vadd.f32 0.0, %v858
    %v860 = vpop.f32.mrb[0].mxu0
    %861 = vdwg.mxu0
    %v862 = vsel %vm587, %v854, -inf
    %863 = vmax.xlane.f32.xlu0 %v862
    %v864 = vpop.xlane.xlu0 %863
    %v865 = vsel %vm587, %v859, -inf
    %866 = vmax.xlane.f32.xlu0 %v865
    %v867 = vpop.xlane.xlu0 %866
    %v868 = vsub.f32 %v854, %v864
    %v869 = vsub.f32 %v859, %v867
    %v870 = vmul.f32 %v868, 1.442695
    %v871 = vpow.pop %v870
    %v872 = vmul.f32 %v869, 1.442695
    %v873 = vpow.pop %v872
    %v874 = vsel %vm587, %v871, 0.0
    %875 = vadd.xlane.f32.xlu0 %v874
    %v876 = vpop.xlane.xlu0 %875
    %v877 = vsel %vm587, %v873, 0.0
    %878 = vadd.xlane.f32.xlu0 %v877
    %v879 = vpop.xlane.xlu0 %878
    %v880 = vrcp.pop %v876
    %v881 = vmul.f32 %v871, %v880
    %v882 = vrcp.pop %v879
    %v883 = vmul.f32 %v873, %v882
    %885 = vrot.lane.b32.xlu0 %v584, 120
    %v886 = vpop.permute.xlu0 %885
    %v889 = vsel %vm587, %v881, 0
    %v892 = vsel %vm587, %v883, 0
    %894 = vmatprep.subr.mxu0 0.0
    %895 = vmatpush1.msra.mxu0 %v886
    %896 = vmatprep.subr.mxu0 0.0
    %897 = vmatpush1.msra.mxu0 0.0
    %898 = vmatprep.subr.mxu0 0.0
    %899 = vmatpush1.msra.mxu0 0.0
    %900 = vmatprep.subr.mxu0 0.0
    %901 = vmatpush1.msra.mxu0 0.0
    %902 = vmatprep.subr.mxu0 0.0
    %903 = vmatpush1.msra.mxu0 0.0
    %904 = vmatprep.subr.mxu0 0.0
    %905 = vmatpush1.msra.mxu0 0.0
    %906 = vmatprep.subr.mxu0 0.0
    %907 = vmatpush1.msra.mxu0 0.0
    %908 = vmatprep.subr.mxu0 0.0
    %909 = vmatpush1.msra.mxu0 0.0
    %910 = vmatprep.subr.mxu0 0.0
    %911 = vmatpush1.msra.mxu0 0.0
    %912 = vmatprep.subr.mxu0 0.0
    %913 = vmatpush1.msra.mxu0 0.0
    %914 = vmatprep.subr.mxu0 0.0
    %915 = vmatpush1.msra.mxu0 0.0
    %916 = vmatprep.subr.mxu0 0.0
    %917 = vmatpush1.msra.mxu0 0.0
    %918 = vmatprep.subr.mxu0 0.0
    %919 = vmatpush1.msra.mxu0 0.0
    %920 = vmatprep.subr.mxu0 0.0
    %921 = vmatpush1.msra.mxu0 0.0
    %922 = vmatprep.subr.mxu0 0.0
    %923 = vmatpush1.msra.mxu0 0.0
    %924 = vmatprep.subr.mxu0 0.0
    %925 = vmatpush1.msra.mxu0 0.0
    %926 = vmatprep.subr.mxu0 0.0
    %927 = vmatpush1.msra.mxu0 0.0
    %928 = vmatprep.subr.mxu0 0.0
    %929 = vmatpush1.msra.mxu0 0.0
    %930 = vmatprep.subr.mxu0 0.0
    %931 = vmatpush1.msra.mxu0 0.0
    %932 = vmatprep.subr.mxu0 0.0
    %933 = vmatpush1.msra.mxu0 0.0
    %934 = vmatprep.subr.mxu0 0.0
    %935 = vmatpush1.msra.mxu0 0.0
    %936 = vmatprep.subr.mxu0 0.0
    %937 = vmatpush1.msra.mxu0 0.0
    %938 = vmatprep.subr.mxu0 0.0
    %939 = vmatpush1.msra.mxu0 0.0
    %940 = vmatprep.subr.mxu0 0.0
    %941 = vmatpush1.msra.mxu0 0.0
    %942 = vmatprep.subr.mxu0 0.0
    %943 = vmatpush1.msra.mxu0 0.0
    %944 = vmatprep.subr.mxu0 0.0
    %945 = vmatpush1.msra.mxu0 0.0
    %946 = vmatprep.subr.mxu0 0.0
    %947 = vmatpush1.msra.mxu0 0.0
    %948 = vmatprep.subr.mxu0 0.0
    %949 = vmatpush1.msra.mxu0 0.0
    %950 = vmatprep.subr.mxu0 0.0
    %951 = vmatpush1.msra.mxu0 0.0
    %952 = vmatprep.subr.mxu0 0.0
    %953 = vmatpush1.msra.mxu0 0.0
    %954 = vmatprep.subr.mxu0 0.0
    %955 = vmatpush1.msra.mxu0 0.0
    %956 = vmatprep.subr.mxu0 0.0
    %957 = vmatpush1.msra.mxu0 0.0
    %958 = vmatprep.mubr.f32.mxu0 0.0
    %959 = vmatmul.mubr.f32.gmra.mrb[0].mxu0 %v889
    %v960 = vpop.f32.mrb[0].mxu0
    %v961 = vadd.f32 0.0, %v960
    %v962 = vpop.f32.mrb[0].mxu0
    %963 = vmatprep.mubr.f32.mxu0 0.0
    %964 = vmatmul.mubr.f32.gmra.mrb[0].mxu0 %v892
    %v965 = vpop.f32.mrb[0].mxu0
    %v966 = vadd.f32 0.0, %v965
    %v967 = vpop.f32.mrb[0].mxu0
    %968 = vdwg.mxu0
    %969 = vrot.lane.b32.xlu0 %v240, 112
    %v970 = vpop.permute.xlu0 %969
    %971 = vrot.lane.b32.xlu0 %v245, 112
    %v972 = vpop.permute.xlu0 %971
    %973 = vrot.lane.b32.xlu0 %v511, 112
    %v974 = vpop.permute.xlu0 %973
    %v975 = vsel %vm587, %v970, 0
    %v977 = vsel %vm587, %v972, 0
    %v979 = vsel %vm587, %v974, 0
    %981 = vmatprep.subr.mxu0 0.0
    %982 = vmatpush1.xpose.msra.mxu0 %v979
    %983 = vmatprep.subr.mxu0 0.0
    %984 = vmatpush1.xpose.msra.mxu0 0.0
    %985 = vmatprep.subr.mxu0 0.0
    %986 = vmatpush1.xpose.msra.mxu0 0.0
    %987 = vmatprep.subr.mxu0 0.0
    %988 = vmatpush1.xpose.msra.mxu0 0.0
    %989 = vmatprep.subr.mxu0 0.0
    %990 = vmatpush1.xpose.msra.mxu0 0.0
    %991 = vmatprep.subr.mxu0 0.0
    %992 = vmatpush1.xpose.msra.mxu0 0.0
    %993 = vmatprep.subr.mxu0 0.0
    %994 = vmatpush1.xpose.msra.mxu0 0.0
    %995 = vmatprep.subr.mxu0 0.0
    %996 = vmatpush1.xpose.msra.mxu0 0.0
    %997 = vmatprep.subr.mxu0 0.0
    %998 = vmatpush1.xpose.msra.mxu0 0.0
    %999 = vmatprep.subr.mxu0 0.0
    %1000 = vmatpush1.xpose.msra.mxu0 0.0
    %1001 = vmatprep.subr.mxu0 0.0
    %1002 = vmatpush1.xpose.msra.mxu0 0.0
    %1003 = vmatprep.subr.mxu0 0.0
    %1004 = vmatpush1.xpose.msra.mxu0 0.0
    %1005 = vmatprep.subr.mxu0 0.0
    %1006 = vmatpush1.xpose.msra.mxu0 0.0
    %1007 = vmatprep.subr.mxu0 0.0
    %1008 = vmatpush1.xpose.msra.mxu0 0.0
    %1009 = vmatprep.subr.mxu0 0.0
    %1010 = vmatpush1.xpose.msra.mxu0 0.0
    %1011 = vmatprep.subr.mxu0 0.0
    %1012 = vmatpush1.xpose.msra.mxu0 0.0
    %1013 = vmatprep.subr.mxu0 0.0
    %1014 = vmatpush1.xpose.msra.mxu0 0.0
    %1015 = vmatprep.subr.mxu0 0.0
    %1016 = vmatpush1.xpose.msra.mxu0 0.0
    %1017 = vmatprep.subr.mxu0 0.0
    %1018 = vmatpush1.xpose.msra.mxu0 0.0
    %1019 = vmatprep.subr.mxu0 0.0
    %1020 = vmatpush1.xpose.msra.mxu0 0.0
    %1021 = vmatprep.subr.mxu0 0.0
    %1022 = vmatpush1.xpose.msra.mxu0 0.0
    %1023 = vmatprep.subr.mxu0 0.0
    %1024 = vmatpush1.xpose.msra.mxu0 0.0
    %1025 = vmatprep.subr.mxu0 0.0
    %1026 = vmatpush1.xpose.msra.mxu0 0.0
    %1027 = vmatprep.subr.mxu0 0.0
    %1028 = vmatpush1.xpose.msra.mxu0 0.0
    %1029 = vmatprep.subr.mxu0 0.0
    %1030 = vmatpush1.xpose.msra.mxu0 0.0
    %1031 = vmatprep.subr.mxu0 0.0
    %1032 = vmatpush1.xpose.msra.mxu0 0.0
    %1033 = vmatprep.subr.mxu0 0.0
    %1034 = vmatpush1.xpose.msra.mxu0 0.0
    %1035 = vmatprep.subr.mxu0 0.0
    %1036 = vmatpush1.xpose.msra.mxu0 0.0
    %1037 = vmatprep.subr.mxu0 0.0
    %1038 = vmatpush1.xpose.msra.mxu0 0.0
    %1039 = vmatprep.subr.mxu0 0.0
    %1040 = vmatpush1.xpose.msra.mxu0 0.0
    %1041 = vmatprep.subr.mxu0 0.0
    %1042 = vmatpush1.xpose.msra.mxu0 0.0
    %1043 = vmatprep.subr.mxu0 0.0
    %1044 = vmatpush1.xpose.msra.mxu0 0.0
    %1045 = vmatprep.mubr.f32.mxu0 0.0
    %1046 = vmatmul.mubr.f32.gmra.mrb[0].mxu0 %v975
    %v1047 = vpop.f32.mrb[0].mxu0
    %v1048 = vadd.f32 0.0, %v1047
    %v1049 = vpop.f32.mrb[0].mxu0
    %1050 = vmatprep.mubr.f32.mxu0 0.0
    %1051 = vmatmul.mubr.f32.gmra.mrb[0].mxu0 %v977
    %v1052 = vpop.f32.mrb[0].mxu0
    %v1053 = vadd.f32 0.0, %v1052
    %v1054 = vpop.f32.mrb[0].mxu0
    %1055 = vdwg.mxu0
    %v1056 = vsel %vm587, %v1048, -inf
    %1057 = vmax.xlane.f32.xlu0 %v1056
    %v1058 = vpop.xlane.xlu0 %1057
    %v1059 = vsel %vm587, %v1053, -inf
    %1060 = vmax.xlane.f32.xlu0 %v1059
    %v1061 = vpop.xlane.xlu0 %1060
    %v1062 = vsub.f32 %v1048, %v1058
    %v1063 = vsub.f32 %v1053, %v1061
    %v1064 = vmul.f32 %v1062, 1.442695
    %v1065 = vpow.pop %v1064
    %v1066 = vmul.f32 %v1063, 1.442695
    %v1067 = vpow.pop %v1066
    %v1068 = vsel %vm587, %v1065, 0.0
    %1069 = vadd.xlane.f32.xlu0 %v1068
    %v1070 = vpop.xlane.xlu0 %1069
    %v1071 = vsel %vm587, %v1067, 0.0
    %1072 = vadd.xlane.f32.xlu0 %v1071
    %v1073 = vpop.xlane.xlu0 %1072
    %v1074 = vrcp.pop %v1070
    %v1075 = vmul.f32 %v1065, %v1074
    %v1076 = vrcp.pop %v1073
    %v1077 = vmul.f32 %v1067, %v1076
    %1078 = vrot.lane.b32.xlu0 %v584, 112
    %v1079 = vpop.permute.xlu0 %1078
    %v1082 = vsel %vm587, %v1075, 0
    %v1085 = vsel %vm587, %v1077, 0
    %1087 = vmatprep.subr.mxu0 0.0
    %1088 = vmatpush1.msra.mxu0 %v1079
    %1089 = vmatprep.subr.mxu0 0.0
    %1090 = vmatpush1.msra.mxu0 0.0
    %1091 = vmatprep.subr.mxu0 0.0
    %1092 = vmatpush1.msra.mxu0 0.0
    %1093 = vmatprep.subr.mxu0 0.0
    %1094 = vmatpush1.msra.mxu0 0.0
    %1095 = vmatprep.subr.mxu0 0.0
    %1096 = vmatpush1.msra.mxu0 0.0
    %1097 = vmatprep.subr.mxu0 0.0
    %1098 = vmatpush1.msra.mxu0 0.0
    %1099 = vmatprep.subr.mxu0 0.0
    %1100 = vmatpush1.msra.mxu0 0.0
    %1101 = vmatprep.subr.mxu0 0.0
    %1102 = vmatpush1.msra.mxu0 0.0
    %1103 = vmatprep.subr.mxu0 0.0
    %1104 = vmatpush1.msra.mxu0 0.0
    %1105 = vmatprep.subr.mxu0 0.0
    %1106 = vmatpush1.msra.mxu0 0.0
    %1107 = vmatprep.subr.mxu0 0.0
    %1108 = vmatpush1.msra.mxu0 0.0
    %1109 = vmatprep.subr.mxu0 0.0
    %1110 = vmatpush1.msra.mxu0 0.0
    %1111 = vmatprep.subr.mxu0 0.0
    %1112 = vmatpush1.msra.mxu0 0.0
    %1113 = vmatprep.subr.mxu0 0.0
    %1114 = vmatpush1.msra.mxu0 0.0
    %1115 = vmatprep.subr.mxu0 0.0
    %1116 = vmatpush1.msra.mxu0 0.0
    %1117 = vmatprep.subr.mxu0 0.0
    %1118 = vmatpush1.msra.mxu0 0.0
    %1119 = vmatprep.subr.mxu0 0.0
    %1120 = vmatpush1.msra.mxu0 0.0
    %1121 = vmatprep.subr.mxu0 0.0
    %1122 = vmatpush1.msra.mxu0 0.0
    %1123 = vmatprep.subr.mxu0 0.0
    %1124 = vmatpush1.msra.mxu0 0.0
    %1125 = vmatprep.subr.mxu0 0.0
    %1126 = vmatpush1.msra.mxu0 0.0
    %1127 = vmatprep.subr.mxu0 0.0
    %1128 = vmatpush1.msra.mxu0 0.0
    %1129 = vmatprep.subr.mxu0 0.0
    %1130 = vmatpush1.msra.mxu0 0.0
    %1131 = vmatprep.subr.mxu0 0.0
    %1132 = vmatpush1.msra.mxu0 0.0
    %1133 = vmatprep.subr.mxu0 0.0
    %1134 = vmatpush1.msra.mxu0 0.0
    %1135 = vmatprep.subr.mxu0 0.0
    %1136 = vmatpush1.msra.mxu0 0.0
    %1137 = vmatprep.subr.mxu0 0.0
    %1138 = vmatpush1.msra.mxu0 0.0
    %1139 = vmatprep.subr.mxu0 0.0
    %1140 = vmatpush1.msra.mxu0 0.0
    %1141 = vmatprep.subr.mxu0 0.0
    %1142 = vmatpush1.msra.mxu0 0.0
    %1143 = vmatprep.subr.mxu0 0.0
    %1144 = vmatpush1.msra.mxu0 0.0
    %1145 = vmatprep.subr.mxu0 0.0
    %1146 = vmatpush1.msra.mxu0 0.0
    %1147 = vmatprep.subr.mxu0 0.0
    %1148 = vmatpush1.msra.mxu0 0.0
    %1149 = vmatprep.subr.mxu0 0.0
    %1150 = vmatpush1.msra.mxu0 0.0
    %1151 = vmatprep.mubr.f32.mxu0 0.0
    %1152 = vmatmul.mubr.f32.gmra.mrb[0].mxu0 %v1082
    %v1153 = vpop.f32.mrb[0].mxu0
    %v1154 = vadd.f32 0.0, %v1153
    %v1155 = vpop.f32.mrb[0].mxu0
    %1156 = vmatprep.mubr.f32.mxu0 0.0
    %1157 = vmatmul.mubr.f32.gmra.mrb[0].mxu0 %v1085
    %v1158 = vpop.f32.mrb[0].mxu0
    %v1159 = vadd.f32 0.0, %v1158
    %v1160 = vpop.f32.mrb[0].mxu0
    %1161 = vdwg.mxu0
    %1162 = vrot.lane.b32.xlu0 %v240, 104
    %v1163 = vpop.permute.xlu0 %1162
    %1164 = vrot.lane.b32.xlu0 %v245, 104
    %v1165 = vpop.permute.xlu0 %1164
    %1166 = vrot.lane.b32.xlu0 %v511, 104
    %v1167 = vpop.permute.xlu0 %1166
    %v1168 = vsel %vm587, %v1163, 0
    %v1170 = vsel %vm587, %v1165, 0
    %v1172 = vsel %vm587, %v1167, 0
    %1174 = vmatprep.subr.mxu0 0.0
    %1175 = vmatpush1.xpose.msra.mxu0 %v1172
    %1176 = vmatprep.subr.mxu0 0.0
    %1177 = vmatpush1.xpose.msra.mxu0 0.0
    %1178 = vmatprep.subr.mxu0 0.0
    %1179 = vmatpush1.xpose.msra.mxu0 0.0
    %1180 = vmatprep.subr.mxu0 0.0
    %1181 = vmatpush1.xpose.msra.mxu0 0.0
    %1182 = vmatprep.subr.mxu0 0.0
    %1183 = vmatpush1.xpose.msra.mxu0 0.0
    %1184 = vmatprep.subr.mxu0 0.0
    %1185 = vmatpush1.xpose.msra.mxu0 0.0
    %1186 = vmatprep.subr.mxu0 0.0
    %1187 = vmatpush1.xpose.msra.mxu0 0.0
    %1188 = vmatprep.subr.mxu0 0.0
    %1189 = vmatpush1.xpose.msra.mxu0 0.0
    %1190 = vmatprep.subr.mxu0 0.0
    %1191 = vmatpush1.xpose.msra.mxu0 0.0
    %1192 = vmatprep.subr.mxu0 0.0
    %1193 = vmatpush1.xpose.msra.mxu0 0.0
    %1194 = vmatprep.subr.mxu0 0.0
    %1195 = vmatpush1.xpose.msra.mxu0 0.0
    %1196 = vmatprep.subr.mxu0 0.0
    %1197 = vmatpush1.xpose.msra.mxu0 0.0
    %1198 = vmatprep.subr.mxu0 0.0
    %1199 = vmatpush1.xpose.msra.mxu0 0.0
    %1200 = vmatprep.subr.mxu0 0.0
    %1201 = vmatpush1.xpose.msra.mxu0 0.0
    %1202 = vmatprep.subr.mxu0 0.0
    %1203 = vmatpush1.xpose.msra.mxu0 0.0
    %1204 = vmatprep.subr.mxu0 0.0
    %1205 = vmatpush1.xpose.msra.mxu0 0.0
    %1206 = vmatprep.subr.mxu0 0.0
    %1207 = vmatpush1.xpose.msra.mxu0 0.0
    %1208 = vmatprep.subr.mxu0 0.0
    %1209 = vmatpush1.xpose.msra.mxu0 0.0
    %1210 = vmatprep.subr.mxu0 0.0
    %1211 = vmatpush1.xpose.msra.mxu0 0.0
    %1212 = vmatprep.subr.mxu0 0.0
    %1213 = vmatpush1.xpose.msra.mxu0 0.0
    %1214 = vmatprep.subr.mxu0 0.0
    %1215 = vmatpush1.xpose.msra.mxu0 0.0
    %1216 = vmatprep.subr.mxu0 0.0
    %1217 = vmatpush1.xpose.msra.mxu0 0.0
    %1218 = vmatprep.subr.mxu0 0.0
    %1219 = vmatpush1.xpose.msra.mxu0 0.0
    %1220 = vmatprep.subr.mxu0 0.0
    %1221 = vmatpush1.xpose.msra.mxu0 0.0
    %1222 = vmatprep.subr.mxu0 0.0
    %1223 = vmatpush1.xpose.msra.mxu0 0.0
    %1224 = vmatprep.subr.mxu0 0.0
    %1225 = vmatpush1.xpose.msra.mxu0 0.0
    %1226 = vmatprep.subr.mxu0 0.0
    %1227 = vmatpush1.xpose.msra.mxu0 0.0
    %1228 = vmatprep.subr.mxu0 0.0
    %1229 = vmatpush1.xpose.msra.mxu0 0.0
    %1230 = vmatprep.subr.mxu0 0.0
    %1231 = vmatpush1.xpose.msra.mxu0 0.0
    %1232 = vmatprep.subr.mxu0 0.0
    %1233 = vmatpush1.xpose.msra.mxu0 0.0
    %1234 = vmatprep.subr.mxu0 0.0
    %1235 = vmatpush1.xpose.msra.mxu0 0.0
    %1236 = vmatprep.subr.mxu0 0.0
    %1237 = vmatpush1.xpose.msra.mxu0 0.0
    %1238 = vmatprep.mubr.f32.mxu0 0.0
    %1239 = vmatmul.mubr.f32.gmra.mrb[0].mxu0 %v1168
    %v1240 = vpop.f32.mrb[0].mxu0
    %v1241 = vadd.f32 0.0, %v1240
    %v1242 = vpop.f32.mrb[0].mxu0
    %1243 = vmatprep.mubr.f32.mxu0 0.0
    %1244 = vmatmul.mubr.f32.gmra.mrb[0].mxu0 %v1170
    %v1245 = vpop.f32.mrb[0].mxu0
    %v1246 = vadd.f32 0.0, %v1245
    %v1247 = vpop.f32.mrb[0].mxu0
    %1248 = vdwg.mxu0
    %v1249 = vsel %vm587, %v1241, -inf
    %1250 = vmax.xlane.f32.xlu0 %v1249
    %v1251 = vpop.xlane.xlu0 %1250
    %v1252 = vsel %vm587, %v1246, -inf
    %1253 = vmax.xlane.f32.xlu0 %v1252
    %v1254 = vpop.xlane.xlu0 %1253
    %v1255 = vsub.f32 %v1241, %v1251
    %v1256 = vsub.f32 %v1246, %v1254
    %v1257 = vmul.f32 %v1255, 1.442695
    %v1258 = vpow.pop %v1257
    %v1259 = vmul.f32 %v1256, 1.442695
    %v1260 = vpow.pop %v1259
    %v1261 = vsel %vm587, %v1258, 0.0
    %1262 = vadd.xlane.f32.xlu0 %v1261
    %v1263 = vpop.xlane.xlu0 %1262
    %v1264 = vsel %vm587, %v1260, 0.0
    %1265 = vadd.xlane.f32.xlu0 %v1264
    %v1266 = vpop.xlane.xlu0 %1265
    %v1267 = vrcp.pop %v1263
    %v1268 = vmul.f32 %v1258, %v1267
    %v1269 = vrcp.pop %v1266
    %v1270 = vmul.f32 %v1260, %v1269
    %1271 = vrot.lane.b32.xlu0 %v584, 104
    %v1272 = vpop.permute.xlu0 %1271
    %v1275 = vsel %vm587, %v1268, 0
    %v1278 = vsel %vm587, %v1270, 0
    %1280 = vmatprep.subr.mxu0 0.0
    %1281 = vmatpush1.msra.mxu0 %v1272
    %1282 = vmatprep.subr.mxu0 0.0
    %1283 = vmatpush1.msra.mxu0 0.0
    %1284 = vmatprep.subr.mxu0 0.0
    %1285 = vmatpush1.msra.mxu0 0.0
    %1286 = vmatprep.subr.mxu0 0.0
    %1287 = vmatpush1.msra.mxu0 0.0
    %1288 = vmatprep.subr.mxu0 0.0
    %1289 = vmatpush1.msra.mxu0 0.0
    %1290 = vmatprep.subr.mxu0 0.0
    %1291 = vmatpush1.msra.mxu0 0.0
    %1292 = vmatprep.subr.mxu0 0.0
    %1293 = vmatpush1.msra.mxu0 0.0
    %1294 = vmatprep.subr.mxu0 0.0
    %1295 = vmatpush1.msra.mxu0 0.0
    %1296 = vmatprep.subr.mxu0 0.0
    %1297 = vmatpush1.msra.mxu0 0.0
    %1298 = vmatprep.subr.mxu0 0.0
    %1299 = vmatpush1.msra.mxu0 0.0
    %1300 = vmatprep.subr.mxu0 0.0
    %1301 = vmatpush1.msra.mxu0 0.0
    %1302 = vmatprep.subr.mxu0 0.0
    %1303 = vmatpush1.msra.mxu0 0.0
    %1304 = vmatprep.subr.mxu0 0.0
    %1305 = vmatpush1.msra.mxu0 0.0
    %1306 = vmatprep.subr.mxu0 0.0
    %1307 = vmatpush1.msra.mxu0 0.0
    %1308 = vmatprep.subr.mxu0 0.0
    %1309 = vmatpush1.msra.mxu0 0.0
    %1310 = vmatprep.subr.mxu0 0.0
    %1311 = vmatpush1.msra.mxu0 0.0
    %1312 = vmatprep.subr.mxu0 0.0
    %1313 = vmatpush1.msra.mxu0 0.0
    %1314 = vmatprep.subr.mxu0 0.0
    %1315 = vmatpush1.msra.mxu0 0.0
    %1316 = vmatprep.subr.mxu0 0.0
    %1317 = vmatpush1.msra.mxu0 0.0
    %1318 = vmatprep.subr.mxu0 0.0
    %1319 = vmatpush1.msra.mxu0 0.0
    %1320 = vmatprep.subr.mxu0 0.0
    %1321 = vmatpush1.msra.mxu0 0.0
    %1322 = vmatprep.subr.mxu0 0.0
    %1323 = vmatpush1.msra.mxu0 0.0
    %1324 = vmatprep.subr.mxu0 0.0
    %1325 = vmatpush1.msra.mxu0 0.0
    %1326 = vmatprep.subr.mxu0 0.0
    %1327 = vmatpush1.msra.mxu0 0.0
    %1328 = vmatprep.subr.mxu0 0.0
    %1329 = vmatpush1.msra.mxu0 0.0
    %1330 = vmatprep.subr.mxu0 0.0
    %1331 = vmatpush1.msra.mxu0 0.0
    %1332 = vmatprep.subr.mxu0 0.0
    %1333 = vmatpush1.msra.mxu0 0.0
    %1334 = vmatprep.subr.mxu0 0.0
    %1335 = vmatpush1.msra.mxu0 0.0
    %1336 = vmatprep.subr.mxu0 0.0
    %1337 = vmatpush1.msra.mxu0 0.0
    %1338 = vmatprep.subr.mxu0 0.0
    %1339 = vmatpush1.msra.mxu0 0.0
    %1340 = vmatprep.subr.mxu0 0.0
    %1341 = vmatpush1.msra.mxu0 0.0
    %1342 = vmatprep.subr.mxu0 0.0
    %1343 = vmatpush1.msra.mxu0 0.0
    %1344 = vmatprep.mubr.f32.mxu0 0.0
    %1345 = vmatmul.mubr.f32.gmra.mrb[0].mxu0 %v1275
    %v1346 = vpop.f32.mrb[0].mxu0
    %v1347 = vadd.f32 0.0, %v1346
    %v1348 = vpop.f32.mrb[0].mxu0
    %1349 = vmatprep.mubr.f32.mxu0 0.0
    %1350 = vmatmul.mubr.f32.gmra.mrb[0].mxu0 %v1278
    %v1351 = vpop.f32.mrb[0].mxu0
    %v1352 = vadd.f32 0.0, %v1351
    %v1353 = vpop.f32.mrb[0].mxu0
    %1354 = vdwg.mxu0
    %1357 = vrot.lane.b32.xlu0 %v961, 8
    %v1358 = vpop.permute.xlu0 %1357
    %1359 = vrot.lane.b32.xlu0 %v966, 8
    %v1360 = vpop.permute.xlu0 %1359
    %1365 = vrot.lane.b32.xlu0 %v1154, 16
    %v1366 = vpop.permute.xlu0 %1365
    %1367 = vrot.lane.b32.xlu0 %v1159, 16
    %v1368 = vpop.permute.xlu0 %1367
    %1373 = vrot.lane.b32.xlu0 %v1347, 24
    %v1374 = vpop.permute.xlu0 %1373
    %1375 = vrot.lane.b32.xlu0 %v1352, 24
    %v1376 = vpop.permute.xlu0 %1375
    %v1379 = vsel %vm587, %v767, %v1358
    %v1380 = vsel %vm587, %v772, %v1360
    %v1381 = vsel %vm440, %v1379, %v1366
    %v1382 = vsel %vm440, %v1380, %v1368
    %vm1383 = vcmask 195584
    %v1384 = vsel %vm1383, %v1381, %v1374
    %v1385 = vsel %vm1383, %v1382, %v1376
    %v1387 = vlaneseq
    %v1388 = vshrl.u32 %v1387, 7
    %v1389 = vsub.s32 0, %v1388
    %v1390 = vrot.slane %v147, %v1389
    %v1393 = vsel %vm160, %v1384, 0
    %v1396 = vsel %vm160, %v1385, 0
    %1398 = vmatprep.subr.mxu0 0.0
    %1399 = vmatpush1.msra.mxu0 %v140
    %1400 = vmatprep.subr.mxu0 0.0
    %1401 = vmatpush1.msra.mxu0 %v141
    %1402 = vmatprep.subr.mxu0 0.0
    %1403 = vmatpush1.msra.mxu0 %v142
    %1404 = vmatprep.subr.mxu0 0.0
    %1405 = vmatpush1.msra.mxu0 %v143
    %1406 = vmatprep.subr.mxu0 0.0
    %1407 = vmatpush1.msra.mxu0 0.0
    %1408 = vmatprep.subr.mxu0 0.0
    %1409 = vmatpush1.msra.mxu0 0.0
    %1410 = vmatprep.subr.mxu0 0.0
    %1411 = vmatpush1.msra.mxu0 0.0
    %1412 = vmatprep.subr.mxu0 0.0
    %1413 = vmatpush1.msra.mxu0 0.0
    %1414 = vmatprep.subr.mxu0 0.0
    %1415 = vmatpush1.msra.mxu0 0.0
    %1416 = vmatprep.subr.mxu0 0.0
    %1417 = vmatpush1.msra.mxu0 0.0
    %1418 = vmatprep.subr.mxu0 0.0
    %1419 = vmatpush1.msra.mxu0 0.0
    %1420 = vmatprep.subr.mxu0 0.0
    %1421 = vmatpush1.msra.mxu0 0.0
    %1422 = vmatprep.subr.mxu0 0.0
    %1423 = vmatpush1.msra.mxu0 0.0
    %1424 = vmatprep.subr.mxu0 0.0
    %1425 = vmatpush1.msra.mxu0 0.0
    %1426 = vmatprep.subr.mxu0 0.0
    %1427 = vmatpush1.msra.mxu0 0.0
    %1428 = vmatprep.subr.mxu0 0.0
    %1429 = vmatpush1.msra.mxu0 0.0
    %1430 = vmatprep.subr.mxu0 0.0
    %1431 = vmatpush1.msra.mxu0 0.0
    %1432 = vmatprep.subr.mxu0 0.0
    %1433 = vmatpush1.msra.mxu0 0.0
    %1434 = vmatprep.subr.mxu0 0.0
    %1435 = vmatpush1.msra.mxu0 0.0
    %1436 = vmatprep.subr.mxu0 0.0
    %1437 = vmatpush1.msra.mxu0 0.0
    %1438 = vmatprep.subr.mxu0 0.0
    %1439 = vmatpush1.msra.mxu0 0.0
    %1440 = vmatprep.subr.mxu0 0.0
    %1441 = vmatpush1.msra.mxu0 0.0
    %1442 = vmatprep.subr.mxu0 0.0
    %1443 = vmatpush1.msra.mxu0 0.0
    %1444 = vmatprep.subr.mxu0 0.0
    %1445 = vmatpush1.msra.mxu0 0.0
    %1446 = vmatprep.subr.mxu0 0.0
    %1447 = vmatpush1.msra.mxu0 0.0
    %1448 = vmatprep.subr.mxu0 0.0
    %1449 = vmatpush1.msra.mxu0 0.0
    %1450 = vmatprep.subr.mxu0 0.0
    %1451 = vmatpush1.msra.mxu0 0.0
    %1452 = vmatprep.subr.mxu0 0.0
    %1453 = vmatpush1.msra.mxu0 0.0
    %1454 = vmatprep.subr.mxu0 0.0
    %1455 = vmatpush1.msra.mxu0 0.0
    %1456 = vmatprep.subr.mxu0 0.0
    %1457 = vmatpush1.msra.mxu0 0.0
    %1458 = vmatprep.subr.mxu0 0.0
    %1459 = vmatpush1.msra.mxu0 0.0
    %1460 = vmatprep.subr.mxu0 0.0
    %1461 = vmatpush1.msra.mxu0 0.0
    %1462 = vmatprep.mubr.f32.mxu0 0.0
    %1463 = vmatmul.mubr.f32.gmra.mrb[0].mxu0 %v1393
    %v1464 = vpop.f32.mrb[0].mxu0
    %v1465 = vadd.f32 %v1390, %v1464
    %v1466 = vpop.f32.mrb[0].mxu0
    %1467 = vmatprep.mubr.f32.mxu0 0.0
    %1468 = vmatmul.mubr.f32.gmra.mrb[0].mxu0 %v1396
    %v1469 = vpop.f32.mrb[0].mxu0
    %v1470 = vadd.f32 %v1390, %v1469
    %v1471 = vpop.f32.mrb[0].mxu0
    %1472 = vdwg.mxu0
    %1473 = vst.msk [vmem:[#allocation14] sm:$0xff] %vm160, %v1465
    %1474 = vst.msk [vmem:[#allocation14 + $0x8] sm:$0xff] %vm160, %v1470
    %1475 = vmatprep.subr.mxu0 0.0
    %1476 = vmatpush1.msra.mxu0 %v341
    %1477 = vmatprep.subr.mxu0 0.0
    %1478 = vmatpush1.msra.mxu0 %v346
    %1479 = vmatprep.subr.mxu0 0.0
    %1480 = vmatpush1.msra.mxu0 0.0
    %1481 = vmatprep.subr.mxu0 0.0
    %1482 = vmatpush1.msra.mxu0 0.0
    %1483 = vmatprep.subr.mxu0 0.0
    %1484 = vmatpush1.msra.mxu0 0.0
    %1485 = vmatprep.subr.mxu0 0.0
    %1486 = vmatpush1.msra.mxu0 0.0
    %1487 = vmatprep.subr.mxu0 0.0
    %1488 = vmatpush1.msra.mxu0 0.0
    %1489 = vmatprep.subr.mxu0 0.0
    %1490 = vmatpush1.msra.mxu0 0.0
    %1491 = vmatprep.subr.mxu0 0.0
    %1492 = vmatpush1.msra.mxu0 0.0
    %1493 = vmatprep.subr.mxu0 0.0
    %1494 = vmatpush1.msra.mxu0 0.0
    %1495 = vmatprep.subr.mxu0 0.0
    %1496 = vmatpush1.msra.mxu0 0.0
    %1497 = vmatprep.subr.mxu0 0.0
    %1498 = vmatpush1.msra.mxu0 0.0
    %1499 = vmatprep.subr.mxu0 0.0
    %1500 = vmatpush1.msra.mxu0 0.0
    %1501 = vmatprep.subr.mxu0 0.0
    %1502 = vmatpush1.msra.mxu0 0.0
    %1503 = vmatprep.subr.mxu0 0.0
    %1504 = vmatpush1.msra.mxu0 0.0
    %1505 = vmatprep.subr.mxu0 0.0
    %1506 = vmatpush1.msra.mxu0 0.0
    %1507 = vmatprep.subr.mxu0 0.0
    %1508 = vmatpush1.msra.mxu0 0.0
    %1509 = vmatprep.subr.mxu0 0.0
    %1510 = vmatpush1.msra.mxu0 0.0
    %1511 = vmatprep.subr.mxu0 0.0
    %1512 = vmatpush1.msra.mxu0 0.0
    %1513 = vmatprep.subr.mxu0 0.0
    %1514 = vmatpush1.msra.mxu0 0.0
    %1515 = vmatprep.subr.mxu0 0.0
    %1516 = vmatpush1.msra.mxu0 0.0
    %1517 = vmatprep.subr.mxu0 0.0
    %1518 = vmatpush1.msra.mxu0 0.0
    %1519 = vmatprep.subr.mxu0 0.0
    %1520 = vmatpush1.msra.mxu0 0.0
    %1521 = vmatprep.subr.mxu0 0.0
    %1522 = vmatpush1.msra.mxu0 0.0
    %1523 = vmatprep.subr.mxu0 0.0
    %1524 = vmatpush1.msra.mxu0 0.0
    %1525 = vmatprep.subr.mxu0 0.0
    %1526 = vmatpush1.msra.mxu0 0.0
    %1527 = vmatprep.subr.mxu0 0.0
    %1528 = vmatpush1.msra.mxu0 0.0
    %1529 = vmatprep.subr.mxu0 0.0
    %1530 = vmatpush1.msra.mxu0 0.0
    %1531 = vmatprep.subr.mxu0 0.0
    %1532 = vmatpush1.msra.mxu0 0.0
    %1533 = vmatprep.subr.mxu0 0.0
    %1534 = vmatpush1.msra.mxu0 0.0
    %1535 = vmatprep.subr.mxu0 0.0
    %1536 = vmatpush1.msra.mxu0 0.0
    %1537 = vmatprep.subr.mxu0 0.0
    %1538 = vmatpush1.msra.mxu0 0.0
    %1539 = vmatprep.mubr.f32.mxu0 0.0
    %1540 = vmatmul.mubr.f32.gmra.mrb[0].mxu0 %v442
    %v1541 = vpop.f32.mrb[0].mxu0
    %v1542 = vadd.f32 0.0, %v1541
    %v1543 = vpop.f32.mrb[0].mxu0
    %1544 = vdwg.mxu0
    %1545 = vmatprep.subr.mxu0 0.0
    %1546 = vmatpush1.msra.mxu0 %v432
    %1547 = vmatprep.subr.mxu0 0.0
    %1548 = vmatpush1.msra.mxu0 %v437
    %1549 = vmatprep.subr.mxu0 0.0
    %1550 = vmatpush1.msra.mxu0 0.0
    %1551 = vmatprep.subr.mxu0 0.0
    %1552 = vmatpush1.msra.mxu0 0.0
    %1553 = vmatprep.subr.mxu0 0.0
    %1554 = vmatpush1.msra.mxu0 0.0
    %1555 = vmatprep.subr.mxu0 0.0
    %1556 = vmatpush1.msra.mxu0 0.0
    %1557 = vmatprep.subr.mxu0 0.0
    %1558 = vmatpush1.msra.mxu0 0.0
    %1559 = vmatprep.subr.mxu0 0.0
    %1560 = vmatpush1.msra.mxu0 0.0
    %1561 = vmatprep.subr.mxu0 0.0
    %1562 = vmatpush1.msra.mxu0 0.0
    %1563 = vmatprep.subr.mxu0 0.0
    %1564 = vmatpush1.msra.mxu0 0.0
    %1565 = vmatprep.subr.mxu0 0.0
    %1566 = vmatpush1.msra.mxu0 0.0
    %1567 = vmatprep.subr.mxu0 0.0
    %1568 = vmatpush1.msra.mxu0 0.0
    %1569 = vmatprep.subr.mxu0 0.0
    %1570 = vmatpush1.msra.mxu0 0.0
    %1571 = vmatprep.subr.mxu0 0.0
    %1572 = vmatpush1.msra.mxu0 0.0
    %1573 = vmatprep.subr.mxu0 0.0
    %1574 = vmatpush1.msra.mxu0 0.0
    %1575 = vmatprep.subr.mxu0 0.0
    %1576 = vmatpush1.msra.mxu0 0.0
    %1577 = vmatprep.subr.mxu0 0.0
    %1578 = vmatpush1.msra.mxu0 0.0
    %1579 = vmatprep.subr.mxu0 0.0
    %1580 = vmatpush1.msra.mxu0 0.0
    %1581 = vmatprep.subr.mxu0 0.0
    %1582 = vmatpush1.msra.mxu0 0.0
    %1583 = vmatprep.subr.mxu0 0.0
    %1584 = vmatpush1.msra.mxu0 0.0
    %1585 = vmatprep.subr.mxu0 0.0
    %1586 = vmatpush1.msra.mxu0 0.0
    %1587 = vmatprep.subr.mxu0 0.0
    %1588 = vmatpush1.msra.mxu0 0.0
    %1589 = vmatprep.subr.mxu0 0.0
    %1590 = vmatpush1.msra.mxu0 0.0
    %1591 = vmatprep.subr.mxu0 0.0
    %1592 = vmatpush1.msra.mxu0 0.0
    %1593 = vmatprep.subr.mxu0 0.0
    %1594 = vmatpush1.msra.mxu0 0.0
    %1595 = vmatprep.subr.mxu0 0.0
    %1596 = vmatpush1.msra.mxu0 0.0
    %1597 = vmatprep.subr.mxu0 0.0
    %1598 = vmatpush1.msra.mxu0 0.0
    %1599 = vmatprep.subr.mxu0 0.0
    %1600 = vmatpush1.msra.mxu0 0.0
    %1601 = vmatprep.subr.mxu0 0.0
    %1602 = vmatpush1.msra.mxu0 0.0
    %1603 = vmatprep.subr.mxu0 0.0
    %1604 = vmatpush1.msra.mxu0 0.0
    %1605 = vmatprep.subr.mxu0 0.0
    %1606 = vmatpush1.msra.mxu0 0.0
    %1607 = vmatprep.subr.mxu0 0.0
    %1608 = vmatpush1.msra.mxu0 0.0
    %1609 = vmatprep.mubr.f32.mxu0 0.0
    %1610 = vmatmul.mubr.f32.gmra.mrb[0].mxu0 %v515
    %v1611 = vpop.f32.mrb[0].mxu0
    %v1612 = vadd.f32 0.0, %v1611
    %v1613 = vpop.f32.mrb[0].mxu0
    %1614 = vdwg.mxu0
    %v1616 = vsel %vm587, %v250, 0
    %v1619 = vsel %vm587, %v255, 0
    %v1622 = vsel %vm587, %v1542, 0
    %1624 = vmatprep.subr.mxu0 0.0
    %1625 = vmatpush1.xpose.msra.mxu0 %v1622
    %1626 = vmatprep.subr.mxu0 0.0
    %1627 = vmatpush1.xpose.msra.mxu0 0.0
    %1628 = vmatprep.subr.mxu0 0.0
    %1629 = vmatpush1.xpose.msra.mxu0 0.0
    %1630 = vmatprep.subr.mxu0 0.0
    %1631 = vmatpush1.xpose.msra.mxu0 0.0
    %1632 = vmatprep.subr.mxu0 0.0
    %1633 = vmatpush1.xpose.msra.mxu0 0.0
    %1634 = vmatprep.subr.mxu0 0.0
    %1635 = vmatpush1.xpose.msra.mxu0 0.0
    %1636 = vmatprep.subr.mxu0 0.0
    %1637 = vmatpush1.xpose.msra.mxu0 0.0
    %1638 = vmatprep.subr.mxu0 0.0
    %1639 = vmatpush1.xpose.msra.mxu0 0.0
    %1640 = vmatprep.subr.mxu0 0.0
    %1641 = vmatpush1.xpose.msra.mxu0 0.0
    %1642 = vmatprep.subr.mxu0 0.0
    %1643 = vmatpush1.xpose.msra.mxu0 0.0
    %1644 = vmatprep.subr.mxu0 0.0
    %1645 = vmatpush1.xpose.msra.mxu0 0.0
    %1646 = vmatprep.subr.mxu0 0.0
    %1647 = vmatpush1.xpose.msra.mxu0 0.0
    %1648 = vmatprep.subr.mxu0 0.0
    %1649 = vmatpush1.xpose.msra.mxu0 0.0
    %1650 = vmatprep.subr.mxu0 0.0
    %1651 = vmatpush1.xpose.msra.mxu0 0.0
    %1652 = vmatprep.subr.mxu0 0.0
    %1653 = vmatpush1.xpose.msra.mxu0 0.0
    %1654 = vmatprep.subr.mxu0 0.0
    %1655 = vmatpush1.xpose.msra.mxu0 0.0
    %1656 = vmatprep.subr.mxu0 0.0
    %1657 = vmatpush1.xpose.msra.mxu0 0.0
    %1658 = vmatprep.subr.mxu0 0.0
    %1659 = vmatpush1.xpose.msra.mxu0 0.0
    %1660 = vmatprep.subr.mxu0 0.0
    %1661 = vmatpush1.xpose.msra.mxu0 0.0
    %1662 = vmatprep.subr.mxu0 0.0
    %1663 = vmatpush1.xpose.msra.mxu0 0.0
    %1664 = vmatprep.subr.mxu0 0.0
    %1665 = vmatpush1.xpose.msra.mxu0 0.0
    %1666 = vmatprep.subr.mxu0 0.0
    %1667 = vmatpush1.xpose.msra.mxu0 0.0
    %1668 = vmatprep.subr.mxu0 0.0
    %1669 = vmatpush1.xpose.msra.mxu0 0.0
    %1670 = vmatprep.subr.mxu0 0.0
    %1671 = vmatpush1.xpose.msra.mxu0 0.0
    %1672 = vmatprep.subr.mxu0 0.0
    %1673 = vmatpush1.xpose.msra.mxu0 0.0
    %1674 = vmatprep.subr.mxu0 0.0
    %1675 = vmatpush1.xpose.msra.mxu0 0.0
    %1676 = vmatprep.subr.mxu0 0.0
    %1677 = vmatpush1.xpose.msra.mxu0 0.0
    %1678 = vmatprep.subr.mxu0 0.0
    %1679 = vmatpush1.xpose.msra.mxu0 0.0
    %1680 = vmatprep.subr.mxu0 0.0
    %1681 = vmatpush1.xpose.msra.mxu0 0.0
    %1682 = vmatprep.subr.mxu0 0.0
    %1683 = vmatpush1.xpose.msra.mxu0 0.0
    %1684 = vmatprep.subr.mxu0 0.0
    %1685 = vmatpush1.xpose.msra.mxu0 0.0
    %1686 = vmatprep.subr.mxu0 0.0
    %1687 = vmatpush1.xpose.msra.mxu0 0.0
    %1688 = vmatprep.mubr.f32.mxu0 0.0
    %1689 = vmatmul.mubr.f32.gmra.mrb[0].mxu0 %v1616
    %v1690 = vpop.f32.mrb[0].mxu0
    %v1691 = vadd.f32 0.0, %v1690
    %v1692 = vpop.f32.mrb[0].mxu0
    %1693 = vmatprep.mubr.f32.mxu0 0.0
    %1694 = vmatmul.mubr.f32.gmra.mrb[0].mxu0 %v1619
    %v1695 = vpop.f32.mrb[0].mxu0
    %v1696 = vadd.f32 0.0, %v1695
    %v1697 = vpop.f32.mrb[0].mxu0
    %1698 = vdwg.mxu0
    %v1699 = vsel %vm587, %v1691, -inf
    %1700 = vmax.xlane.f32.xlu0 %v1699
    %v1701 = vpop.xlane.xlu0 %1700
    %v1702 = vsel %vm587, %v1696, -inf
    %1703 = vmax.xlane.f32.xlu0 %v1702
    %v1704 = vpop.xlane.xlu0 %1703
    %v1705 = vsub.f32 %v1691, %v1701
    %v1706 = vsub.f32 %v1696, %v1704
    %v1707 = vmul.f32 %v1705, 1.442695
    %v1708 = vpow.pop %v1707
    %v1709 = vmul.f32 %v1706, 1.442695
    %v1710 = vpow.pop %v1709
    %v1711 = vsel %vm587, %v1708, 0.0
    %1712 = vadd.xlane.f32.xlu0 %v1711
    %v1713 = vpop.xlane.xlu0 %1712
    %v1714 = vsel %vm587, %v1710, 0.0
    %1715 = vadd.xlane.f32.xlu0 %v1714
    %v1716 = vpop.xlane.xlu0 %1715
    %v1717 = vrcp.pop %v1713
    %v1718 = vmul.f32 %v1708, %v1717
    %v1719 = vrcp.pop %v1716
    %v1720 = vmul.f32 %v1710, %v1719
    %v1722 = vsel %vm587, %v1718, 0
    %v1725 = vsel %vm587, %v1720, 0
    %1727 = vmatprep.subr.mxu0 0.0
    %1728 = vmatpush1.msra.mxu0 %v1612
    %1729 = vmatprep.subr.mxu0 0.0
    %1730 = vmatpush1.msra.mxu0 0.0
    %1731 = vmatprep.subr.mxu0 0.0
    %1732 = vmatpush1.msra.mxu0 0.0
    %1733 = vmatprep.subr.mxu0 0.0
    %1734 = vmatpush1.msra.mxu0 0.0
    %1735 = vmatprep.subr.mxu0 0.0
    %1736 = vmatpush1.msra.mxu0 0.0
    %1737 = vmatprep.subr.mxu0 0.0
    %1738 = vmatpush1.msra.mxu0 0.0
    %1739 = vmatprep.subr.mxu0 0.0
    %1740 = vmatpush1.msra.mxu0 0.0
    %1741 = vmatprep.subr.mxu0 0.0
    %1742 = vmatpush1.msra.mxu0 0.0
    %1743 = vmatprep.subr.mxu0 0.0
    %1744 = vmatpush1.msra.mxu0 0.0
    %1745 = vmatprep.subr.mxu0 0.0
    %1746 = vmatpush1.msra.mxu0 0.0
    %1747 = vmatprep.subr.mxu0 0.0
    %1748 = vmatpush1.msra.mxu0 0.0
    %1749 = vmatprep.subr.mxu0 0.0
    %1750 = vmatpush1.msra.mxu0 0.0
    %1751 = vmatprep.subr.mxu0 0.0
    %1752 = vmatpush1.msra.mxu0 0.0
    %1753 = vmatprep.subr.mxu0 0.0
    %1754 = vmatpush1.msra.mxu0 0.0
    %1755 = vmatprep.subr.mxu0 0.0
    %1756 = vmatpush1.msra.mxu0 0.0
    %1757 = vmatprep.subr.mxu0 0.0
    %1758 = vmatpush1.msra.mxu0 0.0
    %1759 = vmatprep.subr.mxu0 0.0
    %1760 = vmatpush1.msra.mxu0 0.0
    %1761 = vmatprep.subr.mxu0 0.0
    %1762 = vmatpush1.msra.mxu0 0.0
    %1763 = vmatprep.subr.mxu0 0.0
    %1764 = vmatpush1.msra.mxu0 0.0
    %1765 = vmatprep.subr.mxu0 0.0
    %1766 = vmatpush1.msra.mxu0 0.0
    %1767 = vmatprep.subr.mxu0 0.0
    %1768 = vmatpush1.msra.mxu0 0.0
    %1769 = vmatprep.subr.mxu0 0.0
    %1770 = vmatpush1.msra.mxu0 0.0
    %1771 = vmatprep.subr.mxu0 0.0
    %1772 = vmatpush1.msra.mxu0 0.0
    %1773 = vmatprep.subr.mxu0 0.0
    %1774 = vmatpush1.msra.mxu0 0.0
    %1775 = vmatprep.subr.mxu0 0.0
    %1776 = vmatpush1.msra.mxu0 0.0
    %1777 = vmatprep.subr.mxu0 0.0
    %1778 = vmatpush1.msra.mxu0 0.0
    %1779 = vmatprep.subr.mxu0 0.0
    %1780 = vmatpush1.msra.mxu0 0.0
    %1781 = vmatprep.subr.mxu0 0.0
    %1782 = vmatpush1.msra.mxu0 0.0
    %1783 = vmatprep.subr.mxu0 0.0
    %1784 = vmatpush1.msra.mxu0 0.0
    %1785 = vmatprep.subr.mxu0 0.0
    %1786 = vmatpush1.msra.mxu0 0.0
    %1787 = vmatprep.subr.mxu0 0.0
    %1788 = vmatpush1.msra.mxu0 0.0
    %1789 = vmatprep.subr.mxu0 0.0
    %1790 = vmatpush1.msra.mxu0 0.0
    %1791 = vmatprep.mubr.f32.mxu0 0.0
    %1792 = vmatmul.mubr.f32.gmra.mrb[0].mxu0 %v1722
    %v1793 = vpop.f32.mrb[0].mxu0
    %v1794 = vadd.f32 0.0, %v1793
    %v1795 = vpop.f32.mrb[0].mxu0
    %1796 = vmatprep.mubr.f32.mxu0 0.0
    %1797 = vmatmul.mubr.f32.gmra.mrb[0].mxu0 %v1725
    %v1798 = vpop.f32.mrb[0].mxu0
    %v1799 = vadd.f32 0.0, %v1798
    %v1800 = vpop.f32.mrb[0].mxu0
    %1801 = vdwg.mxu0
    %1802 = vrot.lane.b32.xlu0 %v250, 120
    %v1803 = vpop.permute.xlu0 %1802
    %1804 = vrot.lane.b32.xlu0 %v255, 120
    %v1805 = vpop.permute.xlu0 %1804
    %1806 = vrot.lane.b32.xlu0 %v1542, 120
    %v1807 = vpop.permute.xlu0 %1806
    %v1808 = vsel %vm587, %v1803, 0
    %v1810 = vsel %vm587, %v1805, 0
    %v1812 = vsel %vm587, %v1807, 0
    %1814 = vmatprep.subr.mxu0 0.0
    %1815 = vmatpush1.xpose.msra.mxu0 %v1812
    %1816 = vmatprep.subr.mxu0 0.0
    %1817 = vmatpush1.xpose.msra.mxu0 0.0
    %1818 = vmatprep.subr.mxu0 0.0
    %1819 = vmatpush1.xpose.msra.mxu0 0.0
    %1820 = vmatprep.subr.mxu0 0.0
    %1821 = vmatpush1.xpose.msra.mxu0 0.0
    %1822 = vmatprep.subr.mxu0 0.0
    %1823 = vmatpush1.xpose.msra.mxu0 0.0
    %1824 = vmatprep.subr.mxu0 0.0
    %1825 = vmatpush1.xpose.msra.mxu0 0.0
    %1826 = vmatprep.subr.mxu0 0.0
    %1827 = vmatpush1.xpose.msra.mxu0 0.0
    %1828 = vmatprep.subr.mxu0 0.0
    %1829 = vmatpush1.xpose.msra.mxu0 0.0
    %1830 = vmatprep.subr.mxu0 0.0
    %1831 = vmatpush1.xpose.msra.mxu0 0.0
    %1832 = vmatprep.subr.mxu0 0.0
    %1833 = vmatpush1.xpose.msra.mxu0 0.0
    %1834 = vmatprep.subr.mxu0 0.0
    %1835 = vmatpush1.xpose.msra.mxu0 0.0
    %1836 = vmatprep.subr.mxu0 0.0
    %1837 = vmatpush1.xpose.msra.mxu0 0.0
    %1838 = vmatprep.subr.mxu0 0.0
    %1839 = vmatpush1.xpose.msra.mxu0 0.0
    %1840 = vmatprep.subr.mxu0 0.0
    %1841 = vmatpush1.xpose.msra.mxu0 0.0
    %1842 = vmatprep.subr.mxu0 0.0
    %1843 = vmatpush1.xpose.msra.mxu0 0.0
    %1844 = vmatprep.subr.mxu0 0.0
    %1845 = vmatpush1.xpose.msra.mxu0 0.0
    %1846 = vmatprep.subr.mxu0 0.0
    %1847 = vmatpush1.xpose.msra.mxu0 0.0
    %1848 = vmatprep.subr.mxu0 0.0
    %1849 = vmatpush1.xpose.msra.mxu0 0.0
    %1850 = vmatprep.subr.mxu0 0.0
    %1851 = vmatpush1.xpose.msra.mxu0 0.0
    %1852 = vmatprep.subr.mxu0 0.0
    %1853 = vmatpush1.xpose.msra.mxu0 0.0
    %1854 = vmatprep.subr.mxu0 0.0
    %1855 = vmatpush1.xpose.msra.mxu0 0.0
    %1856 = vmatprep.subr.mxu0 0.0
    %1857 = vmatpush1.xpose.msra.mxu0 0.0
    %1858 = vmatprep.subr.mxu0 0.0
    %1859 = vmatpush1.xpose.msra.mxu0 0.0
    %1860 = vmatprep.subr.mxu0 0.0
    %1861 = vmatpush1.xpose.msra.mxu0 0.0
    %1862 = vmatprep.subr.mxu0 0.0
    %1863 = vmatpush1.xpose.msra.mxu0 0.0
    %1864 = vmatprep.subr.mxu0 0.0
    %1865 = vmatpush1.xpose.msra.mxu0 0.0
    %1866 = vmatprep.subr.mxu0 0.0
    %1867 = vmatpush1.xpose.msra.mxu0 0.0
    %1868 = vmatprep.subr.mxu0 0.0
    %1869 = vmatpush1.xpose.msra.mxu0 0.0
    %1870 = vmatprep.subr.mxu0 0.0
    %1871 = vmatpush1.xpose.msra.mxu0 0.0
    %1872 = vmatprep.subr.mxu0 0.0
    %1873 = vmatpush1.xpose.msra.mxu0 0.0
    %1874 = vmatprep.subr.mxu0 0.0
    %1875 = vmatpush1.xpose.msra.mxu0 0.0
    %1876 = vmatprep.subr.mxu0 0.0
    %1877 = vmatpush1.xpose.msra.mxu0 0.0
    %1878 = vmatprep.mubr.f32.mxu0 0.0
    %1879 = vmatmul.mubr.f32.gmra.mrb[0].mxu0 %v1808
    %v1880 = vpop.f32.mrb[0].mxu0
    %v1881 = vadd.f32 0.0, %v1880
    %v1882 = vpop.f32.mrb[0].mxu0
    %1883 = vmatprep.mubr.f32.mxu0 0.0
    %1884 = vmatmul.mubr.f32.gmra.mrb[0].mxu0 %v1810
    %v1885 = vpop.f32.mrb[0].mxu0
    %v1886 = vadd.f32 0.0, %v1885
    %v1887 = vpop.f32.mrb[0].mxu0
    %1888 = vdwg.mxu0
    %v1889 = vsel %vm587, %v1881, -inf
    %1890 = vmax.xlane.f32.xlu0 %v1889
    %v1891 = vpop.xlane.xlu0 %1890
    %v1892 = vsel %vm587, %v1886, -inf
    %1893 = vmax.xlane.f32.xlu0 %v1892
    %v1894 = vpop.xlane.xlu0 %1893
    %v1895 = vsub.f32 %v1881, %v1891
    %v1896 = vsub.f32 %v1886, %v1894
    %v1897 = vmul.f32 %v1895, 1.442695
    %v1898 = vpow.pop %v1897
    %v1899 = vmul.f32 %v1896, 1.442695
    %v1900 = vpow.pop %v1899
    %v1901 = vsel %vm587, %v1898, 0.0
    %1902 = vadd.xlane.f32.xlu0 %v1901
    %v1903 = vpop.xlane.xlu0 %1902
    %v1904 = vsel %vm587, %v1900, 0.0
    %1905 = vadd.xlane.f32.xlu0 %v1904
    %v1906 = vpop.xlane.xlu0 %1905
    %v1907 = vrcp.pop %v1903
    %v1908 = vmul.f32 %v1898, %v1907
    %v1909 = vrcp.pop %v1906
    %v1910 = vmul.f32 %v1900, %v1909
    %1912 = vrot.lane.b32.xlu0 %v1612, 120
    %v1913 = vpop.permute.xlu0 %1912
    %v1916 = vsel %vm587, %v1908, 0
    %v1919 = vsel %vm587, %v1910, 0
    %1921 = vmatprep.subr.mxu0 0.0
    %1922 = vmatpush1.msra.mxu0 %v1913
    %1923 = vmatprep.subr.mxu0 0.0
    %1924 = vmatpush1.msra.mxu0 0.0
    %1925 = vmatprep.subr.mxu0 0.0
    %1926 = vmatpush1.msra.mxu0 0.0
    %1927 = vmatprep.subr.mxu0 0.0
    %1928 = vmatpush1.msra.mxu0 0.0
    %1929 = vmatprep.subr.mxu0 0.0
    %1930 = vmatpush1.msra.mxu0 0.0
    %1931 = vmatprep.subr.mxu0 0.0
    %1932 = vmatpush1.msra.mxu0 0.0
    %1933 = vmatprep.subr.mxu0 0.0
    %1934 = vmatpush1.msra.mxu0 0.0
    %1935 = vmatprep.subr.mxu0 0.0
    %1936 = vmatpush1.msra.mxu0 0.0
    %1937 = vmatprep.subr.mxu0 0.0
    %1938 = vmatpush1.msra.mxu0 0.0
    %1939 = vmatprep.subr.mxu0 0.0
    %1940 = vmatpush1.msra.mxu0 0.0
    %1941 = vmatprep.subr.mxu0 0.0
    %1942 = vmatpush1.msra.mxu0 0.0
    %1943 = vmatprep.subr.mxu0 0.0
    %1944 = vmatpush1.msra.mxu0 0.0
    %1945 = vmatprep.subr.mxu0 0.0
    %1946 = vmatpush1.msra.mxu0 0.0
    %1947 = vmatprep.subr.mxu0 0.0
    %1948 = vmatpush1.msra.mxu0 0.0
    %1949 = vmatprep.subr.mxu0 0.0
    %1950 = vmatpush1.msra.mxu0 0.0
    %1951 = vmatprep.subr.mxu0 0.0
    %1952 = vmatpush1.msra.mxu0 0.0
    %1953 = vmatprep.subr.mxu0 0.0
    %1954 = vmatpush1.msra.mxu0 0.0
    %1955 = vmatprep.subr.mxu0 0.0
    %1956 = vmatpush1.msra.mxu0 0.0
    %1957 = vmatprep.subr.mxu0 0.0
    %1958 = vmatpush1.msra.mxu0 0.0
    %1959 = vmatprep.subr.mxu0 0.0
    %1960 = vmatpush1.msra.mxu0 0.0
    %1961 = vmatprep.subr.mxu0 0.0
    %1962 = vmatpush1.msra.mxu0 0.0
    %1963 = vmatprep.subr.mxu0 0.0
    %1964 = vmatpush1.msra.mxu0 0.0
    %1965 = vmatprep.subr.mxu0 0.0
    %1966 = vmatpush1.msra.mxu0 0.0
    %1967 = vmatprep.subr.mxu0 0.0
    %1968 = vmatpush1.msra.mxu0 0.0
    %1969 = vmatprep.subr.mxu0 0.0
    %1970 = vmatpush1.msra.mxu0 0.0
    %1971 = vmatprep.subr.mxu0 0.0
    %1972 = vmatpush1.msra.mxu0 0.0
    %1973 = vmatprep.subr.mxu0 0.0
    %1974 = vmatpush1.msra.mxu0 0.0
    %1975 = vmatprep.subr.mxu0 0.0
    %1976 = vmatpush1.msra.mxu0 0.0
    %1977 = vmatprep.subr.mxu0 0.0
    %1978 = vmatpush1.msra.mxu0 0.0
    %1979 = vmatprep.subr.mxu0 0.0
    %1980 = vmatpush1.msra.mxu0 0.0
    %1981 = vmatprep.subr.mxu0 0.0
    %1982 = vmatpush1.msra.mxu0 0.0
    %1983 = vmatprep.subr.mxu0 0.0
    %1984 = vmatpush1.msra.mxu0 0.0
    %1985 = vmatprep.mubr.f32.mxu0 0.0
    %1986 = vmatmul.mubr.f32.gmra.mrb[0].mxu0 %v1916
    %v1987 = vpop.f32.mrb[0].mxu0
    %v1988 = vadd.f32 0.0, %v1987
    %v1989 = vpop.f32.mrb[0].mxu0
    %1990 = vmatprep.mubr.f32.mxu0 0.0
    %1991 = vmatmul.mubr.f32.gmra.mrb[0].mxu0 %v1919
    %v1992 = vpop.f32.mrb[0].mxu0
    %v1993 = vadd.f32 0.0, %v1992
    %v1994 = vpop.f32.mrb[0].mxu0
    %1995 = vdwg.mxu0
    %1996 = vrot.lane.b32.xlu0 %v250, 112
    %v1997 = vpop.permute.xlu0 %1996
    %1998 = vrot.lane.b32.xlu0 %v255, 112
    %v1999 = vpop.permute.xlu0 %1998
    %2000 = vrot.lane.b32.xlu0 %v1542, 112
    %v2001 = vpop.permute.xlu0 %2000
    %v2002 = vsel %vm587, %v1997, 0
    %v2004 = vsel %vm587, %v1999, 0
    %v2006 = vsel %vm587, %v2001, 0
    %2008 = vmatprep.subr.mxu0 0.0
    %2009 = vmatpush1.xpose.msra.mxu0 %v2006
    %2010 = vmatprep.subr.mxu0 0.0
    %2011 = vmatpush1.xpose.msra.mxu0 0.0
    %2012 = vmatprep.subr.mxu0 0.0
    %2013 = vmatpush1.xpose.msra.mxu0 0.0
    %2014 = vmatprep.subr.mxu0 0.0
    %2015 = vmatpush1.xpose.msra.mxu0 0.0
    %2016 = vmatprep.subr.mxu0 0.0
    %2017 = vmatpush1.xpose.msra.mxu0 0.0
    %2018 = vmatprep.subr.mxu0 0.0
    %2019 = vmatpush1.xpose.msra.mxu0 0.0
    %2020 = vmatprep.subr.mxu0 0.0
    %2021 = vmatpush1.xpose.msra.mxu0 0.0
    %2022 = vmatprep.subr.mxu0 0.0
    %2023 = vmatpush1.xpose.msra.mxu0 0.0
    %2024 = vmatprep.subr.mxu0 0.0
    %2025 = vmatpush1.xpose.msra.mxu0 0.0
    %2026 = vmatprep.subr.mxu0 0.0
    %2027 = vmatpush1.xpose.msra.mxu0 0.0
    %2028 = vmatprep.subr.mxu0 0.0
    %2029 = vmatpush1.xpose.msra.mxu0 0.0
    %2030 = vmatprep.subr.mxu0 0.0
    %2031 = vmatpush1.xpose.msra.mxu0 0.0
    %2032 = vmatprep.subr.mxu0 0.0
    %2033 = vmatpush1.xpose.msra.mxu0 0.0
    %2034 = vmatprep.subr.mxu0 0.0
    %2035 = vmatpush1.xpose.msra.mxu0 0.0
    %2036 = vmatprep.subr.mxu0 0.0
    %2037 = vmatpush1.xpose.msra.mxu0 0.0
    %2038 = vmatprep.subr.mxu0 0.0
    %2039 = vmatpush1.xpose.msra.mxu0 0.0
    %2040 = vmatprep.subr.mxu0 0.0
    %2041 = vmatpush1.xpose.msra.mxu0 0.0
    %2042 = vmatprep.subr.mxu0 0.0
    %2043 = vmatpush1.xpose.msra.mxu0 0.0
    %2044 = vmatprep.subr.mxu0 0.0
    %2045 = vmatpush1.xpose.msra.mxu0 0.0
    %2046 = vmatprep.subr.mxu0 0.0
    %2047 = vmatpush1.xpose.msra.mxu0 0.0
    %2048 = vmatprep.subr.mxu0 0.0
    %2049 = vmatpush1.xpose.msra.mxu0 0.0
    %2050 = vmatprep.subr.mxu0 0.0
    %2051 = vmatpush1.xpose.msra.mxu0 0.0
    %2052 = vmatprep.subr.mxu0 0.0
    %2053 = vmatpush1.xpose.msra.mxu0 0.0
    %2054 = vmatprep.subr.mxu0 0.0
    %2055 = vmatpush1.xpose.msra.mxu0 0.0
    %2056 = vmatprep.subr.mxu0 0.0
    %2057 = vmatpush1.xpose.msra.mxu0 0.0
    %2058 = vmatprep.subr.mxu0 0.0
    %2059 = vmatpush1.xpose.msra.mxu0 0.0
    %2060 = vmatprep.subr.mxu0 0.0
    %2061 = vmatpush1.xpose.msra.mxu0 0.0
    %2062 = vmatprep.subr.mxu0 0.0
    %2063 = vmatpush1.xpose.msra.mxu0 0.0
    %2064 = vmatprep.subr.mxu0 0.0
    %2065 = vmatpush1.xpose.msra.mxu0 0.0
    %2066 = vmatprep.subr.mxu0 0.0
    %2067 = vmatpush1.xpose.msra.mxu0 0.0
    %2068 = vmatprep.subr.mxu0 0.0
    %2069 = vmatpush1.xpose.msra.mxu0 0.0
    %2070 = vmatprep.subr.mxu0 0.0
    %2071 = vmatpush1.xpose.msra.mxu0 0.0
    %2072 = vmatprep.mubr.f32.mxu0 0.0
    %2073 = vmatmul.mubr.f32.gmra.mrb[0].mxu0 %v2002
    %v2074 = vpop.f32.mrb[0].mxu0
    %v2075 = vadd.f32 0.0, %v2074
    %v2076 = vpop.f32.mrb[0].mxu0
    %2077 = vmatprep.mubr.f32.mxu0 0.0
    %2078 = vmatmul.mubr.f32.gmra.mrb[0].mxu0 %v2004
    %v2079 = vpop.f32.mrb[0].mxu0
    %v2080 = vadd.f32 0.0, %v2079
    %v2081 = vpop.f32.mrb[0].mxu0
    %2082 = vdwg.mxu0
    %v2083 = vsel %vm587, %v2075, -inf
    %2084 = vmax.xlane.f32.xlu0 %v2083
    %v2085 = vpop.xlane.xlu0 %2084
    %v2086 = vsel %vm587, %v2080, -inf
    %2087 = vmax.xlane.f32.xlu0 %v2086
    %v2088 = vpop.xlane.xlu0 %2087
    %v2089 = vsub.f32 %v2075, %v2085
    %v2090 = vsub.f32 %v2080, %v2088
    %v2091 = vmul.f32 %v2089, 1.442695
    %v2092 = vpow.pop %v2091
    %v2093 = vmul.f32 %v2090, 1.442695
    %v2094 = vpow.pop %v2093
    %v2095 = vsel %vm587, %v2092, 0.0
    %2096 = vadd.xlane.f32.xlu0 %v2095
    %v2097 = vpop.xlane.xlu0 %2096
    %v2098 = vsel %vm587, %v2094, 0.0
    %2099 = vadd.xlane.f32.xlu0 %v2098
    %v2100 = vpop.xlane.xlu0 %2099
    %v2101 = vrcp.pop %v2097
    %v2102 = vmul.f32 %v2092, %v2101
    %v2103 = vrcp.pop %v2100
    %v2104 = vmul.f32 %v2094, %v2103
    %2105 = vrot.lane.b32.xlu0 %v1612, 112
    %v2106 = vpop.permute.xlu0 %2105
    %v2109 = vsel %vm587, %v2102, 0
    %v2112 = vsel %vm587, %v2104, 0
    %2114 = vmatprep.subr.mxu0 0.0
    %2115 = vmatpush1.msra.mxu0 %v2106
    %2116 = vmatprep.subr.mxu0 0.0
    %2117 = vmatpush1.msra.mxu0 0.0
    %2118 = vmatprep.subr.mxu0 0.0
    %2119 = vmatpush1.msra.mxu0 0.0
    %2120 = vmatprep.subr.mxu0 0.0
    %2121 = vmatpush1.msra.mxu0 0.0
    %2122 = vmatprep.subr.mxu0 0.0
    %2123 = vmatpush1.msra.mxu0 0.0
    %2124 = vmatprep.subr.mxu0 0.0
    %2125 = vmatpush1.msra.mxu0 0.0
    %2126 = vmatprep.subr.mxu0 0.0
    %2127 = vmatpush1.msra.mxu0 0.0
    %2128 = vmatprep.subr.mxu0 0.0
    %2129 = vmatpush1.msra.mxu0 0.0
    %2130 = vmatprep.subr.mxu0 0.0
    %2131 = vmatpush1.msra.mxu0 0.0
    %2132 = vmatprep.subr.mxu0 0.0
    %2133 = vmatpush1.msra.mxu0 0.0
    %2134 = vmatprep.subr.mxu0 0.0
    %2135 = vmatpush1.msra.mxu0 0.0
    %2136 = vmatprep.subr.mxu0 0.0
    %2137 = vmatpush1.msra.mxu0 0.0
    %2138 = vmatprep.subr.mxu0 0.0
    %2139 = vmatpush1.msra.mxu0 0.0
    %2140 = vmatprep.subr.mxu0 0.0
    %2141 = vmatpush1.msra.mxu0 0.0
    %2142 = vmatprep.subr.mxu0 0.0
    %2143 = vmatpush1.msra.mxu0 0.0
    %2144 = vmatprep.subr.mxu0 0.0
    %2145 = vmatpush1.msra.mxu0 0.0
    %2146 = vmatprep.subr.mxu0 0.0
    %2147 = vmatpush1.msra.mxu0 0.0
    %2148 = vmatprep.subr.mxu0 0.0
    %2149 = vmatpush1.msra.mxu0 0.0
    %2150 = vmatprep.subr.mxu0 0.0
    %2151 = vmatpush1.msra.mxu0 0.0
    %2152 = vmatprep.subr.mxu0 0.0
    %2153 = vmatpush1.msra.mxu0 0.0
    %2154 = vmatprep.subr.mxu0 0.0
    %2155 = vmatpush1.msra.mxu0 0.0
    %2156 = vmatprep.subr.mxu0 0.0
    %2157 = vmatpush1.msra.mxu0 0.0
    %2158 = vmatprep.subr.mxu0 0.0
    %2159 = vmatpush1.msra.mxu0 0.0
    %2160 = vmatprep.subr.mxu0 0.0
    %2161 = vmatpush1.msra.mxu0 0.0
    %2162 = vmatprep.subr.mxu0 0.0
    %2163 = vmatpush1.msra.mxu0 0.0
    %2164 = vmatprep.subr.mxu0 0.0
    %2165 = vmatpush1.msra.mxu0 0.0
    %2166 = vmatprep.subr.mxu0 0.0
    %2167 = vmatpush1.msra.mxu0 0.0
    %2168 = vmatprep.subr.mxu0 0.0
    %2169 = vmatpush1.msra.mxu0 0.0
    %2170 = vmatprep.subr.mxu0 0.0
    %2171 = vmatpush1.msra.mxu0 0.0
    %2172 = vmatprep.subr.mxu0 0.0
    %2173 = vmatpush1.msra.mxu0 0.0
    %2174 = vmatprep.subr.mxu0 0.0
    %2175 = vmatpush1.msra.mxu0 0.0
    %2176 = vmatprep.subr.mxu0 0.0
    %2177 = vmatpush1.msra.mxu0 0.0
    %2178 = vmatprep.mubr.f32.mxu0 0.0
    %2179 = vmatmul.mubr.f32.gmra.mrb[0].mxu0 %v2109
    %v2180 = vpop.f32.mrb[0].mxu0
    %v2181 = vadd.f32 0.0, %v2180
    %v2182 = vpop.f32.mrb[0].mxu0
    %2183 = vmatprep.mubr.f32.mxu0 0.0
    %2184 = vmatmul.mubr.f32.gmra.mrb[0].mxu0 %v2112
    %v2185 = vpop.f32.mrb[0].mxu0
    %v2186 = vadd.f32 0.0, %v2185
    %v2187 = vpop.f32.mrb[0].mxu0
    %2188 = vdwg.mxu0
    %2189 = vrot.lane.b32.xlu0 %v250, 104
    %v2190 = vpop.permute.xlu0 %2189
    %2191 = vrot.lane.b32.xlu0 %v255, 104
    %v2192 = vpop.permute.xlu0 %2191
    %2193 = vrot.lane.b32.xlu0 %v1542, 104
    %v2194 = vpop.permute.xlu0 %2193
    %v2195 = vsel %vm587, %v2190, 0
    %v2197 = vsel %vm587, %v2192, 0
    %v2199 = vsel %vm587, %v2194, 0
    %2201 = vmatprep.subr.mxu0 0.0
    %2202 = vmatpush1.xpose.msra.mxu0 %v2199
    %2203 = vmatprep.subr.mxu0 0.0
    %2204 = vmatpush1.xpose.msra.mxu0 0.0
    %2205 = vmatprep.subr.mxu0 0.0
    %2206 = vmatpush1.xpose.msra.mxu0 0.0
    %2207 = vmatprep.subr.mxu0 0.0
    %2208 = vmatpush1.xpose.msra.mxu0 0.0
    %2209 = vmatprep.subr.mxu0 0.0
    %2210 = vmatpush1.xpose.msra.mxu0 0.0
    %2211 = vmatprep.subr.mxu0 0.0
    %2212 = vmatpush1.xpose.msra.mxu0 0.0
    %2213 = vmatprep.subr.mxu0 0.0
    %2214 = vmatpush1.xpose.msra.mxu0 0.0
    %2215 = vmatprep.subr.mxu0 0.0
    %2216 = vmatpush1.xpose.msra.mxu0 0.0
    %2217 = vmatprep.subr.mxu0 0.0
    %2218 = vmatpush1.xpose.msra.mxu0 0.0
    %2219 = vmatprep.subr.mxu0 0.0
    %2220 = vmatpush1.xpose.msra.mxu0 0.0
    %2221 = vmatprep.subr.mxu0 0.0
    %2222 = vmatpush1.xpose.msra.mxu0 0.0
    %2223 = vmatprep.subr.mxu0 0.0
    %2224 = vmatpush1.xpose.msra.mxu0 0.0
    %2225 = vmatprep.subr.mxu0 0.0
    %2226 = vmatpush1.xpose.msra.mxu0 0.0
    %2227 = vmatprep.subr.mxu0 0.0
    %2228 = vmatpush1.xpose.msra.mxu0 0.0
    %2229 = vmatprep.subr.mxu0 0.0
    %2230 = vmatpush1.xpose.msra.mxu0 0.0
    %2231 = vmatprep.subr.mxu0 0.0
    %2232 = vmatpush1.xpose.msra.mxu0 0.0
    %2233 = vmatprep.subr.mxu0 0.0
    %2234 = vmatpush1.xpose.msra.mxu0 0.0
    %2235 = vmatprep.subr.mxu0 0.0
    %2236 = vmatpush1.xpose.msra.mxu0 0.0
    %2237 = vmatprep.subr.mxu0 0.0
    %2238 = vmatpush1.xpose.msra.mxu0 0.0
    %2239 = vmatprep.subr.mxu0 0.0
    %2240 = vmatpush1.xpose.msra.mxu0 0.0
    %2241 = vmatprep.subr.mxu0 0.0
    %2242 = vmatpush1.xpose.msra.mxu0 0.0
    %2243 = vmatprep.subr.mxu0 0.0
    %2244 = vmatpush1.xpose.msra.mxu0 0.0
    %2245 = vmatprep.subr.mxu0 0.0
    %2246 = vmatpush1.xpose.msra.mxu0 0.0
    %2247 = vmatprep.subr.mxu0 0.0
    %2248 = vmatpush1.xpose.msra.mxu0 0.0
    %2249 = vmatprep.subr.mxu0 0.0
    %2250 = vmatpush1.xpose.msra.mxu0 0.0
    %2251 = vmatprep.subr.mxu0 0.0
    %2252 = vmatpush1.xpose.msra.mxu0 0.0
    %2253 = vmatprep.subr.mxu0 0.0
    %2254 = vmatpush1.xpose.msra.mxu0 0.0
    %2255 = vmatprep.subr.mxu0 0.0
    %2256 = vmatpush1.xpose.msra.mxu0 0.0
    %2257 = vmatprep.subr.mxu0 0.0
    %2258 = vmatpush1.xpose.msra.mxu0 0.0
    %2259 = vmatprep.subr.mxu0 0.0
    %2260 = vmatpush1.xpose.msra.mxu0 0.0
    %2261 = vmatprep.subr.mxu0 0.0
    %2262 = vmatpush1.xpose.msra.mxu0 0.0
    %2263 = vmatprep.subr.mxu0 0.0
    %2264 = vmatpush1.xpose.msra.mxu0 0.0
    %2265 = vmatprep.mubr.f32.mxu0 0.0
    %2266 = vmatmul.mubr.f32.gmra.mrb[0].mxu0 %v2195
    %v2267 = vpop.f32.mrb[0].mxu0
    %v2268 = vadd.f32 0.0, %v2267
    %v2269 = vpop.f32.mrb[0].mxu0
    %2270 = vmatprep.mubr.f32.mxu0 0.0
    %2271 = vmatmul.mubr.f32.gmra.mrb[0].mxu0 %v2197
    %v2272 = vpop.f32.mrb[0].mxu0
    %v2273 = vadd.f32 0.0, %v2272
    %v2274 = vpop.f32.mrb[0].mxu0
    %2275 = vdwg.mxu0
    %v2276 = vsel %vm587, %v2268, -inf
    %2277 = vmax.xlane.f32.xlu0 %v2276
    %v2278 = vpop.xlane.xlu0 %2277
    %v2279 = vsel %vm587, %v2273, -inf
    %2280 = vmax.xlane.f32.xlu0 %v2279
    %v2281 = vpop.xlane.xlu0 %2280
    %v2282 = vsub.f32 %v2268, %v2278
    %v2283 = vsub.f32 %v2273, %v2281
    %v2284 = vmul.f32 %v2282, 1.442695
    %v2285 = vpow.pop %v2284
    %v2286 = vmul.f32 %v2283, 1.442695
    %v2287 = vpow.pop %v2286
    %v2288 = vsel %vm587, %v2285, 0.0
    %2289 = vadd.xlane.f32.xlu0 %v2288
    %v2290 = vpop.xlane.xlu0 %2289
    %v2291 = vsel %vm587, %v2287, 0.0
    %2292 = vadd.xlane.f32.xlu0 %v2291
    %v2293 = vpop.xlane.xlu0 %2292
    %v2294 = vrcp.pop %v2290
    %v2295 = vmul.f32 %v2285, %v2294
    %v2296 = vrcp.pop %v2293
    %v2297 = vmul.f32 %v2287, %v2296
    %2298 = vrot.lane.b32.xlu0 %v1612, 104
    %v2299 = vpop.permute.xlu0 %2298
    %v2302 = vsel %vm587, %v2295, 0
    %v2305 = vsel %vm587, %v2297, 0
    %2307 = vmatprep.subr.mxu0 0.0
    %2308 = vmatpush1.msra.mxu0 %v2299
    %2309 = vmatprep.subr.mxu0 0.0
    %2310 = vmatpush1.msra.mxu0 0.0
    %2311 = vmatprep.subr.mxu0 0.0
    %2312 = vmatpush1.msra.mxu0 0.0
    %2313 = vmatprep.subr.mxu0 0.0
    %2314 = vmatpush1.msra.mxu0 0.0
    %2315 = vmatprep.subr.mxu0 0.0
    %2316 = vmatpush1.msra.mxu0 0.0
    %2317 = vmatprep.subr.mxu0 0.0
    %2318 = vmatpush1.msra.mxu0 0.0
    %2319 = vmatprep.subr.mxu0 0.0
    %2320 = vmatpush1.msra.mxu0 0.0
    %2321 = vmatprep.subr.mxu0 0.0
    %2322 = vmatpush1.msra.mxu0 0.0
    %2323 = vmatprep.subr.mxu0 0.0
    %2324 = vmatpush1.msra.mxu0 0.0
    %2325 = vmatprep.subr.mxu0 0.0
    %2326 = vmatpush1.msra.mxu0 0.0
    %2327 = vmatprep.subr.mxu0 0.0
    %2328 = vmatpush1.msra.mxu0 0.0
    %2329 = vmatprep.subr.mxu0 0.0
    %2330 = vmatpush1.msra.mxu0 0.0
    %2331 = vmatprep.subr.mxu0 0.0
    %2332 = vmatpush1.msra.mxu0 0.0
    %2333 = vmatprep.subr.mxu0 0.0
    %2334 = vmatpush1.msra.mxu0 0.0
    %2335 = vmatprep.subr.mxu0 0.0
    %2336 = vmatpush1.msra.mxu0 0.0
    %2337 = vmatprep.subr.mxu0 0.0
    %2338 = vmatpush1.msra.mxu0 0.0
    %2339 = vmatprep.subr.mxu0 0.0
    %2340 = vmatpush1.msra.mxu0 0.0
    %2341 = vmatprep.subr.mxu0 0.0
    %2342 = vmatpush1.msra.mxu0 0.0
    %2343 = vmatprep.subr.mxu0 0.0
    %2344 = vmatpush1.msra.mxu0 0.0
    %2345 = vmatprep.subr.mxu0 0.0
    %2346 = vmatpush1.msra.mxu0 0.0
    %2347 = vmatprep.subr.mxu0 0.0
    %2348 = vmatpush1.msra.mxu0 0.0
    %2349 = vmatprep.subr.mxu0 0.0
    %2350 = vmatpush1.msra.mxu0 0.0
    %2351 = vmatprep.subr.mxu0 0.0
    %2352 = vmatpush1.msra.mxu0 0.0
    %2353 = vmatprep.subr.mxu0 0.0
    %2354 = vmatpush1.msra.mxu0 0.0
    %2355 = vmatprep.subr.mxu0 0.0
    %2356 = vmatpush1.msra.mxu0 0.0
    %2357 = vmatprep.subr.mxu0 0.0
    %2358 = vmatpush1.msra.mxu0 0.0
    %2359 = vmatprep.subr.mxu0 0.0
    %2360 = vmatpush1.msra.mxu0 0.0
    %2361 = vmatprep.subr.mxu0 0.0
    %2362 = vmatpush1.msra.mxu0 0.0
    %2363 = vmatprep.subr.mxu0 0.0
    %2364 = vmatpush1.msra.mxu0 0.0
    %2365 = vmatprep.subr.mxu0 0.0
    %2366 = vmatpush1.msra.mxu0 0.0
    %2367 = vmatprep.subr.mxu0 0.0
    %2368 = vmatpush1.msra.mxu0 0.0
    %2369 = vmatprep.subr.mxu0 0.0
    %2370 = vmatpush1.msra.mxu0 0.0
    %2371 = vmatprep.mubr.f32.mxu0 0.0
    %2372 = vmatmul.mubr.f32.gmra.mrb[0].mxu0 %v2302
    %v2373 = vpop.f32.mrb[0].mxu0
    %v2374 = vadd.f32 0.0, %v2373
    %v2375 = vpop.f32.mrb[0].mxu0
    %2376 = vmatprep.mubr.f32.mxu0 0.0
    %2377 = vmatmul.mubr.f32.gmra.mrb[0].mxu0 %v2305
    %v2378 = vpop.f32.mrb[0].mxu0
    %v2379 = vadd.f32 0.0, %v2378
    %v2380 = vpop.f32.mrb[0].mxu0
    %2381 = vdwg.mxu0
    %2384 = vrot.lane.b32.xlu0 %v1988, 8
    %v2385 = vpop.permute.xlu0 %2384
    %2386 = vrot.lane.b32.xlu0 %v1993, 8
    %v2387 = vpop.permute.xlu0 %2386
    %2392 = vrot.lane.b32.xlu0 %v2181, 16
    %v2393 = vpop.permute.xlu0 %2392
    %2394 = vrot.lane.b32.xlu0 %v2186, 16
    %v2395 = vpop.permute.xlu0 %2394
    %2400 = vrot.lane.b32.xlu0 %v2374, 24
    %v2401 = vpop.permute.xlu0 %2400
    %2402 = vrot.lane.b32.xlu0 %v2379, 24
    %v2403 = vpop.permute.xlu0 %2402
    %v2406 = vsel %vm587, %v1794, %v2385
    %v2407 = vsel %vm587, %v1799, %v2387
    %v2408 = vsel %vm440, %v2406, %v2393
    %v2409 = vsel %vm440, %v2407, %v2395
    %v2410 = vsel %vm1383, %v2408, %v2401
    %v2411 = vsel %vm1383, %v2409, %v2403
    %v2413 = vsel %vm160, %v2410, 0
    %v2416 = vsel %vm160, %v2411, 0
    %2418 = vmatprep.subr.mxu0 0.0
    %2419 = vmatpush1.msra.mxu0 %v140
    %2420 = vmatprep.subr.mxu0 0.0
    %2421 = vmatpush1.msra.mxu0 %v141
    %2422 = vmatprep.subr.mxu0 0.0
    %2423 = vmatpush1.msra.mxu0 %v142
    %2424 = vmatprep.subr.mxu0 0.0
    %2425 = vmatpush1.msra.mxu0 %v143
    %2426 = vmatprep.subr.mxu0 0.0
    %2427 = vmatpush1.msra.mxu0 0.0
    %2428 = vmatprep.subr.mxu0 0.0
    %2429 = vmatpush1.msra.mxu0 0.0
    %2430 = vmatprep.subr.mxu0 0.0
    %2431 = vmatpush1.msra.mxu0 0.0
    %2432 = vmatprep.subr.mxu0 0.0
    %2433 = vmatpush1.msra.mxu0 0.0
    %2434 = vmatprep.subr.mxu0 0.0
    %2435 = vmatpush1.msra.mxu0 0.0
    %2436 = vmatprep.subr.mxu0 0.0
    %2437 = vmatpush1.msra.mxu0 0.0
    %2438 = vmatprep.subr.mxu0 0.0
    %2439 = vmatpush1.msra.mxu0 0.0
    %2440 = vmatprep.subr.mxu0 0.0
    %2441 = vmatpush1.msra.mxu0 0.0
    %2442 = vmatprep.subr.mxu0 0.0
    %2443 = vmatpush1.msra.mxu0 0.0
    %2444 = vmatprep.subr.mxu0 0.0
    %2445 = vmatpush1.msra.mxu0 0.0
    %2446 = vmatprep.subr.mxu0 0.0
    %2447 = vmatpush1.msra.mxu0 0.0
    %2448 = vmatprep.subr.mxu0 0.0
    %2449 = vmatpush1.msra.mxu0 0.0
    %2450 = vmatprep.subr.mxu0 0.0
    %2451 = vmatpush1.msra.mxu0 0.0
    %2452 = vmatprep.subr.mxu0 0.0
    %2453 = vmatpush1.msra.mxu0 0.0
    %2454 = vmatprep.subr.mxu0 0.0
    %2455 = vmatpush1.msra.mxu0 0.0
    %2456 = vmatprep.subr.mxu0 0.0
    %2457 = vmatpush1.msra.mxu0 0.0
    %2458 = vmatprep.subr.mxu0 0.0
    %2459 = vmatpush1.msra.mxu0 0.0
    %2460 = vmatprep.subr.mxu0 0.0
    %2461 = vmatpush1.msra.mxu0 0.0
    %2462 = vmatprep.subr.mxu0 0.0
    %2463 = vmatpush1.msra.mxu0 0.0
    %2464 = vmatprep.subr.mxu0 0.0
    %2465 = vmatpush1.msra.mxu0 0.0
    %2466 = vmatprep.subr.mxu0 0.0
    %2467 = vmatpush1.msra.mxu0 0.0
    %2468 = vmatprep.subr.mxu0 0.0
    %2469 = vmatpush1.msra.mxu0 0.0
    %2470 = vmatprep.subr.mxu0 0.0
    %2471 = vmatpush1.msra.mxu0 0.0
    %2472 = vmatprep.subr.mxu0 0.0
    %2473 = vmatpush1.msra.mxu0 0.0
    %2474 = vmatprep.subr.mxu0 0.0
    %2475 = vmatpush1.msra.mxu0 0.0
    %2476 = vmatprep.subr.mxu0 0.0
    %2477 = vmatpush1.msra.mxu0 0.0
    %2478 = vmatprep.subr.mxu0 0.0
    %2479 = vmatpush1.msra.mxu0 0.0
    %2480 = vmatprep.subr.mxu0 0.0
    %2481 = vmatpush1.msra.mxu0 0.0
    %2482 = vmatprep.mubr.f32.mxu0 0.0
    %2483 = vmatmul.mubr.f32.gmra.mrb[0].mxu0 %v2413
    %v2484 = vpop.f32.mrb[0].mxu0
    %v2485 = vadd.f32 %v1390, %v2484
    %v2486 = vpop.f32.mrb[0].mxu0
    %2487 = vmatprep.mubr.f32.mxu0 0.0
    %2488 = vmatmul.mubr.f32.gmra.mrb[0].mxu0 %v2416
    %v2489 = vpop.f32.mrb[0].mxu0
    %v2490 = vadd.f32 %v1390, %v2489
    %v2491 = vpop.f32.mrb[0].mxu0
    %2492 = vdwg.mxu0
    %s2493 = scalar_lea.vmem [#allocation14], 16
    %2494 = vst.msk [vmem:[%s2493] sm:$0xff] %vm160, %v2485
    %2495 = vst.msk [vmem:[%s2493 + $0x8] sm:$0xff] %vm160, %v2490
    // Predicated region
    $region74: #{tpu_custom_call.1} parent=1 // pred_check
      _
    $region75: #{tpu_custom_call.1} parent=1 // pred_check_branch
      %2497 = sbr.rel (0) target = $region77
    $region76: #{tpu_custom_call.1} parent=1 // pred_region
      %s2499 = ssub.s32 512, 512
      %2500 = vsyncadd [#allocation4], %s2499
      %s2501 = sshll.u32 [#allocation14], 4
      %s2502 = int_to_ptr.vmem [resolvable:$true] %s2501
      %2507 = dma.vmem_to_hbm [thread:$0]  %s2502, 512, %s11, [#allocation4], 128, 128, 8
    $region77: #{tpu_custom_call.1} parent=1 // pred_fallthru
      _
    // Predicated region
    $region78: #{tpu_custom_call.1} parent=1 // pred_check
      _
    $region79: #{tpu_custom_call.1} parent=1 // pred_check_branch
      %2509 = sbr.rel (0) target = $region81
    $region80: #{tpu_custom_call.1} parent=1 // pred_region
      %2510 = dma.done [#allocation4], 512
    $region81: #{tpu_custom_call.1} parent=1 // pred_fallthru
      _
    %2511 = vsyncpa [#allocation3], 1
    %2512 = vsyncpa [#allocation6], 1
    %2513 = vsyncpa [#allocation9], 1
    %2514 = vsyncpa [#allocation12], 1
    %2515 = vsyncpa [#allocation4], 1

</llo_original>
